<compile_context>
chip_gen: v6e
topology: v6e:2x2x1
jax: 0.10.0
libtpu: 0.0.40
codegen_flags: <defaults>
</compile_context>

<pallas_src>
import functools
import math

import jax
import jax.numpy as jnp
from jax.experimental import pallas as pl
from jax.experimental.pallas import tpu as pltpu


# ----------------------------- in-kernel helpers -----------------------------

def _layernorm_f32(v, w, b, eps=1e-6):
    """LayerNorm in float32 (matches the module's LayerNorm subclass, eps=1e-6)."""
    v32 = v.astype(jnp.float32)
    mu = jnp.mean(v32, axis=-1, keepdims=True)
    var = jnp.mean(jnp.square(v32 - mu), axis=-1, keepdims=True)
    y = (v32 - mu) * jax.lax.rsqrt(var + eps)
    return y * w.astype(jnp.float32) + b.astype(jnp.float32)


def _mm_last(a, b, *, trans_b=False):
    """Contract the last dim of `a` with dim 0 (or 1 if trans_b) of 2-D `b`.

    Works for 2-D or 3-D `a`; f32 MXU accumulation; no materialized transpose.
    """
    dn = (((a.ndim - 1,), (1 if trans_b else 0,)), ((), ()))
    return jax.lax.dot_general(a, b, dn, preferred_element_type=jnp.float32)


def _bmm(a, b, *, trans_b=False):
    """Batched (dim 0) matmul (B,M,K)@(B,K,N) or (B,M,K)@(B,N,K)^T; f32 acc."""
    dn = (((2,), (2 if trans_b else 1,)), ((0,), (0,)))
    return jax.lax.dot_general(a, b, dn, preferred_element_type=jnp.float32)


# --------------------------------- kernel ------------------------------------

def _vtransformer_kernel(
    x_ref,
    ln1_w_ref, ln1_b_ref, wqkv_ref, wo_ref,
    ln2_w_ref, ln2_b_ref, wfc_ref, wprojT_ref,
    o_ref,
    acc_ref,
    *, n_head, eta, lmbda, compute_dtype,
):
    layer = pl.program_id(1)

    # Load the residual stream into the f32 VMEM scratch at the first layer.
    @pl.when(layer == 0)
    def _init():
        acc_ref[...] = x_ref[...].astype(jnp.float32)

    x = acc_ref[...]                                    # (B, L, E) f32 residual stream
    B, L, E = x.shape
    dh = E // n_head
    scale = 1.0 / math.sqrt(dh)
    cd = compute_dtype

    # -------- attention branch: x += softmax(q k^T / sqrt(dh)) v @ Wo ----------
    h = _layernorm_f32(x, ln1_w_ref[0], ln1_b_ref[0])   # (B, L, E) f32
    qkv = _mm_last(h.astype(cd), wqkv_ref[0]).astype(cd)  # (B, L, 3E) bf16 (bias-free MHA)

    # Static loop over heads (batched over B inside each dot_general); head
    # outputs are concatenated so Wo is applied as ONE full-E-contraction matmul.
    # TODO(synk): for very large head counts, stage qkv in a VMEM scratch and
    #             switch to a rolled lax.fori_loop to bound code size.
    head_outs = []
    for hd in range(n_head):
        lo = hd * dh
        qh = qkv[:, :, lo:lo + dh]                      # (B, L, dh)
        kh = qkv[:, :, E + lo:E + lo + dh]
        vh = qkv[:, :, 2 * E + lo:2 * E + lo + dh]

        s = _bmm(qh, kh, trans_b=True) * scale          # (B, L, L) f32
        s = s - jnp.max(s, axis=-1, keepdims=True)
        p = jnp.exp(s)
        inv = pl.reciprocal(jnp.sum(p, axis=-1, keepdims=True), approx=True)
        oh = _bmm(p.astype(cd), vh) * inv               # (B, L, dh) f32
        head_outs.append(oh.astype(cd))

    attn = jnp.concatenate(head_outs, axis=-1)          # (B, L, E) bf16
    x = x + _mm_last(attn, wo_ref[0])                   # single Wo matmul, f32 acc

    # -------- ISTA MLP branch (OvercompleteISTABlock, eta/lmbda) ----------------
    h2 = _layernorm_f32(x, ln2_w_ref[0], ln2_b_ref[0])  # (B, L, E) f32
    wfc = wfc_ref[0]                                    # (E, 4E) bf16
    h2c = h2.astype(cd)

    neg_grad = _mm_last(h2c, wfc)                       # (B, L, 4E)  x @ c_fc
    z1 = jnp.maximum(eta * neg_grad - eta * lmbda, 0.0)
    dz1 = _mm_last(z1.astype(cd), wfc, trans_b=True)    # (B, L, E)   z1 @ c_fc.T
    lasso = _mm_last((dz1 - h2).astype(cd), wfc)        # (B, L, 4E)  (Dz1 - x) @ c_fc
    z2 = jnp.maximum(z1 - eta * lasso - eta * lmbda, 0.0)
    xhat = _mm_last(z2.astype(cd), wprojT_ref[0])       # (B, L, E)   z2 @ c_proj.T
    x = x + xhat

    acc_ref[...] = x                                    # carry residual to next layer

    @pl.when(layer == pl.num_programs(1) - 1)
    def _store():
        o_ref[...] = x.astype(o_ref.dtype)


# --------------------------------- wrapper -----------------------------------

def _pick_batch_block(N, L, E, budget_bytes=6 << 20, max_blk=8):
    """Largest divisor of N (<= max_blk) whose per-step activation VMEM fits."""
    per = L * E * 4 + 2 * L * 4 * E * 4          # residual + (L,4E) f32 temporaries
    best = 1
    for b in range(1, min(N, max_blk) + 1):
        if N % b == 0 and b * per <= budget_bytes:
            best = b
    return best


def vtransformer_forward(x_lne, layer_params, n_head, *, eta=0.1, lmbda=0.1,
                         compute_dtype=jnp.bfloat16):
    """Forward pass of VTransformer.

    x_lne:        (L, N, E)  -- PyTorch nn.MultiheadAttention default layout.
    layer_params: list (one dict per layer) with keys: ln1_w, ln1_b,
                  in_proj_weight (3E,E), out_proj_weight (E,E), ln2_w, ln2_b,
                  c_fc (E,4E), c_proj (E,4E).
    """
    L, N, E = x_lne.shape
    layers = len(layer_params)
    assert E % n_head == 0
    F4 = 4 * E
    cd = compute_dtype

    # Single transpose pair at the stack boundary (amortized over all layers).
    x = jnp.transpose(x_lne, (1, 0, 2))                 # (N, L, E)

    stack = lambda key: jnp.stack([p[key] for p in layer_params])
    ln1_w = stack("ln1_w").reshape(layers, 1, E).astype(jnp.float32)
    ln1_b = stack("ln1_b").reshape(layers, 1, E).astype(jnp.float32)
    ln2_w = stack("ln2_w").reshape(layers, 1, E).astype(jnp.float32)
    ln2_b = stack("ln2_b").reshape(layers, 1, E).astype(jnp.float32)
    # Weights pre-transposed once outside the kernel and cast to bf16 so the
    # MXU sees bf16 operands and the weight VMEM/HBM footprint is halved.
    wqkv = jnp.transpose(stack("in_proj_weight"), (0, 2, 1)).astype(cd)   # (layers, E, 3E)
    wo = jnp.transpose(stack("out_proj_weight"), (0, 2, 1)).astype(cd)    # (layers, E, E)
    wfc = stack("c_fc").astype(cd)                                        # (layers, E, 4E)
    wprojT = jnp.transpose(stack("c_proj"), (0, 2, 1)).astype(cd)         # (layers, 4E, E)

    # Batch blocking: process B_blk batch elements per grid step so per-layer
    # weights are fetched once per block instead of once per batch element.
    B_blk = _pick_batch_block(N, L, E)
    nb = N // B_blk

    def wspec(d1, d2):  # per-layer parameter: select layer `l`, full last two dims
        return pl.BlockSpec((1, d1, d2), lambda b, l: (l, 0, 0))

    in_specs = [
        pl.BlockSpec((B_blk, L, E), lambda b, l: (b, 0, 0)),   # x
        wspec(1, E), wspec(1, E),                              # ln1 w / b
        wspec(E, 3 * E), wspec(E, E),                          # Wqkv, Wo (pre-transposed)
        wspec(1, E), wspec(1, E),                              # ln2 w / b
        wspec(E, F4), wspec(F4, E),                            # c_fc, c_proj^T
    ]
    out_specs = pl.BlockSpec((B_blk, L, E), lambda b, l: (b, 0, 0))

    # VMEM budget: double-buffered per-layer bf16 weights + x/out blocks +
    # f32 residual scratch + headroom for the (B_blk, L, 4E) f32 intermediates.
    w_bytes = 2 * (3 * E * E + E * E + 2 * 4 * E * E) + 4 * 4 * E
    act_bytes = B_blk * L * E * 4
    est = 2 * w_bytes + 5 * act_bytes + 3 * B_blk * L * F4 * 4
    vmem_limit = int(min(max(2 * est, 32 * 1024 * 1024), 64 * 1024 * 1024))

    flops_block = 40 * L * E * E + 4 * L * L * E
    cost = pl.CostEstimate(
        flops=int(layers * N * flops_block),
        transcendentals=int(layers * N * n_head * L * L),
        bytes_accessed=int(layers * nb * w_bytes + 2 * N * L * E * x.dtype.itemsize),
    )

    kernel = functools.partial(
        _vtransformer_kernel, n_head=n_head, eta=eta, lmbda=lmbda, compute_dtype=cd)

    out = pl.pallas_call(
        kernel,
        out_shape=jax.ShapeDtypeStruct((N, L, E), x.dtype),
        grid=(nb, layers),
        in_specs=in_specs,
        out_specs=out_specs,
        scratch_shapes=[pltpu.VMEM((B_blk, L, E), jnp.float32)],
        compiler_params=pltpu.CompilerParams(
            dimension_semantics=("parallel", "arbitrary"),
            vmem_limit_bytes=vmem_limit,
        ),
        cost_estimate=cost,
    )(x, ln1_w, ln1_b, wqkv, wo, ln2_w, ln2_b, wfc, wprojT)

    return jnp.transpose(out, (1, 0, 2))                # back to (L, N, E)


# ----------------------------- pure-JAX reference ----------------------------

def _reference(x_lne, layer_params, n_head, eta=0.1, lmbda=0.1):
    L, N, E = x_lne.shape
    dh = E // n_head

    def ln(v, w, b):
        v32 = v.astype(jnp.float32)
        mu = jnp.mean(v32, -1, keepdims=True)
        var = jnp.mean(jnp.square(v32 - mu), -1, keepdims=True)
        return ((v32 - mu) * jax.lax.rsqrt(var + 1e-6) * w + b).astype(v.dtype)

    x = x_lne                                            # (L, N, E) like the torch module
    for p in layer_params:
        h = ln(x, p["ln1_w"], p["ln1_b"])
        qkv = h @ p["in_proj_weight"].T                  # (L, N, 3E), bias=False
        q, k, v = jnp.split(qkv, 3, axis=-1)
        q = q.reshape(L, N, n_head, dh).transpose(1, 2, 0, 3)
        k = k.reshape(L, N, n_head, dh).transpose(1, 2, 0, 3)
        v = v.reshape(L, N, n_head, dh).transpose(1, 2, 0, 3)
        s = jnp.einsum("bhqd,bhkd->bhqk", q, k) / math.sqrt(dh)
        a = jax.nn.softmax(s, axis=-1)
        o = jnp.einsum("bhqk,bhkd->bhqd", a, v).transpose(2, 0, 1, 3).reshape(L, N, E)
        x = x + o @ p["out_proj_weight"].T

        h2 = ln(x, p["ln2_w"], p["ln2_b"])
        neg = jnp.einsum("pd,nlp->nld", p["c_fc"], h2)
        z1 = jax.nn.relu(eta * neg - eta * lmbda)
        dz1 = jnp.einsum("dp,nlp->nld", p["c_fc"], z1)
        lasso = jnp.einsum("pd,nlp->nld", p["c_fc"], dz1 - h2)
        z2 = jax.nn.relu(z1 - eta * lasso - eta * lmbda)
        xhat = jnp.einsum("dp,nlp->nld", p["c_proj"], z2)
        x = x + xhat
    return x


# ----------------------------------- main ------------------------------------

if __name__ == "__main__":
    L, N, E, H, LAYERS = 16, 2, 128, 4, 2     # seq, batch, width, heads, layers

    key = jax.random.PRNGKey(0)
    kx, key = jax.random.split(key)
    x = jax.random.normal(kx, (L, N, E), dtype=jnp.float32)

    def make_layer(k):
        ks = jax.random.split(k, 8)
        bound = math.sqrt(6.0 / (4 * E))      # kaiming_uniform-style for c_fc / c_proj
        return {
            "ln1_w": 1.0 + 0.1 * jax.random.normal(ks[0], (E,), jnp.float32),
            "ln1_b": 0.1 * jax.random.normal(ks[1], (E,), jnp.float32),
            "in_proj_weight": 0.02 * jax.random.normal(ks[2], (3 * E, E), jnp.float32),
            "out_proj_weight": 0.02 * jax.random.normal(ks[3], (E, E), jnp.float32),
            "ln2_w": 1.0 + 0.1 * jax.random.normal(ks[4], (E,), jnp.float32),
            "ln2_b": 0.1 * jax.random.normal(ks[5], (E,), jnp.float32),
            "c_fc": jax.random.uniform(ks[6], (E, 4 * E), jnp.float32, -bound, bound),
            "c_proj": jax.random.uniform(ks[7], (E, 4 * E), jnp.float32, -bound, bound),
        }

    params = [make_layer(k) for k in jax.random.split(key, LAYERS)]

    out = vtransformer_forward(x, params, H)
    out = jax.block_until_ready(out)

    ref = _reference(x, params, H)
    assert out.shape == (L, N, E)
    # bf16 matmul operands (f32 accumulation) vs. the f32 reference.
    assert jnp.allclose(out, ref, atol=3e-2, rtol=3e-2), float(jnp.max(jnp.abs(out - ref)))

    print("KERNEL_OK")
</pallas_src>

<mosaic_0001>
module attributes {stable_mosaic.version = 11 : i64} {
  func.func @_vtransformer_kernel(%arg0: i32, %arg1: i32, %arg2: memref<2x16x128xf32, #tpu.memory_space<vmem>>, %arg3: memref<1x1x128xf32, #tpu.memory_space<vmem>>, %arg4: memref<1x1x128xf32, #tpu.memory_space<vmem>>, %arg5: memref<1x128x384xbf16, #tpu.memory_space<vmem>>, %arg6: memref<1x128x128xbf16, #tpu.memory_space<vmem>>, %arg7: memref<1x1x128xf32, #tpu.memory_space<vmem>>, %arg8: memref<1x1x128xf32, #tpu.memory_space<vmem>>, %arg9: memref<1x128x512xbf16, #tpu.memory_space<vmem>>, %arg10: memref<1x512x128xbf16, #tpu.memory_space<vmem>>, %arg11: memref<2x16x128xf32, #tpu.memory_space<vmem>>, %arg12: memref<2x16x128xf32, #tpu.memory_space<vmem>>) attributes {dimension_semantics = [#tpu.dimension_semantics<parallel>, #tpu.dimension_semantics<arbitrary>], iteration_bounds = array<i64: 1, 2>, scalar_prefetch = 0 : i64, scratch_operands = 1 : i64, tpu.core_type = #tpu.core_type<tc>, window_params = [{transform_indices = @transform_0, window_bounds = array<i64: 2, 16, 128>}, {transform_indices = @transform_1, window_bounds = array<i64: 1, 1, 128>}, {transform_indices = @transform_2, window_bounds = array<i64: 1, 1, 128>}, {transform_indices = @transform_3, window_bounds = array<i64: 1, 128, 384>}, {transform_indices = @transform_4, window_bounds = array<i64: 1, 128, 128>}, {transform_indices = @transform_5, window_bounds = array<i64: 1, 1, 128>}, {transform_indices = @transform_6, window_bounds = array<i64: 1, 1, 128>}, {transform_indices = @transform_7, window_bounds = array<i64: 1, 128, 512>}, {transform_indices = @transform_8, window_bounds = array<i64: 1, 512, 128>}, {transform_indices = @transform_9, window_bounds = array<i64: 2, 16, 128>}]} {
    %c0_i32 = arith.constant 0 : i32
    %0 = arith.cmpi eq, %arg1, %c0_i32 : i32
    %1 = arith.extui %0 : i1 to i32
    %c0_i32_0 = arith.constant 0 : i32
    %2 = arith.cmpi ne, %1, %c0_i32_0 : i32
    scf.if %2 {
      %c0_72 = arith.constant 0 : index
      %c0_73 = arith.constant 0 : index
      %c0_74 = arith.constant 0 : index
      %177 = vector.load %arg2[%c0_72, %c0_73, %c0_74] : memref<2x16x128xf32, #tpu.memory_space<vmem>>, vector<2x16x128xf32>
      %c0_75 = arith.constant 0 : index
      %c0_76 = arith.constant 0 : index
      %c0_77 = arith.constant 0 : index
      %178 = vector.load %arg12[%c0_75, %c0_76, %c0_77] : memref<2x16x128xf32, #tpu.memory_space<vmem>>, vector<2x16x128xf32>
      tpu.vector_store %arg12[%c0_75, %c0_76, %c0_77], %177 {strides = array<i32>} : memref<2x16x128xf32, #tpu.memory_space<vmem>>, vector<2x16x128xf32>,
    } else {
    }
    %c0 = arith.constant 0 : index
    %c0_1 = arith.constant 0 : index
    %c0_2 = arith.constant 0 : index
    %3 = vector.load %arg12[%c0, %c0_1, %c0_2] : memref<2x16x128xf32, #tpu.memory_space<vmem>>, vector<2x16x128xf32>
    %c0_3 = arith.constant 0 : index
    %c0_4 = arith.constant 0 : index
    %c0_5 = arith.constant 0 : index
    %4 = vector.load %arg3[%c0_3, %c0_4, %c0_5] : memref<1x1x128xf32, #tpu.memory_space<vmem>>, vector<1x1x128xf32>
    %5 = vector.shape_cast %4 : vector<1x1x128xf32> to vector<1x128xf32>
    %c0_6 = arith.constant 0 : index
    %c0_7 = arith.constant 0 : index
    %c0_8 = arith.constant 0 : index
    %6 = vector.load %arg4[%c0_6, %c0_7, %c0_8] : memref<1x1x128xf32, #tpu.memory_space<vmem>>, vector<1x1x128xf32>
    %7 = vector.shape_cast %6 : vector<1x1x128xf32> to vector<1x128xf32>
    %cst = arith.constant dense<0.000000e+00> : vector<2x16xf32>
    %8 = vector.multi_reduction <add>, %3, %cst [2] : vector<2x16x128xf32> to vector<2x16xf32>
    %9 = vector.shape_cast %8 : vector<2x16xf32> to vector<2x16x1xf32>
    %cst_9 = arith.constant 1.280000e+02 : f32
    %10 = vector.broadcast %cst_9 : f32 to vector<2x16x1xf32>
    %11 = arith.divf %9, %10 : vector<2x16x1xf32>
    %12 = vector.broadcast %11 : vector<2x16x1xf32> to vector<2x16x128xf32>
    %13 = arith.subf %3, %12 : vector<2x16x128xf32>
    %14 = arith.mulf %13, %13 : vector<2x16x128xf32>
    %cst_10 = arith.constant dense<0.000000e+00> : vector<2x16xf32>
    %15 = vector.multi_reduction <add>, %14, %cst_10 [2] : vector<2x16x128xf32> to vector<2x16xf32>
    %16 = vector.shape_cast %15 : vector<2x16xf32> to vector<2x16x1xf32>
    %cst_11 = arith.constant 1.280000e+02 : f32
    %17 = vector.broadcast %cst_11 : f32 to vector<2x16x1xf32>
    %18 = arith.divf %16, %17 : vector<2x16x1xf32>
    %19 = vector.broadcast %11 : vector<2x16x1xf32> to vector<2x16x128xf32>
    %20 = arith.subf %3, %19 : vector<2x16x128xf32>
    %cst_12 = arith.constant 9.99999997E-7 : f32
    %21 = vector.broadcast %cst_12 : f32 to vector<2x16x1xf32>
    %22 = arith.addf %18, %21 : vector<2x16x1xf32>
    %23 = math.rsqrt %22 : vector<2x16x1xf32>
    %24 = vector.broadcast %23 : vector<2x16x1xf32> to vector<2x16x128xf32>
    %25 = arith.mulf %20, %24 : vector<2x16x128xf32>
    %26 = vector.shape_cast %5 : vector<1x128xf32> to vector<1x1x128xf32>
    %27 = vector.broadcast %26 : vector<1x1x128xf32> to vector<2x16x128xf32>
    %28 = arith.mulf %25, %27 : vector<2x16x128xf32>
    %29 = vector.shape_cast %7 : vector<1x128xf32> to vector<1x1x128xf32>
    %30 = vector.broadcast %29 : vector<1x1x128xf32> to vector<2x16x128xf32>
    %31 = arith.addf %28, %30 : vector<2x16x128xf32>
    %32 = arith.truncf %31 : vector<2x16x128xf32> to vector<2x16x128xbf16>
    %c0_13 = arith.constant 0 : index
    %c0_14 = arith.constant 0 : index
    %c0_15 = arith.constant 0 : index
    %33 = vector.load %arg5[%c0_13, %c0_14, %c0_15] : memref<1x128x384xbf16, #tpu.memory_space<vmem>>, vector<1x128x384xbf16>
    %34 = vector.shape_cast %33 : vector<1x128x384xbf16> to vector<128x384xbf16>
    %cst_16 = arith.constant dense<0.000000e+00> : vector<2x16x384xf32>
    %35 = tpu.matmul %32, %34, %cst_16 {dimension_numbers = #tpu.dot_dimension_numbers<[2], [0], [0, 1], [1], [0, 0, 0, 1, 1, 1], [], []>} : vector<2x16x128xbf16>, vector<128x384xbf16>, vector<2x16x384xf32> -> vector<2x16x384xf32>
    %36 = arith.truncf %35 : vector<2x16x384xf32> to vector<2x16x384xbf16>
    %37 = vector.extract_strided_slice %36 {offsets = [0, 0, 0], sizes = [2, 16, 32], strides = [1, 1, 1]} : vector<2x16x384xbf16> to vector<2x16x32xbf16>
    %38 = vector.extract_strided_slice %36 {offsets = [0, 0, 128], sizes = [2, 16, 32], strides = [1, 1, 1]} : vector<2x16x384xbf16> to vector<2x16x32xbf16>
    %39 = vector.extract_strided_slice %36 {offsets = [0, 0, 256], sizes = [2, 16, 32], strides = [1, 1, 1]} : vector<2x16x384xbf16> to vector<2x16x32xbf16>
    %cst_17 = arith.constant dense<0.000000e+00> : vector<2x16x16xf32>
    %40 = tpu.matmul %37, %38, %cst_17 {dimension_numbers = #tpu.dot_dimension_numbers<[2], [2], [1], [1], [0, 0, 0, 1, 1, 1], [0], [0]>} : vector<2x16x32xbf16>, vector<2x16x32xbf16>, vector<2x16x16xf32> -> vector<2x16x16xf32>
    %cst_18 = arith.constant 0.176776692 : f32
    %41 = vector.broadcast %cst_18 : f32 to vector<2x16x16xf32>
    %42 = arith.mulf %40, %41 : vector<2x16x16xf32>
    %cst_19 = arith.constant dense<0xFF800000> : vector<2x16xf32>
    %43 = vector.multi_reduction <maximumf>, %42, %cst_19 [2] : vector<2x16x16xf32> to vector<2x16xf32>
    %44 = vector.shape_cast %43 : vector<2x16xf32> to vector<2x16x1xf32>
    %45 = vector.broadcast %44 : vector<2x16x1xf32> to vector<2x16x16xf32>
    %46 = arith.subf %42, %45 : vector<2x16x16xf32>
    %47 = math.exp %46 : vector<2x16x16xf32>
    %cst_20 = arith.constant dense<0.000000e+00> : vector<2x16xf32>
    %48 = vector.multi_reduction <add>, %47, %cst_20 [2] : vector<2x16x16xf32> to vector<2x16xf32>
    %49 = vector.shape_cast %48 : vector<2x16xf32> to vector<2x16x1xf32>
    %50 = tpu.reciprocal %49 {approx = true} : vector<2x16x1xf32> -> vector<2x16x1xf32>
    %51 = arith.truncf %47 : vector<2x16x16xf32> to vector<2x16x16xbf16>
    %cst_21 = arith.constant dense<0.000000e+00> : vector<2x16x32xf32>
    %52 = tpu.matmul %51, %39, %cst_21 {dimension_numbers = #tpu.dot_dimension_numbers<[2], [1], [1], [2], [0, 0, 0, 1, 1, 2], [0], [0]>} : vector<2x16x16xbf16>, vector<2x16x32xbf16>, vector<2x16x32xf32> -> vector<2x16x32xf32>
    %53 = vector.broadcast %50 : vector<2x16x1xf32> to vector<2x16x32xf32>
    %54 = arith.mulf %52, %53 : vector<2x16x32xf32>
    %55 = arith.truncf %54 : vector<2x16x32xf32> to vector<2x16x32xbf16>
    %56 = vector.extract_strided_slice %36 {offsets = [0, 0, 32], sizes = [2, 16, 32], strides = [1, 1, 1]} : vector<2x16x384xbf16> to vector<2x16x32xbf16>
    %57 = vector.extract_strided_slice %36 {offsets = [0, 0, 160], sizes = [2, 16, 32], strides = [1, 1, 1]} : vector<2x16x384xbf16> to vector<2x16x32xbf16>
    %58 = vector.extract_strided_slice %36 {offsets = [0, 0, 288], sizes = [2, 16, 32], strides = [1, 1, 1]} : vector<2x16x384xbf16> to vector<2x16x32xbf16>
    %cst_22 = arith.constant dense<0.000000e+00> : vector<2x16x16xf32>
    %59 = tpu.matmul %56, %57, %cst_22 {dimension_numbers = #tpu.dot_dimension_numbers<[2], [2], [1], [1], [0, 0, 0, 1, 1, 1], [0], [0]>} : vector<2x16x32xbf16>, vector<2x16x32xbf16>, vector<2x16x16xf32> -> vector<2x16x16xf32>
    %cst_23 = arith.constant 0.176776692 : f32
    %60 = vector.broadcast %cst_23 : f32 to vector<2x16x16xf32>
    %61 = arith.mulf %59, %60 : vector<2x16x16xf32>
    %cst_24 = arith.constant dense<0xFF800000> : vector<2x16xf32>
    %62 = vector.multi_reduction <maximumf>, %61, %cst_24 [2] : vector<2x16x16xf32> to vector<2x16xf32>
    %63 = vector.shape_cast %62 : vector<2x16xf32> to vector<2x16x1xf32>
    %64 = vector.broadcast %63 : vector<2x16x1xf32> to vector<2x16x16xf32>
    %65 = arith.subf %61, %64 : vector<2x16x16xf32>
    %66 = math.exp %65 : vector<2x16x16xf32>
    %cst_25 = arith.constant dense<0.000000e+00> : vector<2x16xf32>
    %67 = vector.multi_reduction <add>, %66, %cst_25 [2] : vector<2x16x16xf32> to vector<2x16xf32>
    %68 = vector.shape_cast %67 : vector<2x16xf32> to vector<2x16x1xf32>
    %69 = tpu.reciprocal %68 {approx = true} : vector<2x16x1xf32> -> vector<2x16x1xf32>
    %70 = arith.truncf %66 : vector<2x16x16xf32> to vector<2x16x16xbf16>
    %cst_26 = arith.constant dense<0.000000e+00> : vector<2x16x32xf32>
    %71 = tpu.matmul %70, %58, %cst_26 {dimension_numbers = #tpu.dot_dimension_numbers<[2], [1], [1], [2], [0, 0, 0, 1, 1, 2], [0], [0]>} : vector<2x16x16xbf16>, vector<2x16x32xbf16>, vector<2x16x32xf32> -> vector<2x16x32xf32>
    %72 = vector.broadcast %69 : vector<2x16x1xf32> to vector<2x16x32xf32>
    %73 = arith.mulf %71, %72 : vector<2x16x32xf32>
    %74 = arith.truncf %73 : vector<2x16x32xf32> to vector<2x16x32xbf16>
    %75 = vector.extract_strided_slice %36 {offsets = [0, 0, 64], sizes = [2, 16, 32], strides = [1, 1, 1]} : vector<2x16x384xbf16> to vector<2x16x32xbf16>
    %76 = vector.extract_strided_slice %36 {offsets = [0, 0, 192], sizes = [2, 16, 32], strides = [1, 1, 1]} : vector<2x16x384xbf16> to vector<2x16x32xbf16>
    %77 = vector.extract_strided_slice %36 {offsets = [0, 0, 320], sizes = [2, 16, 32], strides = [1, 1, 1]} : vector<2x16x384xbf16> to vector<2x16x32xbf16>
    %cst_27 = arith.constant dense<0.000000e+00> : vector<2x16x16xf32>
    %78 = tpu.matmul %75, %76, %cst_27 {dimension_numbers = #tpu.dot_dimension_numbers<[2], [2], [1], [1], [0, 0, 0, 1, 1, 1], [0], [0]>} : vector<2x16x32xbf16>, vector<2x16x32xbf16>, vector<2x16x16xf32> -> vector<2x16x16xf32>
    %cst_28 = arith.constant 0.176776692 : f32
    %79 = vector.broadcast %cst_28 : f32 to vector<2x16x16xf32>
    %80 = arith.mulf %78, %79 : vector<2x16x16xf32>
    %cst_29 = arith.constant dense<0xFF800000> : vector<2x16xf32>
    %81 = vector.multi_reduction <maximumf>, %80, %cst_29 [2] : vector<2x16x16xf32> to vector<2x16xf32>
    %82 = vector.shape_cast %81 : vector<2x16xf32> to vector<2x16x1xf32>
    %83 = vector.broadcast %82 : vector<2x16x1xf32> to vector<2x16x16xf32>
    %84 = arith.subf %80, %83 : vector<2x16x16xf32>
    %85 = math.exp %84 : vector<2x16x16xf32>
    %cst_30 = arith.constant dense<0.000000e+00> : vector<2x16xf32>
    %86 = vector.multi_reduction <add>, %85, %cst_30 [2] : vector<2x16x16xf32> to vector<2x16xf32>
    %87 = vector.shape_cast %86 : vector<2x16xf32> to vector<2x16x1xf32>
    %88 = tpu.reciprocal %87 {approx = true} : vector<2x16x1xf32> -> vector<2x16x1xf32>
    %89 = arith.truncf %85 : vector<2x16x16xf32> to vector<2x16x16xbf16>
    %cst_31 = arith.constant dense<0.000000e+00> : vector<2x16x32xf32>
    %90 = tpu.matmul %89, %77, %cst_31 {dimension_numbers = #tpu.dot_dimension_numbers<[2], [1], [1], [2], [0, 0, 0, 1, 1, 2], [0], [0]>} : vector<2x16x16xbf16>, vector<2x16x32xbf16>, vector<2x16x32xf32> -> vector<2x16x32xf32>
    %91 = vector.broadcast %88 : vector<2x16x1xf32> to vector<2x16x32xf32>
    %92 = arith.mulf %90, %91 : vector<2x16x32xf32>
    %93 = arith.truncf %92 : vector<2x16x32xf32> to vector<2x16x32xbf16>
    %94 = vector.extract_strided_slice %36 {offsets = [0, 0, 96], sizes = [2, 16, 32], strides = [1, 1, 1]} : vector<2x16x384xbf16> to vector<2x16x32xbf16>
    %95 = vector.extract_strided_slice %36 {offsets = [0, 0, 224], sizes = [2, 16, 32], strides = [1, 1, 1]} : vector<2x16x384xbf16> to vector<2x16x32xbf16>
    %96 = vector.extract_strided_slice %36 {offsets = [0, 0, 352], sizes = [2, 16, 32], strides = [1, 1, 1]} : vector<2x16x384xbf16> to vector<2x16x32xbf16>
    %cst_32 = arith.constant dense<0.000000e+00> : vector<2x16x16xf32>
    %97 = tpu.matmul %94, %95, %cst_32 {dimension_numbers = #tpu.dot_dimension_numbers<[2], [2], [1], [1], [0, 0, 0, 1, 1, 1], [0], [0]>} : vector<2x16x32xbf16>, vector<2x16x32xbf16>, vector<2x16x16xf32> -> vector<2x16x16xf32>
    %cst_33 = arith.constant 0.176776692 : f32
    %98 = vector.broadcast %cst_33 : f32 to vector<2x16x16xf32>
    %99 = arith.mulf %97, %98 : vector<2x16x16xf32>
    %cst_34 = arith.constant dense<0xFF800000> : vector<2x16xf32>
    %100 = vector.multi_reduction <maximumf>, %99, %cst_34 [2] : vector<2x16x16xf32> to vector<2x16xf32>
    %101 = vector.shape_cast %100 : vector<2x16xf32> to vector<2x16x1xf32>
    %102 = vector.broadcast %101 : vector<2x16x1xf32> to vector<2x16x16xf32>
    %103 = arith.subf %99, %102 : vector<2x16x16xf32>
    %104 = math.exp %103 : vector<2x16x16xf32>
    %cst_35 = arith.constant dense<0.000000e+00> : vector<2x16xf32>
    %105 = vector.multi_reduction <add>, %104, %cst_35 [2] : vector<2x16x16xf32> to vector<2x16xf32>
    %106 = vector.shape_cast %105 : vector<2x16xf32> to vector<2x16x1xf32>
    %107 = tpu.reciprocal %106 {approx = true} : vector<2x16x1xf32> -> vector<2x16x1xf32>
    %108 = arith.truncf %104 : vector<2x16x16xf32> to vector<2x16x16xbf16>
    %cst_36 = arith.constant dense<0.000000e+00> : vector<2x16x32xf32>
    %109 = tpu.matmul %108, %96, %cst_36 {dimension_numbers = #tpu.dot_dimension_numbers<[2], [1], [1], [2], [0, 0, 0, 1, 1, 2], [0], [0]>} : vector<2x16x16xbf16>, vector<2x16x32xbf16>, vector<2x16x32xf32> -> vector<2x16x32xf32>
    %110 = vector.broadcast %107 : vector<2x16x1xf32> to vector<2x16x32xf32>
    %111 = arith.mulf %109, %110 : vector<2x16x32xf32>
    %112 = arith.truncf %111 : vector<2x16x32xf32> to vector<2x16x32xbf16>
    %113 = tpu.concatenate %55, %74, %93, %112 in 2 : vector<2x16x32xbf16>, vector<2x16x32xbf16>, vector<2x16x32xbf16>, vector<2x16x32xbf16> -> vector<2x16x128xbf16>
    %c0_37 = arith.constant 0 : index
    %c0_38 = arith.constant 0 : index
    %c0_39 = arith.constant 0 : index
    %114 = vector.load %arg6[%c0_37, %c0_38, %c0_39] : memref<1x128x128xbf16, #tpu.memory_space<vmem>>, vector<1x128x128xbf16>
    %115 = vector.shape_cast %114 : vector<1x128x128xbf16> to vector<128x128xbf16>
    %cst_40 = arith.constant dense<0.000000e+00> : vector<2x16x128xf32>
    %116 = tpu.matmul %113, %115, %cst_40 {dimension_numbers = #tpu.dot_dimension_numbers<[2], [0], [0, 1], [1], [0, 0, 0, 1, 1, 1], [], []>} : vector<2x16x128xbf16>, vector<128x128xbf16>, vector<2x16x128xf32> -> vector<2x16x128xf32>
    %117 = arith.addf %3, %116 : vector<2x16x128xf32>
    %c0_41 = arith.constant 0 : index
    %c0_42 = arith.constant 0 : index
    %c0_43 = arith.constant 0 : index
    %118 = vector.load %arg7[%c0_41, %c0_42, %c0_43] : memref<1x1x128xf32, #tpu.memory_space<vmem>>, vector<1x1x128xf32>
    %119 = vector.shape_cast %118 : vector<1x1x128xf32> to vector<1x128xf32>
    %c0_44 = arith.constant 0 : index
    %c0_45 = arith.constant 0 : index
    %c0_46 = arith.constant 0 : index
    %120 = vector.load %arg8[%c0_44, %c0_45, %c0_46] : memref<1x1x128xf32, #tpu.memory_space<vmem>>, vector<1x1x128xf32>
    %121 = vector.shape_cast %120 : vector<1x1x128xf32> to vector<1x128xf32>
    %cst_47 = arith.constant dense<0.000000e+00> : vector<2x16xf32>
    %122 = vector.multi_reduction <add>, %117, %cst_47 [2] : vector<2x16x128xf32> to vector<2x16xf32>
    %123 = vector.shape_cast %122 : vector<2x16xf32> to vector<2x16x1xf32>
    %cst_48 = arith.constant 1.280000e+02 : f32
    %124 = vector.broadcast %cst_48 : f32 to vector<2x16x1xf32>
    %125 = arith.divf %123, %124 : vector<2x16x1xf32>
    %126 = vector.broadcast %125 : vector<2x16x1xf32> to vector<2x16x128xf32>
    %127 = arith.subf %117, %126 : vector<2x16x128xf32>
    %128 = arith.mulf %127, %127 : vector<2x16x128xf32>
    %cst_49 = arith.constant dense<0.000000e+00> : vector<2x16xf32>
    %129 = vector.multi_reduction <add>, %128, %cst_49 [2] : vector<2x16x128xf32> to vector<2x16xf32>
    %130 = vector.shape_cast %129 : vector<2x16xf32> to vector<2x16x1xf32>
    %cst_50 = arith.constant 1.280000e+02 : f32
    %131 = vector.broadcast %cst_50 : f32 to vector<2x16x1xf32>
    %132 = arith.divf %130, %131 : vector<2x16x1xf32>
    %133 = vector.broadcast %125 : vector<2x16x1xf32> to vector<2x16x128xf32>
    %134 = arith.subf %117, %133 : vector<2x16x128xf32>
    %cst_51 = arith.constant 9.99999997E-7 : f32
    %135 = vector.broadcast %cst_51 : f32 to vector<2x16x1xf32>
    %136 = arith.addf %132, %135 : vector<2x16x1xf32>
    %137 = math.rsqrt %136 : vector<2x16x1xf32>
    %138 = vector.broadcast %137 : vector<2x16x1xf32> to vector<2x16x128xf32>
    %139 = arith.mulf %134, %138 : vector<2x16x128xf32>
    %140 = vector.shape_cast %119 : vector<1x128xf32> to vector<1x1x128xf32>
    %141 = vector.broadcast %140 : vector<1x1x128xf32> to vector<2x16x128xf32>
    %142 = arith.mulf %139, %141 : vector<2x16x128xf32>
    %143 = vector.shape_cast %121 : vector<1x128xf32> to vector<1x1x128xf32>
    %144 = vector.broadcast %143 : vector<1x1x128xf32> to vector<2x16x128xf32>
    %145 = arith.addf %142, %144 : vector<2x16x128xf32>
    %c0_52 = arith.constant 0 : index
    %c0_53 = arith.constant 0 : index
    %c0_54 = arith.constant 0 : index
    %146 = vector.load %arg9[%c0_52, %c0_53, %c0_54] : memref<1x128x512xbf16, #tpu.memory_space<vmem>>, vector<1x128x512xbf16>
    %147 = vector.shape_cast %146 : vector<1x128x512xbf16> to vector<128x512xbf16>
    %148 = arith.truncf %145 : vector<2x16x128xf32> to vector<2x16x128xbf16>
    %cst_55 = arith.constant dense<0.000000e+00> : vector<2x16x512xf32>
    %149 = tpu.matmul %148, %147, %cst_55 {dimension_numbers = #tpu.dot_dimension_numbers<[2], [0], [0, 1], [1], [0, 0, 0, 1, 1, 1], [], []>} : vector<2x16x128xbf16>, vector<128x512xbf16>, vector<2x16x512xf32> -> vector<2x16x512xf32>
    %cst_56 = arith.constant 1.000000e-01 : f32
    %150 = vector.broadcast %cst_56 : f32 to vector<2x16x512xf32>
    %151 = arith.mulf %150, %149 : vector<2x16x512xf32>
    %cst_57 = arith.constant 0.00999999977 : f32
    %152 = vector.broadcast %cst_57 : f32 to vector<2x16x512xf32>
    %153 = arith.subf %151, %152 : vector<2x16x512xf32>
    %cst_58 = arith.constant 0.000000e+00 : f32
    %154 = vector.broadcast %cst_58 : f32 to vector<2x16x512xf32>
    %155 = arith.maximumf %153, %154 : vector<2x16x512xf32>
    %156 = arith.truncf %155 : vector<2x16x512xf32> to vector<2x16x512xbf16>
    %cst_59 = arith.constant dense<0.000000e+00> : vector<2x16x128xf32>
    %157 = tpu.matmul %156, %147, %cst_59 {dimension_numbers = #tpu.dot_dimension_numbers<[2], [1], [0, 1], [0], [0, 0, 0, 1, 1, 0], [], []>} : vector<2x16x512xbf16>, vector<128x512xbf16>, vector<2x16x128xf32> -> vector<2x16x128xf32>
    %158 = arith.subf %157, %145 : vector<2x16x128xf32>
    %159 = arith.truncf %158 : vector<2x16x128xf32> to vector<2x16x128xbf16>
    %cst_60 = arith.constant dense<0.000000e+00> : vector<2x16x512xf32>
    %160 = tpu.matmul %159, %147, %cst_60 {dimension_numbers = #tpu.dot_dimension_numbers<[2], [0], [0, 1], [1], [0, 0, 0, 1, 1, 1], [], []>} : vector<2x16x128xbf16>, vector<128x512xbf16>, vector<2x16x512xf32> -> vector<2x16x512xf32>
    %cst_61 = arith.constant 1.000000e-01 : f32
    %161 = vector.broadcast %cst_61 : f32 to vector<2x16x512xf32>
    %162 = arith.mulf %161, %160 : vector<2x16x512xf32>
    %163 = arith.subf %155, %162 : vector<2x16x512xf32>
    %cst_62 = arith.constant 0.00999999977 : f32
    %164 = vector.broadcast %cst_62 : f32 to vector<2x16x512xf32>
    %165 = arith.subf %163, %164 : vector<2x16x512xf32>
    %cst_63 = arith.constant 0.000000e+00 : f32
    %166 = vector.broadcast %cst_63 : f32 to vector<2x16x512xf32>
    %167 = arith.maximumf %165, %166 : vector<2x16x512xf32>
    %168 = arith.truncf %167 : vector<2x16x512xf32> to vector<2x16x512xbf16>
    %c0_64 = arith.constant 0 : index
    %c0_65 = arith.constant 0 : index
    %c0_66 = arith.constant 0 : index
    %169 = vector.load %arg10[%c0_64, %c0_65, %c0_66] : memref<1x512x128xbf16, #tpu.memory_space<vmem>>, vector<1x512x128xbf16>
    %170 = vector.shape_cast %169 : vector<1x512x128xbf16> to vector<512x128xbf16>
    %cst_67 = arith.constant dense<0.000000e+00> : vector<2x16x128xf32>
    %171 = tpu.matmul %168, %170, %cst_67 {dimension_numbers = #tpu.dot_dimension_numbers<[2], [0], [0, 1], [1], [0, 0, 0, 1, 1, 1], [], []>} : vector<2x16x512xbf16>, vector<512x128xbf16>, vector<2x16x128xf32> -> vector<2x16x128xf32>
    %172 = arith.addf %117, %171 : vector<2x16x128xf32>
    %c0_68 = arith.constant 0 : index
    %c0_69 = arith.constant 0 : index
    %c0_70 = arith.constant 0 : index
    %173 = vector.load %arg12[%c0_68, %c0_69, %c0_70] : memref<2x16x128xf32, #tpu.memory_space<vmem>>, vector<2x16x128xf32>
    tpu.vector_store %arg12[%c0_68, %c0_69, %c0_70], %172 {strides = array<i32>} : memref<2x16x128xf32, #tpu.memory_space<vmem>>, vector<2x16x128xf32>,
    %c1_i32 = arith.constant 1 : i32
    %174 = arith.cmpi eq, %arg1, %c1_i32 : i32
    %175 = arith.extui %174 : i1 to i32
    %c0_i32_71 = arith.constant 0 : i32
    %176 = arith.cmpi ne, %175, %c0_i32_71 : i32
    scf.if %176 {
      %c0_72 = arith.constant 0 : index
      %c0_73 = arith.constant 0 : index
      %c0_74 = arith.constant 0 : index
      %177 = vector.load %arg11[%c0_72, %c0_73, %c0_74] : memref<2x16x128xf32, #tpu.memory_space<vmem>>, vector<2x16x128xf32>
      tpu.vector_store %arg11[%c0_72, %c0_73, %c0_74], %172 {strides = array<i32>} : memref<2x16x128xf32, #tpu.memory_space<vmem>>, vector<2x16x128xf32>,
    } else {
    }
    return
  }
  func.func @transform_0(%arg0: i32, %arg1: i32) -> (i32, i32, i32) {
    %c0_i32 = arith.constant 0 : i32
    %c0_i32_0 = arith.constant 0 : i32
    %c0_i32_1 = arith.constant 0 : i32
    return %arg0, %c0_i32, %c0_i32_0 : i32, i32, i32
  }
  func.func @transform_1(%arg0: i32, %arg1: i32) -> (i32, i32, i32) {
    %c0_i32 = arith.constant 0 : i32
    %c0_i32_0 = arith.constant 0 : i32
    %c0_i32_1 = arith.constant 0 : i32
    return %arg1, %c0_i32, %c0_i32_0 : i32, i32, i32
  }
  func.func @transform_2(%arg0: i32, %arg1: i32) -> (i32, i32, i32) {
    %c0_i32 = arith.constant 0 : i32
    %c0_i32_0 = arith.constant 0 : i32
    %c0_i32_1 = arith.constant 0 : i32
    return %arg1, %c0_i32, %c0_i32_0 : i32, i32, i32
  }
  func.func @transform_3(%arg0: i32, %arg1: i32) -> (i32, i32, i32) {
    %c0_i32 = arith.constant 0 : i32
    %c0_i32_0 = arith.constant 0 : i32
    %c0_i32_1 = arith.constant 0 : i32
    return %arg1, %c0_i32, %c0_i32_0 : i32, i32, i32
  }
  func.func @transform_4(%arg0: i32, %arg1: i32) -> (i32, i32, i32) {
    %c0_i32 = arith.constant 0 : i32
    %c0_i32_0 = arith.constant 0 : i32
    %c0_i32_1 = arith.constant 0 : i32
    return %arg1, %c0_i32, %c0_i32_0 : i32, i32, i32
  }
  func.func @transform_5(%arg0: i32, %arg1: i32) -> (i32, i32, i32) {
    %c0_i32 = arith.constant 0 : i32
    %c0_i32_0 = arith.constant 0 : i32
    %c0_i32_1 = arith.constant 0 : i32
    return %arg1, %c0_i32, %c0_i32_0 : i32, i32, i32
  }
  func.func @transform_6(%arg0: i32, %arg1: i32) -> (i32, i32, i32) {
    %c0_i32 = arith.constant 0 : i32
    %c0_i32_0 = arith.constant 0 : i32
    %c0_i32_1 = arith.constant 0 : i32
    return %arg1, %c0_i32, %c0_i32_0 : i32, i32, i32
  }
  func.func @transform_7(%arg0: i32, %arg1: i32) -> (i32, i32, i32) {
    %c0_i32 = arith.constant 0 : i32
    %c0_i32_0 = arith.constant 0 : i32
    %c0_i32_1 = arith.constant 0 : i32
    return %arg1, %c0_i32, %c0_i32_0 : i32, i32, i32
  }
  func.func @transform_8(%arg0: i32, %arg1: i32) -> (i32, i32, i32) {
    %c0_i32 = arith.constant 0 : i32
    %c0_i32_0 = arith.constant 0 : i32
    %c0_i32_1 = arith.constant 0 : i32
    return %arg1, %c0_i32, %c0_i32_0 : i32, i32, i32
  }
  func.func @transform_9(%arg0: i32, %arg1: i32) -> (i32, i32, i32) {
    %c0_i32 = arith.constant 0 : i32
    %c0_i32_0 = arith.constant 0 : i32
    %c0_i32_1 = arith.constant 0 : i32
    return %arg0, %c0_i32, %c0_i32_0 : i32, i32, i32
  }
}

</mosaic_0001>

<llo_original>
// kernel: tpu_custom_call.1
$region0: #{tpu_custom_call.1}
  #allocation0 [shape = 'u32[]', space=smem, size = 0x4, offset = 0x4, fixed_abs, tag = 'smem constant byte address 0x4 - core index']
  #allocation1 [shape = 'u32[144,128]{1,0:T(1,128)}', space=vmem, size = 0x12000, scoped, tag = 'internal scratch']
  #allocation2 [shape = 'f32[2,16,128]{2,1,0:T(8,128)}', space=vmem, size = 0x4000, scoped, tag = 'scratch operand']
  %s0 = inlined_call_operand.hbm [shape: f32[2,16,128], index: 0, kind: input, shape index: {}]
  %s1 = inlined_call_operand.hbm [shape: f32[2,1,128], index: 1, kind: input, shape index: {}]
  %s2 = inlined_call_operand.vmem [shape: f32[2,1,128], index: 2, kind: input, shape index: {}]
  %s3 = inlined_call_operand.hbm [shape: bf16[2,128,384], index: 3, kind: input, shape index: {}]
  %s4 = inlined_call_operand.hbm [shape: bf16[2,128,128], index: 4, kind: input, shape index: {}]
  %s5 = inlined_call_operand.vmem [shape: f32[2,1,128], index: 5, kind: input, shape index: {}]
  %s6 = inlined_call_operand.vmem [shape: f32[2,1,128], index: 6, kind: input, shape index: {}]
  %s7 = inlined_call_operand.hbm [shape: bf16[2,128,512], index: 7, kind: input, shape index: {}]
  %s8 = inlined_call_operand.hbm [shape: bf16[2,512,128], index: 8, kind: input, shape index: {}]
  %s9 = inlined_call_operand.hbm [shape: f32[2,16,128], index: 9, kind: output, shape index: {}]
  %s10 = sld [smem:[#allocation0]]
  $region101: #{tpu_custom_call.1} parent=0
    _
  %s12 = ssub.s32 1, %s10
  %s13 = scalar_select 0, %s12, %s10
  $region1: #{tpu_custom_call.1} parent=0
    #allocation3 [shape = 'u8[16384]{0}', space=vmem, size = 0x4000, scoped, tag = 'input window, operand 0, single buffered']
    #allocation4 [shape = 's32[2]{0}', space=sflag, size = 0x8, scoped, tag = 'scoped memory for tpu_custom_call.1']
    #allocation5 [shape = 's32[2]{0}', space=sflag, size = 0x8, scoped, tag = 'scoped memory for tpu_custom_call.1']
    #allocation6 [shape = 'u8[1024]{0}', space=vmem, size = 0x400, scoped, tag = 'input window, operand 1']
    #allocation7 [shape = 's32[2]{0}', space=sflag, size = 0x8, scoped, tag = 'scoped memory for tpu_custom_call.1']
    #allocation8 [shape = 'u8[196608]{0}', space=vmem, size = 0x30000, scoped, tag = 'input window, operand 3']
    #allocation9 [shape = 'u8[65536]{0}', space=vmem, size = 0x10000, scoped, tag = 'input window, operand 4']
    #allocation10 [shape = 's32[2]{0}', space=sflag, size = 0x8, scoped, tag = 'scoped memory for tpu_custom_call.1']
    #allocation11 [shape = 'u8[262144]{0}', space=vmem, size = 0x40000, scoped, tag = 'input window, operand 7']
    #allocation12 [shape = 'u8[262144]{0}', space=vmem, size = 0x40000, scoped, tag = 'input window, operand 8']
    #allocation13 [shape = 's32[2]{0}', space=sflag, size = 0x8, scoped, tag = 'scoped memory for tpu_custom_call.1']
    #allocation14 [shape = 'u8[16384]{0}', space=vmem, size = 0x4000, scoped, tag = 'output window, operand 0, single buffered']
    %14 = vsyncpa [#allocation4], 0
    %15 = vsyncpa [#allocation7], 0
    %s16 = scalar_lea.sflag [#allocation7], 1
    %17 = vsyncpa %s16, 0
    %18 = vsyncpa [#allocation10], 0
    %s19 = scalar_lea.sflag [#allocation10], 1
    %20 = vsyncpa %s19, 0
    %21 = vsyncpa [#allocation13], 0
    %s22 = scalar_lea.sflag [#allocation13], 1
    %23 = vsyncpa %s22, 0
    %24 = vsyncpa [#allocation5], 0
    loop: start=0, step=1, limit=4
    $region2: #{tpu_custom_call.1} parent=1 // loop_pre_header
      _
    $region3: #{tpu_custom_call.1} parent=1 // loop_header
      %s26 = sphi 0, %s30
      %p27 = scmp.ge.s32.totalorder %s26, 4
      %s33 = sphi 0, %s45
      %s34 = sphi 0, %s41
      %s35 = sphi 0, %s33
      %s36 = sphi 0, %s34
      %s37 = sphi 0, %s35
      %s38 = sphi 0, %s36
      %s48 = sphi 0, %s50
      %s51 = sphi 0, %s48
      %s52 = sphi 0, %s51
      %s68 = sphi 0, %s52
      %s74 = sphi 0, %s76
      %s77 = sphi 0, %s74
      %s78 = sphi 0, %s77
      %s94 = sphi 0, %s78
      %s100 = sphi 0, %s102
      %s103 = sphi 0, %s100
      %s104 = sphi 0, %s103
      %s120 = sphi 0, %s104
      %s126 = sphi 0, %s128
      %s129 = sphi 0, %s126
      %s130 = sphi 0, %s129
      %s146 = sphi 0, %s130
      %s152 = sphi 0, %s154
      %s155 = sphi 0, %s152
      %s156 = sphi 0, %s155
      %s172 = sphi 0, %s156
      %s178 = sphi 0, %s180
      %s181 = sphi 0, %s178
      %s182 = sphi 0, %s181
      %s198 = sphi 0, %s182
      %s204 = sphi 0, %s206
      %s207 = sphi 0, %s204
      %s208 = sphi 0, %s207
      %s224 = sphi 0, %s208
      %s230 = sphi 0, %s232
      %s233 = sphi 0, %s230
      %s234 = sphi 0, %s233
      %s250 = sphi 0, %s234
      %s256 = sphi 0, %s258
      %s259 = sphi 0, %s256
      %s260 = sphi 0, %s259
      %s276 = sphi 0, %s260
      %s282 = sphi 0, %s284
      %s285 = sphi 0, %s282
      %s286 = sphi 0, %s285
      %s302 = sphi 0, %s286
    $region4: #{tpu_custom_call.1} parent=1 // loop_header_branch
      %29 = sbr.rel (%p27) target = $region8
    $region5: #{tpu_custom_call.1} parent=1 // loop_body
      %s31 = ssub.s32 %s26, 1
      %s32 = ssub.s32 %s26, 2
      %s39 = sadd.s32 1, %s34
      %p40 = scmp.ge.s32.totalorder %s39, 2
      %s41 = scalar_select %p40, 0, %s39
      %s42 = sadd.s32 1, %s33
      %s43 = scalar_select %p40, %s42, %s33
      %p44 = scmp.ge.s32.totalorder %s43, 1
      %s45 = scalar_select %p44, 0, %s43
      %s46 = ssub.s32 %s33, %s45
      %p47 = scmp.eq.s32.totalorder %s46, 0
      %s49 = sadd.s32 %s48, 1
      %s50 = scalar_select %p47, %s48, %s49
      %p53 = pneg %p47
      %p54 = scmp.eq.s32.totalorder %s26, 1
      %p55 = por %p53, %p54
      %p56 = scmp.ne.s32.totalorder %s48, %s51
      %p57 = scmp.eq.s32.totalorder %s26, 0
      %p58 = por %p56, %p57
      %p59 = scmp.ne.s32.totalorder %s48, %s51
      %p60 = scmp.eq.s32.totalorder %s31, 1
      %p61 = por %p59, %p60
      %p62 = scmp.ne.s32.totalorder %s51, %s52
      %p63 = scmp.eq.s32.totalorder %s31, 0
      %p64 = por %p62, %p63
      %p65 = scmp.ne.s32.totalorder %s51, %s52
      %p66 = scmp.eq.s32.totalorder %s32, 1
      %p67 = por %p65, %p66
      %p69 = scmp.ne.s32.totalorder %s52, %s68
      %p70 = scmp.eq.s32.totalorder %s32, 0
      %p71 = por %p69, %p70
      %s72 = ssub.s32 %s34, %s41
      %p73 = scmp.eq.s32.totalorder %s72, 0
      %s75 = sadd.s32 %s74, 1
      %s76 = scalar_select %p73, %s74, %s75
      %p79 = pneg %p73
      %p80 = scmp.eq.s32.totalorder %s26, 1
      %p81 = por %p79, %p80
      %p82 = scmp.ne.s32.totalorder %s74, %s77
      %p83 = scmp.eq.s32.totalorder %s26, 0
      %p84 = por %p82, %p83
      %p85 = scmp.ne.s32.totalorder %s74, %s77
      %p86 = scmp.eq.s32.totalorder %s31, 1
      %p87 = por %p85, %p86
      %p88 = scmp.ne.s32.totalorder %s77, %s78
      %p89 = scmp.eq.s32.totalorder %s31, 0
      %p90 = por %p88, %p89
      %p91 = scmp.ne.s32.totalorder %s77, %s78
      %p92 = scmp.eq.s32.totalorder %s32, 1
      %p93 = por %p91, %p92
      %p95 = scmp.ne.s32.totalorder %s78, %s94
      %p96 = scmp.eq.s32.totalorder %s32, 0
      %p97 = por %p95, %p96
      %s98 = ssub.s32 %s34, %s41
      %p99 = scmp.eq.s32.totalorder %s98, 0
      %s101 = sadd.s32 %s100, 1
      %s102 = scalar_select %p99, %s100, %s101
      %p105 = pneg %p99
      %p106 = scmp.eq.s32.totalorder %s26, 1
      %p107 = por %p105, %p106
      %p108 = scmp.ne.s32.totalorder %s100, %s103
      %p109 = scmp.eq.s32.totalorder %s26, 0
      %p110 = por %p108, %p109
      %p111 = scmp.ne.s32.totalorder %s100, %s103
      %p112 = scmp.eq.s32.totalorder %s31, 1
      %p113 = por %p111, %p112
      %p114 = scmp.ne.s32.totalorder %s103, %s104
      %p115 = scmp.eq.s32.totalorder %s31, 0
      %p116 = por %p114, %p115
      %p117 = scmp.ne.s32.totalorder %s103, %s104
      %p118 = scmp.eq.s32.totalorder %s32, 1
      %p119 = por %p117, %p118
      %p121 = scmp.ne.s32.totalorder %s104, %s120
      %p122 = scmp.eq.s32.totalorder %s32, 0
      %p123 = por %p121, %p122
      %s124 = ssub.s32 %s34, %s41
      %p125 = scmp.eq.s32.totalorder %s124, 0
      %s127 = sadd.s32 %s126, 1
      %s128 = scalar_select %p125, %s126, %s127
      %p131 = pneg %p125
      %p132 = scmp.eq.s32.totalorder %s26, 1
      %p133 = por %p131, %p132
      %p134 = scmp.ne.s32.totalorder %s126, %s129
      %p135 = scmp.eq.s32.totalorder %s26, 0
      %p136 = por %p134, %p135
      %p137 = scmp.ne.s32.totalorder %s126, %s129
      %p138 = scmp.eq.s32.totalorder %s31, 1
      %p139 = por %p137, %p138
      %p140 = scmp.ne.s32.totalorder %s129, %s130
      %p141 = scmp.eq.s32.totalorder %s31, 0
      %p142 = por %p140, %p141
      %p143 = scmp.ne.s32.totalorder %s129, %s130
      %p144 = scmp.eq.s32.totalorder %s32, 1
      %p145 = por %p143, %p144
      %p147 = scmp.ne.s32.totalorder %s130, %s146
      %p148 = scmp.eq.s32.totalorder %s32, 0
      %p149 = por %p147, %p148
      %s150 = ssub.s32 %s34, %s41
      %p151 = scmp.eq.s32.totalorder %s150, 0
      %s153 = sadd.s32 %s152, 1
      %s154 = scalar_select %p151, %s152, %s153
      %p157 = pneg %p151
      %p158 = scmp.eq.s32.totalorder %s26, 1
      %p159 = por %p157, %p158
      %p160 = scmp.ne.s32.totalorder %s152, %s155
      %p161 = scmp.eq.s32.totalorder %s26, 0
      %p162 = por %p160, %p161
      %p163 = scmp.ne.s32.totalorder %s152, %s155
      %p164 = scmp.eq.s32.totalorder %s31, 1
      %p165 = por %p163, %p164
      %p166 = scmp.ne.s32.totalorder %s155, %s156
      %p167 = scmp.eq.s32.totalorder %s31, 0
      %p168 = por %p166, %p167
      %p169 = scmp.ne.s32.totalorder %s155, %s156
      %p170 = scmp.eq.s32.totalorder %s32, 1
      %p171 = por %p169, %p170
      %p173 = scmp.ne.s32.totalorder %s156, %s172
      %p174 = scmp.eq.s32.totalorder %s32, 0
      %p175 = por %p173, %p174
      %s176 = ssub.s32 %s34, %s41
      %p177 = scmp.eq.s32.totalorder %s176, 0
      %s179 = sadd.s32 %s178, 1
      %s180 = scalar_select %p177, %s178, %s179
      %p183 = pneg %p177
      %p184 = scmp.eq.s32.totalorder %s26, 1
      %p185 = por %p183, %p184
      %p186 = scmp.ne.s32.totalorder %s178, %s181
      %p187 = scmp.eq.s32.totalorder %s26, 0
      %p188 = por %p186, %p187
      %p189 = scmp.ne.s32.totalorder %s178, %s181
      %p190 = scmp.eq.s32.totalorder %s31, 1
      %p191 = por %p189, %p190
      %p192 = scmp.ne.s32.totalorder %s181, %s182
      %p193 = scmp.eq.s32.totalorder %s31, 0
      %p194 = por %p192, %p193
      %p195 = scmp.ne.s32.totalorder %s181, %s182
      %p196 = scmp.eq.s32.totalorder %s32, 1
      %p197 = por %p195, %p196
      %p199 = scmp.ne.s32.totalorder %s182, %s198
      %p200 = scmp.eq.s32.totalorder %s32, 0
      %p201 = por %p199, %p200
      %s202 = ssub.s32 %s34, %s41
      %p203 = scmp.eq.s32.totalorder %s202, 0
      %s205 = sadd.s32 %s204, 1
      %s206 = scalar_select %p203, %s204, %s205
      %p209 = pneg %p203
      %p210 = scmp.eq.s32.totalorder %s26, 1
      %p211 = por %p209, %p210
      %p212 = scmp.ne.s32.totalorder %s204, %s207
      %p213 = scmp.eq.s32.totalorder %s26, 0
      %p214 = por %p212, %p213
      %p215 = scmp.ne.s32.totalorder %s204, %s207
      %p216 = scmp.eq.s32.totalorder %s31, 1
      %p217 = por %p215, %p216
      %p218 = scmp.ne.s32.totalorder %s207, %s208
      %p219 = scmp.eq.s32.totalorder %s31, 0
      %p220 = por %p218, %p219
      %p221 = scmp.ne.s32.totalorder %s207, %s208
      %p222 = scmp.eq.s32.totalorder %s32, 1
      %p223 = por %p221, %p222
      %p225 = scmp.ne.s32.totalorder %s208, %s224
      %p226 = scmp.eq.s32.totalorder %s32, 0
      %p227 = por %p225, %p226
      %s228 = ssub.s32 %s34, %s41
      %p229 = scmp.eq.s32.totalorder %s228, 0
      %s231 = sadd.s32 %s230, 1
      %s232 = scalar_select %p229, %s230, %s231
      %p235 = pneg %p229
      %p236 = scmp.eq.s32.totalorder %s26, 1
      %p237 = por %p235, %p236
      %p238 = scmp.ne.s32.totalorder %s230, %s233
      %p239 = scmp.eq.s32.totalorder %s26, 0
      %p240 = por %p238, %p239
      %p241 = scmp.ne.s32.totalorder %s230, %s233
      %p242 = scmp.eq.s32.totalorder %s31, 1
      %p243 = por %p241, %p242
      %p244 = scmp.ne.s32.totalorder %s233, %s234
      %p245 = scmp.eq.s32.totalorder %s31, 0
      %p246 = por %p244, %p245
      %p247 = scmp.ne.s32.totalorder %s233, %s234
      %p248 = scmp.eq.s32.totalorder %s32, 1
      %p249 = por %p247, %p248
      %p251 = scmp.ne.s32.totalorder %s234, %s250
      %p252 = scmp.eq.s32.totalorder %s32, 0
      %p253 = por %p251, %p252
      %s254 = ssub.s32 %s34, %s41
      %p255 = scmp.eq.s32.totalorder %s254, 0
      %s257 = sadd.s32 %s256, 1
      %s258 = scalar_select %p255, %s256, %s257
      %p261 = pneg %p255
      %p262 = scmp.eq.s32.totalorder %s26, 1
      %p263 = por %p261, %p262
      %p264 = scmp.ne.s32.totalorder %s256, %s259
      %p265 = scmp.eq.s32.totalorder %s26, 0
      %p266 = por %p264, %p265
      %p267 = scmp.ne.s32.totalorder %s256, %s259
      %p268 = scmp.eq.s32.totalorder %s31, 1
      %p269 = por %p267, %p268
      %p270 = scmp.ne.s32.totalorder %s259, %s260
      %p271 = scmp.eq.s32.totalorder %s31, 0
      %p272 = por %p270, %p271
      %p273 = scmp.ne.s32.totalorder %s259, %s260
      %p274 = scmp.eq.s32.totalorder %s32, 1
      %p275 = por %p273, %p274
      %p277 = scmp.ne.s32.totalorder %s260, %s276
      %p278 = scmp.eq.s32.totalorder %s32, 0
      %p279 = por %p277, %p278
      %s280 = ssub.s32 %s33, %s45
      %p281 = scmp.eq.s32.totalorder %s280, 0
      %s283 = sadd.s32 %s282, 1
      %s284 = scalar_select %p281, %s282, %s283
      %p287 = pneg %p281
      %p288 = scmp.eq.s32.totalorder %s26, 1
      %p289 = por %p287, %p288
      %p290 = scmp.ne.s32.totalorder %s282, %s285
      %p291 = scmp.eq.s32.totalorder %s26, 0
      %p292 = por %p290, %p291
      %p293 = scmp.ne.s32.totalorder %s282, %s285
      %p294 = scmp.eq.s32.totalorder %s31, 1
      %p295 = por %p293, %p294
      %p296 = scmp.ne.s32.totalorder %s285, %s286
      %p297 = scmp.eq.s32.totalorder %s31, 0
      %p298 = por %p296, %p297
      %p299 = scmp.ne.s32.totalorder %s285, %s286
      %p300 = scmp.eq.s32.totalorder %s32, 1
      %p301 = por %p299, %p300
      %p303 = scmp.ne.s32.totalorder %s286, %s302
      %p304 = scmp.eq.s32.totalorder %s32, 0
      %p305 = por %p303, %p304
      %p306 = scmp.le.s32.totalorder 1, %s26
      %p307 = scmp.lt.s32.totalorder %s26, 3
      %p308 = pnand %p306, %p307
      %p309 = pneg %p308
      // Predicated region
      $region9: #{tpu_custom_call.1} parent=5 // pred_check
        _
      $region10: #{tpu_custom_call.1} parent=5 // pred_check_branch
        %311 = sbr.rel (%p308) target = $region12
      $region11: #{tpu_custom_call.1} parent=5 // pred_region
        %s312 = ssub.s32 %s26, 1
        // Predicated region
        $region13: #{tpu_custom_call.1} parent=11 // pred_check
          %p313 = pneg %p64
        $region14: #{tpu_custom_call.1} parent=11 // pred_check_branch
          %315 = sbr.rel (%p313) target = $region16
        $region15: #{tpu_custom_call.1} parent=11 // pred_region
          %s316 = smul.u32 2, %s35
          %s318 = ssub.s32 512, 512
          %319 = vsyncadd [#allocation4], %s318
          %s320 = smul.addr %s316, 2
          %s321 = smul.addr %s320, 128
          %s322 = scalar_lea.hbm %s0, %s321
          %s323 = sshll.u32 [#allocation3], 4
          %s324 = int_to_ptr.vmem [resolvable:$true] %s323
          %329 = dma.hbm_to_vmem [thread:$0]  %s322, 512, %s324, [#allocation4], 128, 128, 8
        $region16: #{tpu_custom_call.1} parent=11 // pred_fallthru
          _
      $region12: #{tpu_custom_call.1} parent=5 // pred_fallthru
        _
      %p330 = scmp.lt.s32.totalorder %s26, 2
      // Predicated region
      $region17: #{tpu_custom_call.1} parent=5 // pred_check
        %p331 = pneg %p330
      $region18: #{tpu_custom_call.1} parent=5 // pred_check_branch
        %333 = sbr.rel (%p331) target = $region20
      $region19: #{tpu_custom_call.1} parent=5 // pred_region
        // Predicated region
        $region21: #{tpu_custom_call.1} parent=19 // pred_check
          %p334 = pneg %p84
        $region22: #{tpu_custom_call.1} parent=19 // pred_check_branch
          %336 = sbr.rel (%p334) target = $region24
        $region23: #{tpu_custom_call.1} parent=19 // pred_region
          %s337 = sand.u32 %s26, 1
          %s338 = scalar_lea.sflag [#allocation7], %s337
          %s339 = sand.u32 %s74, 1
          %s340 = scalar_lea.vmem [#allocation6], %s339
          %s342 = ssub.s32 16, 16
          %343 = vsyncadd %s338, %s342
          %s344 = smul.addr %s34, 16
          %s345 = scalar_lea.hbm %s1, %s344
          %s347 = sshll.u32 %s340, 4
          %s348 = int_to_ptr.vmem [resolvable:$true] %s347
          %350 = dma.hbm_to_vmem [thread:$0]  %s345, 16, %s348, %s338
        $region24: #{tpu_custom_call.1} parent=19 // pred_fallthru
          _
        // Predicated region
        $region25: #{tpu_custom_call.1} parent=19 // pred_check
          %p351 = pneg %p110
        $region26: #{tpu_custom_call.1} parent=19 // pred_check_branch
          %353 = sbr.rel (%p351) target = $region28
        $region27: #{tpu_custom_call.1} parent=19 // pred_region
          %p354 = scmp.lt.s32.totalorder %s34, 1
          %s355 = scalar_select %p354, %s34, 1
          %s356 = scalar_lea.vmem %s2, %s355
        $region28: #{tpu_custom_call.1} parent=19 // pred_fallthru
          _
        // Predicated region
        $region29: #{tpu_custom_call.1} parent=19 // pred_check
          %p357 = pneg %p136
        $region30: #{tpu_custom_call.1} parent=19 // pred_check_branch
          %359 = sbr.rel (%p357) target = $region32
        $region31: #{tpu_custom_call.1} parent=19 // pred_region
          %s360 = sand.u32 %s26, 1
          %s361 = scalar_lea.sflag [#allocation7], %s360
          %s362 = sand.u32 %s126, 1
          %s363 = smul.addr %s362, 192
          %s364 = scalar_lea.vmem [#allocation8], %s363
          %s366 = ssub.s32 3072, 3072
          %367 = vsyncadd %s361, %s366
          %s368 = smul.addr %s34, 48
          %s369 = smul.addr %s368, 64
          %s370 = scalar_lea.hbm %s3, %s369
          %s371 = sshll.u32 %s364, 4
          %s372 = int_to_ptr.vmem [resolvable:$true] %s371
          %377 = dma.hbm_to_vmem [thread:$0]  %s370, 3072, %s372, %s361, 192, 192, 12
        $region32: #{tpu_custom_call.1} parent=19 // pred_fallthru
          _
        // Predicated region
        $region33: #{tpu_custom_call.1} parent=19 // pred_check
          %p378 = pneg %p162
        $region34: #{tpu_custom_call.1} parent=19 // pred_check_branch
          %380 = sbr.rel (%p378) target = $region36
        $region35: #{tpu_custom_call.1} parent=19 // pred_region
          %s381 = sand.u32 %s26, 1
          %s382 = scalar_lea.sflag [#allocation10], %s381
          %s383 = sand.u32 %s152, 1
          %s384 = smul.addr %s383, 64
          %s385 = scalar_lea.vmem [#allocation9], %s384
          %s387 = ssub.s32 1024, 1024
          %388 = vsyncadd %s382, %s387
          %s389 = smul.addr %s34, 16
          %s390 = smul.addr %s389, 64
          %s391 = scalar_lea.hbm %s4, %s390
          %s392 = sshll.u32 %s385, 4
          %s393 = int_to_ptr.vmem [resolvable:$true] %s392
          %398 = dma.hbm_to_vmem [thread:$0]  %s391, 1024, %s393, %s382, 64, 64, 4
        $region36: #{tpu_custom_call.1} parent=19 // pred_fallthru
          _
        // Predicated region
        $region37: #{tpu_custom_call.1} parent=19 // pred_check
          %p399 = pneg %p188
        $region38: #{tpu_custom_call.1} parent=19 // pred_check_branch
          %401 = sbr.rel (%p399) target = $region40
        $region39: #{tpu_custom_call.1} parent=19 // pred_region
          %p402 = scmp.lt.s32.totalorder %s34, 1
          %s403 = scalar_select %p402, %s34, 1
          %s404 = scalar_lea.vmem %s5, %s403
        $region40: #{tpu_custom_call.1} parent=19 // pred_fallthru
          _
        // Predicated region
        $region41: #{tpu_custom_call.1} parent=19 // pred_check
          %p405 = pneg %p214
        $region42: #{tpu_custom_call.1} parent=19 // pred_check_branch
          %407 = sbr.rel (%p405) target = $region44
        $region43: #{tpu_custom_call.1} parent=19 // pred_region
          %p408 = scmp.lt.s32.totalorder %s34, 1
          %s409 = scalar_select %p408, %s34, 1
          %s410 = scalar_lea.vmem %s6, %s409
        $region44: #{tpu_custom_call.1} parent=19 // pred_fallthru
          _
        // Predicated region
        $region45: #{tpu_custom_call.1} parent=19 // pred_check
          %p411 = pneg %p240
        $region46: #{tpu_custom_call.1} parent=19 // pred_check_branch
          %413 = sbr.rel (%p411) target = $region48
        $region47: #{tpu_custom_call.1} parent=19 // pred_region
          %s414 = sand.u32 %s26, 1
          %s415 = scalar_lea.sflag [#allocation10], %s414
          %s416 = sand.u32 %s230, 1
          %s417 = smul.addr %s416, 256
          %s418 = scalar_lea.vmem [#allocation11], %s417
          %s420 = ssub.s32 4096, 4096
          %421 = vsyncadd %s415, %s420
          %s422 = smul.addr %s34, 64
          %s423 = smul.addr %s422, 64
          %s424 = scalar_lea.hbm %s7, %s423
          %s425 = sshll.u32 %s418, 4
          %s426 = int_to_ptr.vmem [resolvable:$true] %s425
          %431 = dma.hbm_to_vmem [thread:$0]  %s424, 4096, %s426, %s415, 256, 256, 16
        $region48: #{tpu_custom_call.1} parent=19 // pred_fallthru
          _
        // Predicated region
        $region49: #{tpu_custom_call.1} parent=19 // pred_check
          %p432 = pneg %p266
        $region50: #{tpu_custom_call.1} parent=19 // pred_check_branch
          %434 = sbr.rel (%p432) target = $region52
        $region51: #{tpu_custom_call.1} parent=19 // pred_region
          %s435 = sand.u32 %s256, 1
          %s436 = scalar_lea.sflag [#allocation13], %s435
          %s437 = sand.u32 %s256, 1
          %s438 = smul.addr %s437, 256
          %s439 = scalar_lea.vmem [#allocation12], %s438
          %s441 = ssub.s32 4096, 4096
          %442 = vsyncadd %s436, %s441
          %s443 = smul.addr %s34, 64
          %s444 = smul.addr %s443, 64
          %s445 = scalar_lea.hbm %s8, %s444
          %s446 = sshll.u32 %s439, 4
          %s447 = int_to_ptr.vmem [resolvable:$true] %s446
          %452 = dma.hbm_to_vmem [thread:$0]  %s445, 4096, %s447, %s436, 64, 64, 4
        $region52: #{tpu_custom_call.1} parent=19 // pred_fallthru
          _
      $region20: #{tpu_custom_call.1} parent=5 // pred_fallthru
        _
      %p453 = scmp.le.s32.totalorder 1, %s26
      %p454 = scmp.lt.s32.totalorder %s26, 3
      %p455 = pnand %p453, %p454
      %p456 = pneg %p455
      // Predicated region
      $region53: #{tpu_custom_call.1} parent=5 // pred_check
        _
      $region54: #{tpu_custom_call.1} parent=5 // pred_check_branch
        %458 = sbr.rel (%p455) target = $region56
      $region55: #{tpu_custom_call.1} parent=5 // pred_region
        %s459 = ssub.s32 %s26, 1
        // Predicated region
        $region57: #{tpu_custom_call.1} parent=55 // pred_check
          %p460 = pneg %p64
        $region58: #{tpu_custom_call.1} parent=55 // pred_check_branch
          %462 = sbr.rel (%p460) target = $region60
        $region59: #{tpu_custom_call.1} parent=55 // pred_region
          %463 = dma.done [#allocation4], 512
        $region60: #{tpu_custom_call.1} parent=55 // pred_fallthru
          _
        %s464 = sand.u32 %s31, 1
        %s465 = scalar_lea.sflag [#allocation7], %s464
        %s466 = sand.u32 %s77, 1
        %s467 = scalar_lea.vmem [#allocation6], %s466
        // Predicated region
        $region61: #{tpu_custom_call.1} parent=55 // pred_check
          %p468 = pneg %p90
        $region62: #{tpu_custom_call.1} parent=55 // pred_check_branch
          %470 = sbr.rel (%p468) target = $region64
        $region63: #{tpu_custom_call.1} parent=55 // pred_region
          %471 = dma.done %s465, 16
        $region64: #{tpu_custom_call.1} parent=55 // pred_fallthru
          _
        %s472 = sand.u32 %s31, 1
        %s473 = scalar_lea.sflag [#allocation7], %s472
        %s474 = sand.u32 %s129, 1
        %s475 = smul.addr %s474, 192
        %s476 = scalar_lea.vmem [#allocation8], %s475
        // Predicated region
        $region65: #{tpu_custom_call.1} parent=55 // pred_check
          %p477 = pneg %p142
        $region66: #{tpu_custom_call.1} parent=55 // pred_check_branch
          %479 = sbr.rel (%p477) target = $region68
        $region67: #{tpu_custom_call.1} parent=55 // pred_region
          %480 = dma.done %s473, 3072
        $region68: #{tpu_custom_call.1} parent=55 // pred_fallthru
          _
        %s481 = sand.u32 %s31, 1
        %s482 = scalar_lea.sflag [#allocation10], %s481
        %s483 = sand.u32 %s155, 1
        %s484 = smul.addr %s483, 64
        %s485 = scalar_lea.vmem [#allocation9], %s484
        // Predicated region
        $region69: #{tpu_custom_call.1} parent=55 // pred_check
          %p486 = pneg %p168
        $region70: #{tpu_custom_call.1} parent=55 // pred_check_branch
          %488 = sbr.rel (%p486) target = $region72
        $region71: #{tpu_custom_call.1} parent=55 // pred_region
          %489 = dma.done %s482, 1024
        $region72: #{tpu_custom_call.1} parent=55 // pred_fallthru
          _
        %s490 = sand.u32 %s31, 1
        %s491 = scalar_lea.sflag [#allocation10], %s490
        %s492 = sand.u32 %s233, 1
        %s493 = smul.addr %s492, 256
        %s494 = scalar_lea.vmem [#allocation11], %s493
        // Predicated region
        $region73: #{tpu_custom_call.1} parent=55 // pred_check
          %p495 = pneg %p246
        $region74: #{tpu_custom_call.1} parent=55 // pred_check_branch
          %497 = sbr.rel (%p495) target = $region76
        $region75: #{tpu_custom_call.1} parent=55 // pred_region
          %498 = dma.done %s491, 4096
        $region76: #{tpu_custom_call.1} parent=55 // pred_fallthru
          _
        %s499 = sand.u32 %s259, 1
        %s500 = scalar_lea.sflag [#allocation13], %s499
        %s501 = sand.u32 %s259, 1
        %s502 = smul.addr %s501, 256
        %s503 = scalar_lea.vmem [#allocation12], %s502
        // Predicated region
        $region77: #{tpu_custom_call.1} parent=55 // pred_check
          %p504 = pneg %p272
        $region78: #{tpu_custom_call.1} parent=55 // pred_check_branch
          %506 = sbr.rel (%p504) target = $region80
        $region79: #{tpu_custom_call.1} parent=55 // pred_region
          %507 = dma.done %s500, 4096
        $region80: #{tpu_custom_call.1} parent=55 // pred_fallthru
          _
        %p508 = pneg %p64
        %p509 = pneg %p61
        %s510 = sand.u32 %s31, 1
        %s511 = scalar_lea.sflag [#allocation7], %s510
        %s512 = sand.u32 %s77, 1
        %s513 = scalar_lea.vmem [#allocation6], %s512
        %p514 = pneg %p90
        %p515 = pneg %p87
        %p516 = scmp.lt.s32.totalorder %s36, 1
        %s517 = scalar_select %p516, %s36, 1
        %s518 = scalar_lea.vmem %s2, %s517
        %p519 = pneg %p116
        %p520 = pneg %p113
        %s521 = sand.u32 %s31, 1
        %s522 = scalar_lea.sflag [#allocation7], %s521
        %s523 = sand.u32 %s129, 1
        %s524 = smul.addr %s523, 192
        %s525 = scalar_lea.vmem [#allocation8], %s524
        %p526 = pneg %p142
        %p527 = pneg %p139
        %s528 = sand.u32 %s31, 1
        %s529 = scalar_lea.sflag [#allocation10], %s528
        %s530 = sand.u32 %s155, 1
        %s531 = smul.addr %s530, 64
        %s532 = scalar_lea.vmem [#allocation9], %s531
        %p533 = pneg %p168
        %p534 = pneg %p165
        %p535 = scmp.lt.s32.totalorder %s36, 1
        %s536 = scalar_select %p535, %s36, 1
        %s537 = scalar_lea.vmem %s5, %s536
        %p538 = pneg %p194
        %p539 = pneg %p191
        %p540 = scmp.lt.s32.totalorder %s36, 1
        %s541 = scalar_select %p540, %s36, 1
        %s542 = scalar_lea.vmem %s6, %s541
        %p543 = pneg %p220
        %p544 = pneg %p217
        %s545 = sand.u32 %s31, 1
        %s546 = scalar_lea.sflag [#allocation10], %s545
        %s547 = sand.u32 %s233, 1
        %s548 = smul.addr %s547, 256
        %s549 = scalar_lea.vmem [#allocation11], %s548
        %p550 = pneg %p246
        %p551 = pneg %p243
        %s552 = sand.u32 %s259, 1
        %s553 = scalar_lea.sflag [#allocation13], %s552
        %s554 = sand.u32 %s259, 1
        %s555 = smul.addr %s554, 256
        %s556 = scalar_lea.vmem [#allocation12], %s555
        %p557 = pneg %p272
        %p558 = pneg %p269
        %p559 = pneg %p298
        %p560 = pneg %p295
        %s561 = smul.u32 2, %s35
        %p562 = scmp.lt.s32.totalorder %s36, 1
        %s563 = scalar_select %p562, %s36, 1
        %s564 = scalar_lea.vmem %s2, %s563
        %p565 = scmp.lt.s32.totalorder %s36, 1
        %s566 = scalar_select %p565, %s36, 1
        %s567 = scalar_lea.vmem %s5, %s566
        %p568 = scmp.lt.s32.totalorder %s36, 1
        %s569 = scalar_select %p568, %s36, 1
        %s570 = scalar_lea.vmem %s6, %s569
        %s571 = smul.u32 2, %s35
        %p573 = scmp.eq.s32.totalorder %s36, 0
        // Predicated region
        $region81: #{tpu_custom_call.1} parent=55 // pred_check
          %p574 = pneg %p573
        $region82: #{tpu_custom_call.1} parent=55 // pred_check_branch
          %576 = sbr.rel (%p574) target = $region84
        $region83: #{tpu_custom_call.1} parent=55 // pred_region
          %v577 = vld [vmem:[#allocation3] sm:$0xff]
          %v578 = vld [vmem:[#allocation3 + $0x8] sm:$0xff]
          %v579 = vld [vmem:[#allocation3 + $0x10] sm:$0xff]
          %v580 = vld [vmem:[#allocation3 + $0x18] sm:$0xff]
          %581 = vst [vmem:[#allocation2] sm:$0xff] %v577
          %582 = vst [vmem:[#allocation2 + $0x8] sm:$0xff] %v578
          %583 = vst [vmem:[#allocation2 + $0x10] sm:$0xff] %v579
          %584 = vst [vmem:[#allocation2 + $0x18] sm:$0xff] %v580
        $region84: #{tpu_custom_call.1} parent=55 // pred_fallthru
          _
        %v585 = vld [vmem:[#allocation2] sm:$0xff]
        %v586 = vld [vmem:[#allocation2 + $0x8] sm:$0xff]
        %v587 = vld [vmem:[#allocation2 + $0x10] sm:$0xff]
        %v588 = vld [vmem:[#allocation2 + $0x18] sm:$0xff]
        %v589 = vld [vmem:[%s467] sm:$0x1]
        %v590 = vld [vmem:[%s564] sm:$0x1]
        %591 = vadd.xlane.f32.xlu0 %v585
        %v592 = vpop.xlane.xlu0 %591
        %593 = vadd.xlane.f32.xlu0 %v586
        %v594 = vpop.xlane.xlu0 %593
        %595 = vadd.xlane.f32.xlu0 %v587
        %v596 = vpop.xlane.xlu0 %595
        %597 = vadd.xlane.f32.xlu0 %v588
        %v598 = vpop.xlane.xlu0 %597
        %v599 = vrcp.pop 128.0
        %v600 = vmul.f32 %v592, %v599
        %v601 = vmul.f32 %v594, %v599
        %v602 = vmul.f32 %v596, %v599
        %v603 = vmul.f32 %v598, %v599
        %v604 = vsub.f32 %v585, %v600
        %v605 = vsub.f32 %v586, %v601
        %v606 = vsub.f32 %v587, %v602
        %v607 = vsub.f32 %v588, %v603
        %v608 = vmul.f32 %v604, %v604
        %v609 = vmul.f32 %v605, %v605
        %v610 = vmul.f32 %v606, %v606
        %v611 = vmul.f32 %v607, %v607
        %612 = vadd.xlane.f32.xlu0 %v608
        %v613 = vpop.xlane.xlu0 %612
        %614 = vadd.xlane.f32.xlu0 %v609
        %v615 = vpop.xlane.xlu0 %614
        %616 = vadd.xlane.f32.xlu0 %v610
        %v617 = vpop.xlane.xlu0 %616
        %618 = vadd.xlane.f32.xlu0 %v611
        %v619 = vpop.xlane.xlu0 %618
        %v620 = vmul.f32 %v613, %v599
        %v621 = vmul.f32 %v615, %v599
        %v622 = vmul.f32 %v617, %v599
        %v623 = vmul.f32 %v619, %v599
        %v624 = vadd.f32 %v620, 1e-06
        %v625 = vadd.f32 %v621, 1e-06
        %v626 = vadd.f32 %v622, 1e-06
        %v627 = vadd.f32 %v623, 1e-06
        %v628 = vrsqrt.pop %v624
        %v629 = vrsqrt.pop %v625
        %v630 = vrsqrt.pop %v626
        %v631 = vrsqrt.pop %v627
        %v632 = vmul.f32 %v604, %v628
        %v633 = vmul.f32 %v605, %v629
        %v634 = vmul.f32 %v606, %v630
        %v635 = vmul.f32 %v607, %v631
        %v637 = vlaneseq
        %v638 = vshrl.u32 %v637, 7
        %v639 = vsub.s32 0, %v638
        %v640 = vrot.slane %v589, %v639
        %v642 = vmul.f32 %v632, %v640
        %v643 = vmul.f32 %v633, %v640
        %v644 = vmul.f32 %v634, %v640
        %v645 = vmul.f32 %v635, %v640
        %v647 = vlaneseq
        %v648 = vshrl.u32 %v647, 7
        %v649 = vsub.s32 0, %v648
        %v650 = vrot.slane %v590, %v649
        %v652 = vadd.f32 %v642, %v650
        %v653 = vadd.f32 %v643, %v650
        %v654 = vadd.f32 %v644, %v650
        %v655 = vadd.f32 %v645, %v650
        %v656 = vpack.c.bf16 %v653, %v652
        %v657 = vpack.c.bf16 %v655, %v654
        %v658 = vld [vmem:[%s476] sm:$0xff]
        %v659 = vld [vmem:[%s476 + $0x8] sm:$0xf]
        %v660 = vld [vmem:[%s476 + $0xc] sm:$0xff]
        %v661 = vld [vmem:[%s476 + $0x14] sm:$0xf]
        %v662 = vld [vmem:[%s476 + $0x18] sm:$0xff]
        %v663 = vld [vmem:[%s476 + $0x20] sm:$0xf]
        %v664 = vld [vmem:[%s476 + $0x24] sm:$0xff]
        %v665 = vld [vmem:[%s476 + $0x2c] sm:$0xf]
        %v666 = vld [vmem:[%s476 + $0x30] sm:$0xff]
        %v667 = vld [vmem:[%s476 + $0x38] sm:$0xf]
        %v668 = vld [vmem:[%s476 + $0x3c] sm:$0xff]
        %v669 = vld [vmem:[%s476 + $0x44] sm:$0xf]
        %v670 = vld [vmem:[%s476 + $0x48] sm:$0xff]
        %v671 = vld [vmem:[%s476 + $0x50] sm:$0xf]
        %v672 = vld [vmem:[%s476 + $0x54] sm:$0xff]
        %v673 = vld [vmem:[%s476 + $0x5c] sm:$0xf]
        %v674 = vld [vmem:[%s476 + $0x60] sm:$0xff]
        %v675 = vld [vmem:[%s476 + $0x68] sm:$0xf]
        %v676 = vld [vmem:[%s476 + $0x6c] sm:$0xff]
        %v677 = vld [vmem:[%s476 + $0x74] sm:$0xf]
        %v678 = vld [vmem:[%s476 + $0x78] sm:$0xff]
        %v679 = vld [vmem:[%s476 + $0x80] sm:$0xf]
        %v680 = vld [vmem:[%s476 + $0x84] sm:$0xff]
        %v681 = vld [vmem:[%s476 + $0x8c] sm:$0xf]
        %v682 = vld [vmem:[%s476 + $0x90] sm:$0xff]
        %v683 = vld [vmem:[%s476 + $0x98] sm:$0xf]
        %v684 = vld [vmem:[%s476 + $0x9c] sm:$0xff]
        %v685 = vld [vmem:[%s476 + $0xa4] sm:$0xf]
        %v686 = vld [vmem:[%s476 + $0xa8] sm:$0xff]
        %v687 = vld [vmem:[%s476 + $0xb0] sm:$0xf]
        %v688 = vld [vmem:[%s476 + $0xb4] sm:$0xff]
        %v689 = vld [vmem:[%s476 + $0xbc] sm:$0xf]
        %v722 = vunpack.c.l.b16 %v658
        %v723 = vunpack.c.h.b16 %v658
        %v724 = vunpack.c.l.b16 %v659
        %v725 = vunpack.c.l.b16 %v660
        %v726 = vunpack.c.h.b16 %v660
        %v727 = vunpack.c.l.b16 %v661
        %v728 = vunpack.c.l.b16 %v662
        %v729 = vunpack.c.h.b16 %v662
        %v730 = vunpack.c.l.b16 %v663
        %v731 = vunpack.c.l.b16 %v664
        %v732 = vunpack.c.h.b16 %v664
        %v733 = vunpack.c.l.b16 %v665
        %v734 = vunpack.c.l.b16 %v666
        %v735 = vunpack.c.h.b16 %v666
        %v736 = vunpack.c.l.b16 %v667
        %v737 = vunpack.c.l.b16 %v668
        %v738 = vunpack.c.h.b16 %v668
        %v739 = vunpack.c.l.b16 %v669
        %v740 = vunpack.c.l.b16 %v670
        %v741 = vunpack.c.h.b16 %v670
        %v742 = vunpack.c.l.b16 %v671
        %v743 = vunpack.c.l.b16 %v672
        %v744 = vunpack.c.h.b16 %v672
        %v745 = vunpack.c.l.b16 %v673
        %v746 = vunpack.c.l.b16 %v674
        %v747 = vunpack.c.h.b16 %v674
        %v748 = vunpack.c.l.b16 %v675
        %v749 = vunpack.c.l.b16 %v676
        %v750 = vunpack.c.h.b16 %v676
        %v751 = vunpack.c.l.b16 %v677
        %v752 = vunpack.c.l.b16 %v678
        %v753 = vunpack.c.h.b16 %v678
        %v754 = vunpack.c.l.b16 %v679
        %v755 = vunpack.c.l.b16 %v680
        %v756 = vunpack.c.h.b16 %v680
        %v757 = vunpack.c.l.b16 %v681
        %v758 = vunpack.c.l.b16 %v682
        %v759 = vunpack.c.h.b16 %v682
        %v760 = vunpack.c.l.b16 %v683
        %v761 = vunpack.c.l.b16 %v684
        %v762 = vunpack.c.h.b16 %v684
        %v763 = vunpack.c.l.b16 %v685
        %v764 = vunpack.c.l.b16 %v686
        %v765 = vunpack.c.h.b16 %v686
        %v766 = vunpack.c.l.b16 %v687
        %v767 = vunpack.c.l.b16 %v688
        %v768 = vunpack.c.h.b16 %v688
        %v769 = vunpack.c.l.b16 %v689
        %v770 = vpack.c.b16 %v725, %v722
        %v771 = vpack.c.b16 %v726, %v723
        %v772 = vpack.c.b16 %v727, %v724
        %v773 = vpack.c.b16 %v731, %v728
        %v774 = vpack.c.b16 %v732, %v729
        %v775 = vpack.c.b16 %v733, %v730
        %v776 = vpack.c.b16 %v737, %v734
        %v777 = vpack.c.b16 %v738, %v735
        %v778 = vpack.c.b16 %v739, %v736
        %v779 = vpack.c.b16 %v743, %v740
        %v780 = vpack.c.b16 %v744, %v741
        %v781 = vpack.c.b16 %v745, %v742
        %v782 = vpack.c.b16 %v749, %v746
        %v783 = vpack.c.b16 %v750, %v747
        %v784 = vpack.c.b16 %v751, %v748
        %v785 = vpack.c.b16 %v755, %v752
        %v786 = vpack.c.b16 %v756, %v753
        %v787 = vpack.c.b16 %v757, %v754
        %v788 = vpack.c.b16 %v761, %v758
        %v789 = vpack.c.b16 %v762, %v759
        %v790 = vpack.c.b16 %v763, %v760
        %v791 = vpack.c.b16 %v767, %v764
        %v792 = vpack.c.b16 %v768, %v765
        %v793 = vpack.c.b16 %v769, %v766
        %818 = vmatprep.subr.bf16.mxu0 %v792
        %819 = vmatpush1.bf16.msra.mxu0 %v791
        %820 = vmatprep.subr.bf16.mxu0 %v789
        %821 = vmatpush1.bf16.msra.mxu0 %v788
        %822 = vmatprep.subr.bf16.mxu0 %v786
        %823 = vmatpush1.bf16.msra.mxu0 %v785
        %824 = vmatprep.subr.bf16.mxu0 %v783
        %825 = vmatpush1.bf16.msra.mxu0 %v782
        %826 = vmatprep.subr.bf16.mxu0 %v780
        %827 = vmatpush1.bf16.msra.mxu0 %v779
        %828 = vmatprep.subr.bf16.mxu0 %v777
        %829 = vmatpush1.bf16.msra.mxu0 %v776
        %830 = vmatprep.subr.bf16.mxu0 %v774
        %831 = vmatpush1.bf16.msra.mxu0 %v773
        %832 = vmatprep.subr.bf16.mxu0 %v771
        %833 = vmatpush1.bf16.msra.mxu0 %v770
        %834 = vmatprep.subr.bf16.mxu0 0
        %835 = vmatpush2.bf16.msra.mxu0 0
        %836 = vmatprep.subr.bf16.mxu0 0
        %837 = vmatpush2.bf16.msra.mxu0 0
        %838 = vmatprep.subr.bf16.mxu0 0
        %839 = vmatpush2.bf16.msra.mxu0 0
        %840 = vmatprep.subr.bf16.mxu0 0
        %841 = vmatpush2.bf16.msra.mxu0 0
        %842 = vmatprep.subr.bf16.mxu0 0
        %843 = vmatpush2.bf16.msra.mxu0 0
        %844 = vmatprep.subr.bf16.mxu0 0
        %845 = vmatpush2.bf16.msra.mxu0 0
        %846 = vmatprep.subr.bf16.mxu0 0
        %847 = vmatpush2.bf16.msra.mxu0 0
        %848 = vmatprep.subr.bf16.mxu0 0
        %849 = vmatpush2.bf16.msra.mxu0 0
        %850 = vmatprep.mubr.bf16.mxu0 0
        %851 = vmatmul.mubr.bf16.gmra.mxu0 %v656
        %v852 = vpop.f32.mrf.mxu0
        %v853 = vadd.f32 0.0, %v852
        %v854 = vpop.f32.mrf.mxu0
        %v855 = vadd.f32 0.0, %v854
        %v856 = vpop.f32.mrf.mxu0
        %v857 = vadd.f32 0.0, %v856
        %v858 = vpop.f32.mrf.mxu0
        %v859 = vadd.f32 0.0, %v858
        %860 = vmatprep.mubr.bf16.mxu0 0
        %861 = vmatmul.mubr.bf16.gmra.mxu0 %v657
        %v862 = vpop.f32.mrf.mxu0
        %v863 = vadd.f32 0.0, %v862
        %v864 = vpop.f32.mrf.mxu0
        %v865 = vadd.f32 0.0, %v864
        %v866 = vpop.f32.mrf.mxu0
        %v867 = vadd.f32 0.0, %v866
        %v868 = vpop.f32.mrf.mxu0
        %v869 = vadd.f32 0.0, %v868
        %870 = vdwg.mxu0
        %871 = vmatprep.subr.bf16.mxu0 0
        %872 = vmatpush1.bf16.msra.mxu0 %v793
        %873 = vmatprep.subr.bf16.mxu0 0
        %874 = vmatpush1.bf16.msra.mxu0 %v790
        %875 = vmatprep.subr.bf16.mxu0 0
        %876 = vmatpush1.bf16.msra.mxu0 %v787
        %877 = vmatprep.subr.bf16.mxu0 0
        %878 = vmatpush1.bf16.msra.mxu0 %v784
        %879 = vmatprep.subr.bf16.mxu0 0
        %880 = vmatpush1.bf16.msra.mxu0 %v781
        %881 = vmatprep.subr.bf16.mxu0 0
        %882 = vmatpush1.bf16.msra.mxu0 %v778
        %883 = vmatprep.subr.bf16.mxu0 0
        %884 = vmatpush1.bf16.msra.mxu0 %v775
        %885 = vmatprep.subr.bf16.mxu0 0
        %886 = vmatpush1.bf16.msra.mxu0 %v772
        %887 = vmatprep.subr.bf16.mxu0 0
        %888 = vmatpush2.bf16.msra.mxu0 0
        %889 = vmatprep.subr.bf16.mxu0 0
        %890 = vmatpush2.bf16.msra.mxu0 0
        %891 = vmatprep.subr.bf16.mxu0 0
        %892 = vmatpush2.bf16.msra.mxu0 0
        %893 = vmatprep.subr.bf16.mxu0 0
        %894 = vmatpush2.bf16.msra.mxu0 0
        %895 = vmatprep.subr.bf16.mxu0 0
        %896 = vmatpush2.bf16.msra.mxu0 0
        %897 = vmatprep.subr.bf16.mxu0 0
        %898 = vmatpush2.bf16.msra.mxu0 0
        %899 = vmatprep.subr.bf16.mxu0 0
        %900 = vmatpush2.bf16.msra.mxu0 0
        %901 = vmatprep.subr.bf16.mxu0 0
        %902 = vmatpush2.bf16.msra.mxu0 0
        %903 = vmatprep.mubr.bf16.mxu0 0
        %904 = vmatmul.mubr.bf16.gmra.mxu0 %v656
        %v905 = vpop.f32.mrf.mxu0
        %v906 = vadd.f32 0.0, %v905
        %v907 = vpop.f32.mrf.mxu0
        %v908 = vpop.f32.mrf.mxu0
        %v909 = vadd.f32 0.0, %v908
        %v910 = vpop.f32.mrf.mxu0
        %911 = vmatprep.mubr.bf16.mxu0 0
        %912 = vmatmul.mubr.bf16.gmra.mxu0 %v657
        %v913 = vpop.f32.mrf.mxu0
        %v914 = vadd.f32 0.0, %v913
        %v915 = vpop.f32.mrf.mxu0
        %v916 = vpop.f32.mrf.mxu0
        %v917 = vadd.f32 0.0, %v916
        %v918 = vpop.f32.mrf.mxu0
        %919 = vdwg.mxu0
        %v920 = vpack.c.bf16 %v857, %v853
        %v921 = vpack.c.bf16 %v859, %v855
        %v922 = vpack.c.bf16 %v909, %v906
        %v923 = vpack.c.bf16 %v867, %v863
        %v924 = vpack.c.bf16 %v869, %v865
        %v925 = vpack.c.bf16 %v917, %v914
        %vm926 = vcmask 261120
        %v928 = vsel %vm926, %v920, 0
        %v931 = vsel %vm926, %v921, 0
        %933 = vmatprep.subr.bf16.mxu0 0
        %934 = vmatpush1.bf16.xpose.msra.mxu0 0
        %935 = vmatprep.subr.bf16.mxu0 0
        %936 = vmatpush1.bf16.xpose.msra.mxu0 0
        %937 = vmatprep.subr.bf16.mxu0 0
        %938 = vmatpush1.bf16.xpose.msra.mxu0 0
        %939 = vmatprep.subr.bf16.mxu0 0
        %940 = vmatpush1.bf16.xpose.msra.mxu0 0
        %941 = vmatprep.subr.bf16.mxu0 0
        %942 = vmatpush1.bf16.xpose.msra.mxu0 0
        %943 = vmatprep.subr.bf16.mxu0 0
        %944 = vmatpush1.bf16.xpose.msra.mxu0 0
        %945 = vmatprep.subr.bf16.mxu0 0
        %946 = vmatpush1.bf16.xpose.msra.mxu0 0
        %947 = vmatprep.subr.bf16.mxu0 0
        %948 = vmatpush1.bf16.xpose.msra.mxu0 %v931
        %949 = vmatprep.subr.bf16.mxu0 0
        %950 = vmatpush2.bf16.xpose.msra.mxu0 0
        %951 = vmatprep.subr.bf16.mxu0 0
        %952 = vmatpush2.bf16.xpose.msra.mxu0 0
        %953 = vmatprep.subr.bf16.mxu0 0
        %954 = vmatpush2.bf16.xpose.msra.mxu0 0
        %955 = vmatprep.subr.bf16.mxu0 0
        %956 = vmatpush2.bf16.xpose.msra.mxu0 0
        %957 = vmatprep.subr.bf16.mxu0 0
        %958 = vmatpush2.bf16.xpose.msra.mxu0 0
        %959 = vmatprep.subr.bf16.mxu0 0
        %960 = vmatpush2.bf16.xpose.msra.mxu0 0
        %961 = vmatprep.subr.bf16.mxu0 0
        %962 = vmatpush2.bf16.xpose.msra.mxu0 0
        %963 = vmatprep.subr.bf16.mxu0 0
        %964 = vmatpush2.bf16.xpose.msra.mxu0 0
        %965 = vmatprep.mubr.bf16.mxu0 0
        %966 = vmatmul.mubr.bf16.gmra.mxu0 %v928
        %v967 = vpop.f32.mrf.mxu0
        %v968 = vadd.f32 0.0, %v967
        %v969 = vpop.f32.mrf.mxu0
        %v970 = vpop.f32.mrf.mxu0
        %v971 = vadd.f32 0.0, %v970
        %v972 = vpop.f32.mrf.mxu0
        %973 = vdwg.mxu0
        %v975 = vsel %vm926, %v923, 0
        %v978 = vsel %vm926, %v924, 0
        %980 = vmatprep.subr.bf16.mxu0 0
        %981 = vmatpush1.bf16.xpose.msra.mxu0 0
        %982 = vmatprep.subr.bf16.mxu0 0
        %983 = vmatpush1.bf16.xpose.msra.mxu0 0
        %984 = vmatprep.subr.bf16.mxu0 0
        %985 = vmatpush1.bf16.xpose.msra.mxu0 0
        %986 = vmatprep.subr.bf16.mxu0 0
        %987 = vmatpush1.bf16.xpose.msra.mxu0 0
        %988 = vmatprep.subr.bf16.mxu0 0
        %989 = vmatpush1.bf16.xpose.msra.mxu0 0
        %990 = vmatprep.subr.bf16.mxu0 0
        %991 = vmatpush1.bf16.xpose.msra.mxu0 0
        %992 = vmatprep.subr.bf16.mxu0 0
        %993 = vmatpush1.bf16.xpose.msra.mxu0 0
        %994 = vmatprep.subr.bf16.mxu0 0
        %995 = vmatpush1.bf16.xpose.msra.mxu0 %v978
        %996 = vmatprep.subr.bf16.mxu0 0
        %997 = vmatpush2.bf16.xpose.msra.mxu0 0
        %998 = vmatprep.subr.bf16.mxu0 0
        %999 = vmatpush2.bf16.xpose.msra.mxu0 0
        %1000 = vmatprep.subr.bf16.mxu0 0
        %1001 = vmatpush2.bf16.xpose.msra.mxu0 0
        %1002 = vmatprep.subr.bf16.mxu0 0
        %1003 = vmatpush2.bf16.xpose.msra.mxu0 0
        %1004 = vmatprep.subr.bf16.mxu0 0
        %1005 = vmatpush2.bf16.xpose.msra.mxu0 0
        %1006 = vmatprep.subr.bf16.mxu0 0
        %1007 = vmatpush2.bf16.xpose.msra.mxu0 0
        %1008 = vmatprep.subr.bf16.mxu0 0
        %1009 = vmatpush2.bf16.xpose.msra.mxu0 0
        %1010 = vmatprep.subr.bf16.mxu0 0
        %1011 = vmatpush2.bf16.xpose.msra.mxu0 0
        %1012 = vmatprep.mubr.bf16.mxu0 0
        %1013 = vmatmul.mubr.bf16.gmra.mxu0 %v975
        %v1014 = vpop.f32.mrf.mxu0
        %v1015 = vadd.f32 0.0, %v1014
        %v1016 = vpop.f32.mrf.mxu0
        %v1017 = vpop.f32.mrf.mxu0
        %v1018 = vadd.f32 0.0, %v1017
        %v1019 = vpop.f32.mrf.mxu0
        %1020 = vdwg.mxu0
        %v1021 = vmul.f32 %v968, 0.17677669
        %v1022 = vmul.f32 %v971, 0.17677669
        %v1023 = vmul.f32 %v1015, 0.17677669
        %v1024 = vmul.f32 %v1018, 0.17677669
        %vm1025 = vcmask 130048
        %v1026 = vsel %vm1025, %v1021, -inf
        %1027 = vmax.xlane.f32.xlu0 %v1026
        %v1028 = vpop.xlane.xlu0 %1027
        %v1029 = vsel %vm1025, %v1022, -inf
        %1030 = vmax.xlane.f32.xlu0 %v1029
        %v1031 = vpop.xlane.xlu0 %1030
        %v1032 = vsel %vm1025, %v1023, -inf
        %1033 = vmax.xlane.f32.xlu0 %v1032
        %v1034 = vpop.xlane.xlu0 %1033
        %v1035 = vsel %vm1025, %v1024, -inf
        %1036 = vmax.xlane.f32.xlu0 %v1035
        %v1037 = vpop.xlane.xlu0 %1036
        %v1038 = vsub.f32 %v1021, %v1028
        %v1039 = vsub.f32 %v1022, %v1031
        %v1040 = vsub.f32 %v1023, %v1034
        %v1041 = vsub.f32 %v1024, %v1037
        %v1042 = vmul.f32 %v1038, 1.442695
        %v1043 = vpow.pop %v1042
        %v1044 = vmul.f32 %v1039, 1.442695
        %v1045 = vpow.pop %v1044
        %v1046 = vmul.f32 %v1040, 1.442695
        %v1047 = vpow.pop %v1046
        %v1048 = vmul.f32 %v1041, 1.442695
        %v1049 = vpow.pop %v1048
        %v1050 = vsel %vm1025, %v1043, 0.0
        %1051 = vadd.xlane.f32.xlu0 %v1050
        %v1052 = vpop.xlane.xlu0 %1051
        %v1053 = vsel %vm1025, %v1045, 0.0
        %1054 = vadd.xlane.f32.xlu0 %v1053
        %v1055 = vpop.xlane.xlu0 %1054
        %v1056 = vsel %vm1025, %v1047, 0.0
        %1057 = vadd.xlane.f32.xlu0 %v1056
        %v1058 = vpop.xlane.xlu0 %1057
        %v1059 = vsel %vm1025, %v1049, 0.0
        %1060 = vadd.xlane.f32.xlu0 %v1059
        %v1061 = vpop.xlane.xlu0 %1060
        %v1062 = vrcp.pop %v1052
        %v1063 = vrcp.pop %v1055
        %v1064 = vrcp.pop %v1058
        %v1065 = vrcp.pop %v1061
        %v1066 = vpack.c.bf16 %v1045, %v1043
        %v1067 = vpack.c.bf16 %v1049, %v1047
        %v1069 = vsel %vm1025, %v1066, 0
        %1071 = vmatprep.subr.bf16.mxu0 0
        %1072 = vmatpush1.bf16.msra.mxu0 0
        %1073 = vmatprep.subr.bf16.mxu0 0
        %1074 = vmatpush1.bf16.msra.mxu0 0
        %1075 = vmatprep.subr.bf16.mxu0 0
        %1076 = vmatpush1.bf16.msra.mxu0 0
        %1077 = vmatprep.subr.bf16.mxu0 0
        %1078 = vmatpush1.bf16.msra.mxu0 0
        %1079 = vmatprep.subr.bf16.mxu0 0
        %1080 = vmatpush1.bf16.msra.mxu0 0
        %1081 = vmatprep.subr.bf16.mxu0 0
        %1082 = vmatpush1.bf16.msra.mxu0 0
        %1083 = vmatprep.subr.bf16.mxu0 0
        %1084 = vmatpush1.bf16.msra.mxu0 0
        %1085 = vmatprep.subr.bf16.mxu0 0
        %1086 = vmatpush1.bf16.msra.mxu0 %v922
        %1087 = vmatprep.subr.bf16.mxu0 0
        %1088 = vmatpush2.bf16.msra.mxu0 0
        %1089 = vmatprep.subr.bf16.mxu0 0
        %1090 = vmatpush2.bf16.msra.mxu0 0
        %1091 = vmatprep.subr.bf16.mxu0 0
        %1092 = vmatpush2.bf16.msra.mxu0 0
        %1093 = vmatprep.subr.bf16.mxu0 0
        %1094 = vmatpush2.bf16.msra.mxu0 0
        %1095 = vmatprep.subr.bf16.mxu0 0
        %1096 = vmatpush2.bf16.msra.mxu0 0
        %1097 = vmatprep.subr.bf16.mxu0 0
        %1098 = vmatpush2.bf16.msra.mxu0 0
        %1099 = vmatprep.subr.bf16.mxu0 0
        %1100 = vmatpush2.bf16.msra.mxu0 0
        %1101 = vmatprep.subr.bf16.mxu0 0
        %1102 = vmatpush2.bf16.msra.mxu0 0
        %1103 = vmatprep.mubr.bf16.mxu0 0
        %1104 = vmatmul.mubr.bf16.gmra.mxu0 %v1069
        %v1105 = vpop.f32.mrf.mxu0
        %v1106 = vadd.f32 0.0, %v1105
        %v1107 = vpop.f32.mrf.mxu0
        %v1108 = vpop.f32.mrf.mxu0
        %v1109 = vadd.f32 0.0, %v1108
        %v1110 = vpop.f32.mrf.mxu0
        %1111 = vdwg.mxu0
        %v1113 = vsel %vm1025, %v1067, 0
        %1115 = vmatprep.subr.bf16.mxu0 0
        %1116 = vmatpush1.bf16.msra.mxu0 0
        %1117 = vmatprep.subr.bf16.mxu0 0
        %1118 = vmatpush1.bf16.msra.mxu0 0
        %1119 = vmatprep.subr.bf16.mxu0 0
        %1120 = vmatpush1.bf16.msra.mxu0 0
        %1121 = vmatprep.subr.bf16.mxu0 0
        %1122 = vmatpush1.bf16.msra.mxu0 0
        %1123 = vmatprep.subr.bf16.mxu0 0
        %1124 = vmatpush1.bf16.msra.mxu0 0
        %1125 = vmatprep.subr.bf16.mxu0 0
        %1126 = vmatpush1.bf16.msra.mxu0 0
        %1127 = vmatprep.subr.bf16.mxu0 0
        %1128 = vmatpush1.bf16.msra.mxu0 0
        %1129 = vmatprep.subr.bf16.mxu0 0
        %1130 = vmatpush1.bf16.msra.mxu0 %v925
        %1131 = vmatprep.subr.bf16.mxu0 0
        %1132 = vmatpush2.bf16.msra.mxu0 0
        %1133 = vmatprep.subr.bf16.mxu0 0
        %1134 = vmatpush2.bf16.msra.mxu0 0
        %1135 = vmatprep.subr.bf16.mxu0 0
        %1136 = vmatpush2.bf16.msra.mxu0 0
        %1137 = vmatprep.subr.bf16.mxu0 0
        %1138 = vmatpush2.bf16.msra.mxu0 0
        %1139 = vmatprep.subr.bf16.mxu0 0
        %1140 = vmatpush2.bf16.msra.mxu0 0
        %1141 = vmatprep.subr.bf16.mxu0 0
        %1142 = vmatpush2.bf16.msra.mxu0 0
        %1143 = vmatprep.subr.bf16.mxu0 0
        %1144 = vmatpush2.bf16.msra.mxu0 0
        %1145 = vmatprep.subr.bf16.mxu0 0
        %1146 = vmatpush2.bf16.msra.mxu0 0
        %1147 = vmatprep.mubr.bf16.mxu0 0
        %1148 = vmatmul.mubr.bf16.gmra.mxu0 %v1113
        %v1149 = vpop.f32.mrf.mxu0
        %v1150 = vadd.f32 0.0, %v1149
        %v1151 = vpop.f32.mrf.mxu0
        %v1152 = vpop.f32.mrf.mxu0
        %v1153 = vadd.f32 0.0, %v1152
        %v1154 = vpop.f32.mrf.mxu0
        %1155 = vdwg.mxu0
        %v1156 = vmul.f32 %v1106, %v1062
        %v1157 = vmul.f32 %v1109, %v1063
        %v1158 = vmul.f32 %v1150, %v1064
        %v1159 = vmul.f32 %v1153, %v1065
        %v1160 = vpack.c.bf16 %v1157, %v1156
        %v1161 = vpack.c.bf16 %v1159, %v1158
        %1163 = vrot.lane.b32.xlu0 %v920, 96
        %v1164 = vpop.permute.xlu0 %1163
        %1166 = vrot.lane.b32.xlu0 %v921, 96
        %v1167 = vpop.permute.xlu0 %1166
        %v1169 = vsel %vm926, %v1164, 0
        %v1172 = vsel %vm926, %v1167, 0
        %1174 = vmatprep.subr.bf16.mxu0 0
        %1175 = vmatpush1.bf16.xpose.msra.mxu0 0
        %1176 = vmatprep.subr.bf16.mxu0 0
        %1177 = vmatpush1.bf16.xpose.msra.mxu0 0
        %1178 = vmatprep.subr.bf16.mxu0 0
        %1179 = vmatpush1.bf16.xpose.msra.mxu0 0
        %1180 = vmatprep.subr.bf16.mxu0 0
        %1181 = vmatpush1.bf16.xpose.msra.mxu0 0
        %1182 = vmatprep.subr.bf16.mxu0 0
        %1183 = vmatpush1.bf16.xpose.msra.mxu0 0
        %1184 = vmatprep.subr.bf16.mxu0 0
        %1185 = vmatpush1.bf16.xpose.msra.mxu0 0
        %1186 = vmatprep.subr.bf16.mxu0 0
        %1187 = vmatpush1.bf16.xpose.msra.mxu0 0
        %1188 = vmatprep.subr.bf16.mxu0 0
        %1189 = vmatpush1.bf16.xpose.msra.mxu0 %v1172
        %1190 = vmatprep.subr.bf16.mxu0 0
        %1191 = vmatpush2.bf16.xpose.msra.mxu0 0
        %1192 = vmatprep.subr.bf16.mxu0 0
        %1193 = vmatpush2.bf16.xpose.msra.mxu0 0
        %1194 = vmatprep.subr.bf16.mxu0 0
        %1195 = vmatpush2.bf16.xpose.msra.mxu0 0
        %1196 = vmatprep.subr.bf16.mxu0 0
        %1197 = vmatpush2.bf16.xpose.msra.mxu0 0
        %1198 = vmatprep.subr.bf16.mxu0 0
        %1199 = vmatpush2.bf16.xpose.msra.mxu0 0
        %1200 = vmatprep.subr.bf16.mxu0 0
        %1201 = vmatpush2.bf16.xpose.msra.mxu0 0
        %1202 = vmatprep.subr.bf16.mxu0 0
        %1203 = vmatpush2.bf16.xpose.msra.mxu0 0
        %1204 = vmatprep.subr.bf16.mxu0 0
        %1205 = vmatpush2.bf16.xpose.msra.mxu0 0
        %1206 = vmatprep.mubr.bf16.mxu0 0
        %1207 = vmatmul.mubr.bf16.gmra.mxu0 %v1169
        %v1208 = vpop.f32.mrf.mxu0
        %v1209 = vadd.f32 0.0, %v1208
        %v1210 = vpop.f32.mrf.mxu0
        %v1211 = vpop.f32.mrf.mxu0
        %v1212 = vadd.f32 0.0, %v1211
        %v1213 = vpop.f32.mrf.mxu0
        %1214 = vdwg.mxu0
        %1216 = vrot.lane.b32.xlu0 %v923, 96
        %v1217 = vpop.permute.xlu0 %1216
        %1219 = vrot.lane.b32.xlu0 %v924, 96
        %v1220 = vpop.permute.xlu0 %1219
        %v1222 = vsel %vm926, %v1217, 0
        %v1225 = vsel %vm926, %v1220, 0
        %1227 = vmatprep.subr.bf16.mxu0 0
        %1228 = vmatpush1.bf16.xpose.msra.mxu0 0
        %1229 = vmatprep.subr.bf16.mxu0 0
        %1230 = vmatpush1.bf16.xpose.msra.mxu0 0
        %1231 = vmatprep.subr.bf16.mxu0 0
        %1232 = vmatpush1.bf16.xpose.msra.mxu0 0
        %1233 = vmatprep.subr.bf16.mxu0 0
        %1234 = vmatpush1.bf16.xpose.msra.mxu0 0
        %1235 = vmatprep.subr.bf16.mxu0 0
        %1236 = vmatpush1.bf16.xpose.msra.mxu0 0
        %1237 = vmatprep.subr.bf16.mxu0 0
        %1238 = vmatpush1.bf16.xpose.msra.mxu0 0
        %1239 = vmatprep.subr.bf16.mxu0 0
        %1240 = vmatpush1.bf16.xpose.msra.mxu0 0
        %1241 = vmatprep.subr.bf16.mxu0 0
        %1242 = vmatpush1.bf16.xpose.msra.mxu0 %v1225
        %1243 = vmatprep.subr.bf16.mxu0 0
        %1244 = vmatpush2.bf16.xpose.msra.mxu0 0
        %1245 = vmatprep.subr.bf16.mxu0 0
        %1246 = vmatpush2.bf16.xpose.msra.mxu0 0
        %1247 = vmatprep.subr.bf16.mxu0 0
        %1248 = vmatpush2.bf16.xpose.msra.mxu0 0
        %1249 = vmatprep.subr.bf16.mxu0 0
        %1250 = vmatpush2.bf16.xpose.msra.mxu0 0
        %1251 = vmatprep.subr.bf16.mxu0 0
        %1252 = vmatpush2.bf16.xpose.msra.mxu0 0
        %1253 = vmatprep.subr.bf16.mxu0 0
        %1254 = vmatpush2.bf16.xpose.msra.mxu0 0
        %1255 = vmatprep.subr.bf16.mxu0 0
        %1256 = vmatpush2.bf16.xpose.msra.mxu0 0
        %1257 = vmatprep.subr.bf16.mxu0 0
        %1258 = vmatpush2.bf16.xpose.msra.mxu0 0
        %1259 = vmatprep.mubr.bf16.mxu0 0
        %1260 = vmatmul.mubr.bf16.gmra.mxu0 %v1222
        %v1261 = vpop.f32.mrf.mxu0
        %v1262 = vadd.f32 0.0, %v1261
        %v1263 = vpop.f32.mrf.mxu0
        %v1264 = vpop.f32.mrf.mxu0
        %v1265 = vadd.f32 0.0, %v1264
        %v1266 = vpop.f32.mrf.mxu0
        %1267 = vdwg.mxu0
        %v1268 = vmul.f32 %v1209, 0.17677669
        %v1269 = vmul.f32 %v1212, 0.17677669
        %v1270 = vmul.f32 %v1262, 0.17677669
        %v1271 = vmul.f32 %v1265, 0.17677669
        %v1272 = vsel %vm1025, %v1268, -inf
        %1273 = vmax.xlane.f32.xlu0 %v1272
        %v1274 = vpop.xlane.xlu0 %1273
        %v1275 = vsel %vm1025, %v1269, -inf
        %1276 = vmax.xlane.f32.xlu0 %v1275
        %v1277 = vpop.xlane.xlu0 %1276
        %v1278 = vsel %vm1025, %v1270, -inf
        %1279 = vmax.xlane.f32.xlu0 %v1278
        %v1280 = vpop.xlane.xlu0 %1279
        %v1281 = vsel %vm1025, %v1271, -inf
        %1282 = vmax.xlane.f32.xlu0 %v1281
        %v1283 = vpop.xlane.xlu0 %1282
        %v1284 = vsub.f32 %v1268, %v1274
        %v1285 = vsub.f32 %v1269, %v1277
        %v1286 = vsub.f32 %v1270, %v1280
        %v1287 = vsub.f32 %v1271, %v1283
        %v1288 = vmul.f32 %v1284, 1.442695
        %v1289 = vpow.pop %v1288
        %v1290 = vmul.f32 %v1285, 1.442695
        %v1291 = vpow.pop %v1290
        %v1292 = vmul.f32 %v1286, 1.442695
        %v1293 = vpow.pop %v1292
        %v1294 = vmul.f32 %v1287, 1.442695
        %v1295 = vpow.pop %v1294
        %v1296 = vsel %vm1025, %v1289, 0.0
        %1297 = vadd.xlane.f32.xlu0 %v1296
        %v1298 = vpop.xlane.xlu0 %1297
        %v1299 = vsel %vm1025, %v1291, 0.0
        %1300 = vadd.xlane.f32.xlu0 %v1299
        %v1301 = vpop.xlane.xlu0 %1300
        %v1302 = vsel %vm1025, %v1293, 0.0
        %1303 = vadd.xlane.f32.xlu0 %v1302
        %v1304 = vpop.xlane.xlu0 %1303
        %v1305 = vsel %vm1025, %v1295, 0.0
        %1306 = vadd.xlane.f32.xlu0 %v1305
        %v1307 = vpop.xlane.xlu0 %1306
        %v1308 = vrcp.pop %v1298
        %v1309 = vrcp.pop %v1301
        %v1310 = vrcp.pop %v1304
        %v1311 = vrcp.pop %v1307
        %v1312 = vpack.c.bf16 %v1291, %v1289
        %v1313 = vpack.c.bf16 %v1295, %v1293
        %1315 = vrot.lane.b32.xlu0 %v922, 96
        %v1316 = vpop.permute.xlu0 %1315
        %v1319 = vsel %vm1025, %v1312, 0
        %1321 = vmatprep.subr.bf16.mxu0 0
        %1322 = vmatpush1.bf16.msra.mxu0 0
        %1323 = vmatprep.subr.bf16.mxu0 0
        %1324 = vmatpush1.bf16.msra.mxu0 0
        %1325 = vmatprep.subr.bf16.mxu0 0
        %1326 = vmatpush1.bf16.msra.mxu0 0
        %1327 = vmatprep.subr.bf16.mxu0 0
        %1328 = vmatpush1.bf16.msra.mxu0 0
        %1329 = vmatprep.subr.bf16.mxu0 0
        %1330 = vmatpush1.bf16.msra.mxu0 0
        %1331 = vmatprep.subr.bf16.mxu0 0
        %1332 = vmatpush1.bf16.msra.mxu0 0
        %1333 = vmatprep.subr.bf16.mxu0 0
        %1334 = vmatpush1.bf16.msra.mxu0 0
        %1335 = vmatprep.subr.bf16.mxu0 0
        %1336 = vmatpush1.bf16.msra.mxu0 %v1316
        %1337 = vmatprep.subr.bf16.mxu0 0
        %1338 = vmatpush2.bf16.msra.mxu0 0
        %1339 = vmatprep.subr.bf16.mxu0 0
        %1340 = vmatpush2.bf16.msra.mxu0 0
        %1341 = vmatprep.subr.bf16.mxu0 0
        %1342 = vmatpush2.bf16.msra.mxu0 0
        %1343 = vmatprep.subr.bf16.mxu0 0
        %1344 = vmatpush2.bf16.msra.mxu0 0
        %1345 = vmatprep.subr.bf16.mxu0 0
        %1346 = vmatpush2.bf16.msra.mxu0 0
        %1347 = vmatprep.subr.bf16.mxu0 0
        %1348 = vmatpush2.bf16.msra.mxu0 0
        %1349 = vmatprep.subr.bf16.mxu0 0
        %1350 = vmatpush2.bf16.msra.mxu0 0
        %1351 = vmatprep.subr.bf16.mxu0 0
        %1352 = vmatpush2.bf16.msra.mxu0 0
        %1353 = vmatprep.mubr.bf16.mxu0 0
        %1354 = vmatmul.mubr.bf16.gmra.mxu0 %v1319
        %v1355 = vpop.f32.mrf.mxu0
        %v1356 = vadd.f32 0.0, %v1355
        %v1357 = vpop.f32.mrf.mxu0
        %v1358 = vpop.f32.mrf.mxu0
        %v1359 = vadd.f32 0.0, %v1358
        %v1360 = vpop.f32.mrf.mxu0
        %1361 = vdwg.mxu0
        %1363 = vrot.lane.b32.xlu0 %v925, 96
        %v1364 = vpop.permute.xlu0 %1363
        %v1367 = vsel %vm1025, %v1313, 0
        %1369 = vmatprep.subr.bf16.mxu0 0
        %1370 = vmatpush1.bf16.msra.mxu0 0
        %1371 = vmatprep.subr.bf16.mxu0 0
        %1372 = vmatpush1.bf16.msra.mxu0 0
        %1373 = vmatprep.subr.bf16.mxu0 0
        %1374 = vmatpush1.bf16.msra.mxu0 0
        %1375 = vmatprep.subr.bf16.mxu0 0
        %1376 = vmatpush1.bf16.msra.mxu0 0
        %1377 = vmatprep.subr.bf16.mxu0 0
        %1378 = vmatpush1.bf16.msra.mxu0 0
        %1379 = vmatprep.subr.bf16.mxu0 0
        %1380 = vmatpush1.bf16.msra.mxu0 0
        %1381 = vmatprep.subr.bf16.mxu0 0
        %1382 = vmatpush1.bf16.msra.mxu0 0
        %1383 = vmatprep.subr.bf16.mxu0 0
        %1384 = vmatpush1.bf16.msra.mxu0 %v1364
        %1385 = vmatprep.subr.bf16.mxu0 0
        %1386 = vmatpush2.bf16.msra.mxu0 0
        %1387 = vmatprep.subr.bf16.mxu0 0
        %1388 = vmatpush2.bf16.msra.mxu0 0
        %1389 = vmatprep.subr.bf16.mxu0 0
        %1390 = vmatpush2.bf16.msra.mxu0 0
        %1391 = vmatprep.subr.bf16.mxu0 0
        %1392 = vmatpush2.bf16.msra.mxu0 0
        %1393 = vmatprep.subr.bf16.mxu0 0
        %1394 = vmatpush2.bf16.msra.mxu0 0
        %1395 = vmatprep.subr.bf16.mxu0 0
        %1396 = vmatpush2.bf16.msra.mxu0 0
        %1397 = vmatprep.subr.bf16.mxu0 0
        %1398 = vmatpush2.bf16.msra.mxu0 0
        %1399 = vmatprep.subr.bf16.mxu0 0
        %1400 = vmatpush2.bf16.msra.mxu0 0
        %1401 = vmatprep.mubr.bf16.mxu0 0
        %1402 = vmatmul.mubr.bf16.gmra.mxu0 %v1367
        %v1403 = vpop.f32.mrf.mxu0
        %v1404 = vadd.f32 0.0, %v1403
        %v1405 = vpop.f32.mrf.mxu0
        %v1406 = vpop.f32.mrf.mxu0
        %v1407 = vadd.f32 0.0, %v1406
        %v1408 = vpop.f32.mrf.mxu0
        %1409 = vdwg.mxu0
        %v1410 = vmul.f32 %v1356, %v1308
        %v1411 = vmul.f32 %v1359, %v1309
        %v1412 = vmul.f32 %v1404, %v1310
        %v1413 = vmul.f32 %v1407, %v1311
        %v1414 = vpack.c.bf16 %v1411, %v1410
        %v1415 = vpack.c.bf16 %v1413, %v1412
        %1416 = vrot.lane.b32.xlu0 %v920, 64
        %v1417 = vpop.permute.xlu0 %1416
        %1418 = vrot.lane.b32.xlu0 %v921, 64
        %v1419 = vpop.permute.xlu0 %1418
        %v1421 = vsel %vm926, %v1417, 0
        %v1424 = vsel %vm926, %v1419, 0
        %1426 = vmatprep.subr.bf16.mxu0 0
        %1427 = vmatpush1.bf16.xpose.msra.mxu0 0
        %1428 = vmatprep.subr.bf16.mxu0 0
        %1429 = vmatpush1.bf16.xpose.msra.mxu0 0
        %1430 = vmatprep.subr.bf16.mxu0 0
        %1431 = vmatpush1.bf16.xpose.msra.mxu0 0
        %1432 = vmatprep.subr.bf16.mxu0 0
        %1433 = vmatpush1.bf16.xpose.msra.mxu0 0
        %1434 = vmatprep.subr.bf16.mxu0 0
        %1435 = vmatpush1.bf16.xpose.msra.mxu0 0
        %1436 = vmatprep.subr.bf16.mxu0 0
        %1437 = vmatpush1.bf16.xpose.msra.mxu0 0
        %1438 = vmatprep.subr.bf16.mxu0 0
        %1439 = vmatpush1.bf16.xpose.msra.mxu0 0
        %1440 = vmatprep.subr.bf16.mxu0 0
        %1441 = vmatpush1.bf16.xpose.msra.mxu0 %v1424
        %1442 = vmatprep.subr.bf16.mxu0 0
        %1443 = vmatpush2.bf16.xpose.msra.mxu0 0
        %1444 = vmatprep.subr.bf16.mxu0 0
        %1445 = vmatpush2.bf16.xpose.msra.mxu0 0
        %1446 = vmatprep.subr.bf16.mxu0 0
        %1447 = vmatpush2.bf16.xpose.msra.mxu0 0
        %1448 = vmatprep.subr.bf16.mxu0 0
        %1449 = vmatpush2.bf16.xpose.msra.mxu0 0
        %1450 = vmatprep.subr.bf16.mxu0 0
        %1451 = vmatpush2.bf16.xpose.msra.mxu0 0
        %1452 = vmatprep.subr.bf16.mxu0 0
        %1453 = vmatpush2.bf16.xpose.msra.mxu0 0
        %1454 = vmatprep.subr.bf16.mxu0 0
        %1455 = vmatpush2.bf16.xpose.msra.mxu0 0
        %1456 = vmatprep.subr.bf16.mxu0 0
        %1457 = vmatpush2.bf16.xpose.msra.mxu0 0
        %1458 = vmatprep.mubr.bf16.mxu0 0
        %1459 = vmatmul.mubr.bf16.gmra.mxu0 %v1421
        %v1460 = vpop.f32.mrf.mxu0
        %v1461 = vadd.f32 0.0, %v1460
        %v1462 = vpop.f32.mrf.mxu0
        %v1463 = vpop.f32.mrf.mxu0
        %v1464 = vadd.f32 0.0, %v1463
        %v1465 = vpop.f32.mrf.mxu0
        %1466 = vdwg.mxu0
        %1467 = vrot.lane.b32.xlu0 %v923, 64
        %v1468 = vpop.permute.xlu0 %1467
        %1469 = vrot.lane.b32.xlu0 %v924, 64
        %v1470 = vpop.permute.xlu0 %1469
        %v1472 = vsel %vm926, %v1468, 0
        %v1475 = vsel %vm926, %v1470, 0
        %1477 = vmatprep.subr.bf16.mxu0 0
        %1478 = vmatpush1.bf16.xpose.msra.mxu0 0
        %1479 = vmatprep.subr.bf16.mxu0 0
        %1480 = vmatpush1.bf16.xpose.msra.mxu0 0
        %1481 = vmatprep.subr.bf16.mxu0 0
        %1482 = vmatpush1.bf16.xpose.msra.mxu0 0
        %1483 = vmatprep.subr.bf16.mxu0 0
        %1484 = vmatpush1.bf16.xpose.msra.mxu0 0
        %1485 = vmatprep.subr.bf16.mxu0 0
        %1486 = vmatpush1.bf16.xpose.msra.mxu0 0
        %1487 = vmatprep.subr.bf16.mxu0 0
        %1488 = vmatpush1.bf16.xpose.msra.mxu0 0
        %1489 = vmatprep.subr.bf16.mxu0 0
        %1490 = vmatpush1.bf16.xpose.msra.mxu0 0
        %1491 = vmatprep.subr.bf16.mxu0 0
        %1492 = vmatpush1.bf16.xpose.msra.mxu0 %v1475
        %1493 = vmatprep.subr.bf16.mxu0 0
        %1494 = vmatpush2.bf16.xpose.msra.mxu0 0
        %1495 = vmatprep.subr.bf16.mxu0 0
        %1496 = vmatpush2.bf16.xpose.msra.mxu0 0
        %1497 = vmatprep.subr.bf16.mxu0 0
        %1498 = vmatpush2.bf16.xpose.msra.mxu0 0
        %1499 = vmatprep.subr.bf16.mxu0 0
        %1500 = vmatpush2.bf16.xpose.msra.mxu0 0
        %1501 = vmatprep.subr.bf16.mxu0 0
        %1502 = vmatpush2.bf16.xpose.msra.mxu0 0
        %1503 = vmatprep.subr.bf16.mxu0 0
        %1504 = vmatpush2.bf16.xpose.msra.mxu0 0
        %1505 = vmatprep.subr.bf16.mxu0 0
        %1506 = vmatpush2.bf16.xpose.msra.mxu0 0
        %1507 = vmatprep.subr.bf16.mxu0 0
        %1508 = vmatpush2.bf16.xpose.msra.mxu0 0
        %1509 = vmatprep.mubr.bf16.mxu0 0
        %1510 = vmatmul.mubr.bf16.gmra.mxu0 %v1472
        %v1511 = vpop.f32.mrf.mxu0
        %v1512 = vadd.f32 0.0, %v1511
        %v1513 = vpop.f32.mrf.mxu0
        %v1514 = vpop.f32.mrf.mxu0
        %v1515 = vadd.f32 0.0, %v1514
        %v1516 = vpop.f32.mrf.mxu0
        %1517 = vdwg.mxu0
        %v1518 = vmul.f32 %v1461, 0.17677669
        %v1519 = vmul.f32 %v1464, 0.17677669
        %v1520 = vmul.f32 %v1512, 0.17677669
        %v1521 = vmul.f32 %v1515, 0.17677669
        %v1522 = vsel %vm1025, %v1518, -inf
        %1523 = vmax.xlane.f32.xlu0 %v1522
        %v1524 = vpop.xlane.xlu0 %1523
        %v1525 = vsel %vm1025, %v1519, -inf
        %1526 = vmax.xlane.f32.xlu0 %v1525
        %v1527 = vpop.xlane.xlu0 %1526
        %v1528 = vsel %vm1025, %v1520, -inf
        %1529 = vmax.xlane.f32.xlu0 %v1528
        %v1530 = vpop.xlane.xlu0 %1529
        %v1531 = vsel %vm1025, %v1521, -inf
        %1532 = vmax.xlane.f32.xlu0 %v1531
        %v1533 = vpop.xlane.xlu0 %1532
        %v1534 = vsub.f32 %v1518, %v1524
        %v1535 = vsub.f32 %v1519, %v1527
        %v1536 = vsub.f32 %v1520, %v1530
        %v1537 = vsub.f32 %v1521, %v1533
        %v1538 = vmul.f32 %v1534, 1.442695
        %v1539 = vpow.pop %v1538
        %v1540 = vmul.f32 %v1535, 1.442695
        %v1541 = vpow.pop %v1540
        %v1542 = vmul.f32 %v1536, 1.442695
        %v1543 = vpow.pop %v1542
        %v1544 = vmul.f32 %v1537, 1.442695
        %v1545 = vpow.pop %v1544
        %v1546 = vsel %vm1025, %v1539, 0.0
        %1547 = vadd.xlane.f32.xlu0 %v1546
        %v1548 = vpop.xlane.xlu0 %1547
        %v1549 = vsel %vm1025, %v1541, 0.0
        %1550 = vadd.xlane.f32.xlu0 %v1549
        %v1551 = vpop.xlane.xlu0 %1550
        %v1552 = vsel %vm1025, %v1543, 0.0
        %1553 = vadd.xlane.f32.xlu0 %v1552
        %v1554 = vpop.xlane.xlu0 %1553
        %v1555 = vsel %vm1025, %v1545, 0.0
        %1556 = vadd.xlane.f32.xlu0 %v1555
        %v1557 = vpop.xlane.xlu0 %1556
        %v1558 = vrcp.pop %v1548
        %v1559 = vrcp.pop %v1551
        %v1560 = vrcp.pop %v1554
        %v1561 = vrcp.pop %v1557
        %v1562 = vpack.c.bf16 %v1541, %v1539
        %v1563 = vpack.c.bf16 %v1545, %v1543
        %1564 = vrot.lane.b32.xlu0 %v922, 64
        %v1565 = vpop.permute.xlu0 %1564
        %v1568 = vsel %vm1025, %v1562, 0
        %1570 = vmatprep.subr.bf16.mxu0 0
        %1571 = vmatpush1.bf16.msra.mxu0 0
        %1572 = vmatprep.subr.bf16.mxu0 0
        %1573 = vmatpush1.bf16.msra.mxu0 0
        %1574 = vmatprep.subr.bf16.mxu0 0
        %1575 = vmatpush1.bf16.msra.mxu0 0
        %1576 = vmatprep.subr.bf16.mxu0 0
        %1577 = vmatpush1.bf16.msra.mxu0 0
        %1578 = vmatprep.subr.bf16.mxu0 0
        %1579 = vmatpush1.bf16.msra.mxu0 0
        %1580 = vmatprep.subr.bf16.mxu0 0
        %1581 = vmatpush1.bf16.msra.mxu0 0
        %1582 = vmatprep.subr.bf16.mxu0 0
        %1583 = vmatpush1.bf16.msra.mxu0 0
        %1584 = vmatprep.subr.bf16.mxu0 0
        %1585 = vmatpush1.bf16.msra.mxu0 %v1565
        %1586 = vmatprep.subr.bf16.mxu0 0
        %1587 = vmatpush2.bf16.msra.mxu0 0
        %1588 = vmatprep.subr.bf16.mxu0 0
        %1589 = vmatpush2.bf16.msra.mxu0 0
        %1590 = vmatprep.subr.bf16.mxu0 0
        %1591 = vmatpush2.bf16.msra.mxu0 0
        %1592 = vmatprep.subr.bf16.mxu0 0
        %1593 = vmatpush2.bf16.msra.mxu0 0
        %1594 = vmatprep.subr.bf16.mxu0 0
        %1595 = vmatpush2.bf16.msra.mxu0 0
        %1596 = vmatprep.subr.bf16.mxu0 0
        %1597 = vmatpush2.bf16.msra.mxu0 0
        %1598 = vmatprep.subr.bf16.mxu0 0
        %1599 = vmatpush2.bf16.msra.mxu0 0
        %1600 = vmatprep.subr.bf16.mxu0 0
        %1601 = vmatpush2.bf16.msra.mxu0 0
        %1602 = vmatprep.mubr.bf16.mxu0 0
        %1603 = vmatmul.mubr.bf16.gmra.mxu0 %v1568
        %v1604 = vpop.f32.mrf.mxu0
        %v1605 = vadd.f32 0.0, %v1604
        %v1606 = vpop.f32.mrf.mxu0
        %v1607 = vpop.f32.mrf.mxu0
        %v1608 = vadd.f32 0.0, %v1607
        %v1609 = vpop.f32.mrf.mxu0
        %1610 = vdwg.mxu0
        %1611 = vrot.lane.b32.xlu0 %v925, 64
        %v1612 = vpop.permute.xlu0 %1611
        %v1615 = vsel %vm1025, %v1563, 0
        %1617 = vmatprep.subr.bf16.mxu0 0
        %1618 = vmatpush1.bf16.msra.mxu0 0
        %1619 = vmatprep.subr.bf16.mxu0 0
        %1620 = vmatpush1.bf16.msra.mxu0 0
        %1621 = vmatprep.subr.bf16.mxu0 0
        %1622 = vmatpush1.bf16.msra.mxu0 0
        %1623 = vmatprep.subr.bf16.mxu0 0
        %1624 = vmatpush1.bf16.msra.mxu0 0
        %1625 = vmatprep.subr.bf16.mxu0 0
        %1626 = vmatpush1.bf16.msra.mxu0 0
        %1627 = vmatprep.subr.bf16.mxu0 0
        %1628 = vmatpush1.bf16.msra.mxu0 0
        %1629 = vmatprep.subr.bf16.mxu0 0
        %1630 = vmatpush1.bf16.msra.mxu0 0
        %1631 = vmatprep.subr.bf16.mxu0 0
        %1632 = vmatpush1.bf16.msra.mxu0 %v1612
        %1633 = vmatprep.subr.bf16.mxu0 0
        %1634 = vmatpush2.bf16.msra.mxu0 0
        %1635 = vmatprep.subr.bf16.mxu0 0
        %1636 = vmatpush2.bf16.msra.mxu0 0
        %1637 = vmatprep.subr.bf16.mxu0 0
        %1638 = vmatpush2.bf16.msra.mxu0 0
        %1639 = vmatprep.subr.bf16.mxu0 0
        %1640 = vmatpush2.bf16.msra.mxu0 0
        %1641 = vmatprep.subr.bf16.mxu0 0
        %1642 = vmatpush2.bf16.msra.mxu0 0
        %1643 = vmatprep.subr.bf16.mxu0 0
        %1644 = vmatpush2.bf16.msra.mxu0 0
        %1645 = vmatprep.subr.bf16.mxu0 0
        %1646 = vmatpush2.bf16.msra.mxu0 0
        %1647 = vmatprep.subr.bf16.mxu0 0
        %1648 = vmatpush2.bf16.msra.mxu0 0
        %1649 = vmatprep.mubr.bf16.mxu0 0
        %1650 = vmatmul.mubr.bf16.gmra.mxu0 %v1615
        %v1651 = vpop.f32.mrf.mxu0
        %v1652 = vadd.f32 0.0, %v1651
        %v1653 = vpop.f32.mrf.mxu0
        %v1654 = vpop.f32.mrf.mxu0
        %v1655 = vadd.f32 0.0, %v1654
        %v1656 = vpop.f32.mrf.mxu0
        %1657 = vdwg.mxu0
        %v1658 = vmul.f32 %v1605, %v1558
        %v1659 = vmul.f32 %v1608, %v1559
        %v1660 = vmul.f32 %v1652, %v1560
        %v1661 = vmul.f32 %v1655, %v1561
        %v1662 = vpack.c.bf16 %v1659, %v1658
        %v1663 = vpack.c.bf16 %v1661, %v1660
        %1664 = vrot.lane.b32.xlu0 %v920, 32
        %v1665 = vpop.permute.xlu0 %1664
        %1666 = vrot.lane.b32.xlu0 %v921, 32
        %v1667 = vpop.permute.xlu0 %1666
        %v1669 = vsel %vm926, %v1665, 0
        %v1672 = vsel %vm926, %v1667, 0
        %1674 = vmatprep.subr.bf16.mxu0 0
        %1675 = vmatpush1.bf16.xpose.msra.mxu0 0
        %1676 = vmatprep.subr.bf16.mxu0 0
        %1677 = vmatpush1.bf16.xpose.msra.mxu0 0
        %1678 = vmatprep.subr.bf16.mxu0 0
        %1679 = vmatpush1.bf16.xpose.msra.mxu0 0
        %1680 = vmatprep.subr.bf16.mxu0 0
        %1681 = vmatpush1.bf16.xpose.msra.mxu0 0
        %1682 = vmatprep.subr.bf16.mxu0 0
        %1683 = vmatpush1.bf16.xpose.msra.mxu0 0
        %1684 = vmatprep.subr.bf16.mxu0 0
        %1685 = vmatpush1.bf16.xpose.msra.mxu0 0
        %1686 = vmatprep.subr.bf16.mxu0 0
        %1687 = vmatpush1.bf16.xpose.msra.mxu0 0
        %1688 = vmatprep.subr.bf16.mxu0 0
        %1689 = vmatpush1.bf16.xpose.msra.mxu0 %v1672
        %1690 = vmatprep.subr.bf16.mxu0 0
        %1691 = vmatpush2.bf16.xpose.msra.mxu0 0
        %1692 = vmatprep.subr.bf16.mxu0 0
        %1693 = vmatpush2.bf16.xpose.msra.mxu0 0
        %1694 = vmatprep.subr.bf16.mxu0 0
        %1695 = vmatpush2.bf16.xpose.msra.mxu0 0
        %1696 = vmatprep.subr.bf16.mxu0 0
        %1697 = vmatpush2.bf16.xpose.msra.mxu0 0
        %1698 = vmatprep.subr.bf16.mxu0 0
        %1699 = vmatpush2.bf16.xpose.msra.mxu0 0
        %1700 = vmatprep.subr.bf16.mxu0 0
        %1701 = vmatpush2.bf16.xpose.msra.mxu0 0
        %1702 = vmatprep.subr.bf16.mxu0 0
        %1703 = vmatpush2.bf16.xpose.msra.mxu0 0
        %1704 = vmatprep.subr.bf16.mxu0 0
        %1705 = vmatpush2.bf16.xpose.msra.mxu0 0
        %1706 = vmatprep.mubr.bf16.mxu0 0
        %1707 = vmatmul.mubr.bf16.gmra.mxu0 %v1669
        %v1708 = vpop.f32.mrf.mxu0
        %v1709 = vadd.f32 0.0, %v1708
        %v1710 = vpop.f32.mrf.mxu0
        %v1711 = vpop.f32.mrf.mxu0
        %v1712 = vadd.f32 0.0, %v1711
        %v1713 = vpop.f32.mrf.mxu0
        %1714 = vdwg.mxu0
        %1715 = vrot.lane.b32.xlu0 %v923, 32
        %v1716 = vpop.permute.xlu0 %1715
        %1717 = vrot.lane.b32.xlu0 %v924, 32
        %v1718 = vpop.permute.xlu0 %1717
        %v1720 = vsel %vm926, %v1716, 0
        %v1723 = vsel %vm926, %v1718, 0
        %1725 = vmatprep.subr.bf16.mxu0 0
        %1726 = vmatpush1.bf16.xpose.msra.mxu0 0
        %1727 = vmatprep.subr.bf16.mxu0 0
        %1728 = vmatpush1.bf16.xpose.msra.mxu0 0
        %1729 = vmatprep.subr.bf16.mxu0 0
        %1730 = vmatpush1.bf16.xpose.msra.mxu0 0
        %1731 = vmatprep.subr.bf16.mxu0 0
        %1732 = vmatpush1.bf16.xpose.msra.mxu0 0
        %1733 = vmatprep.subr.bf16.mxu0 0
        %1734 = vmatpush1.bf16.xpose.msra.mxu0 0
        %1735 = vmatprep.subr.bf16.mxu0 0
        %1736 = vmatpush1.bf16.xpose.msra.mxu0 0
        %1737 = vmatprep.subr.bf16.mxu0 0
        %1738 = vmatpush1.bf16.xpose.msra.mxu0 0
        %1739 = vmatprep.subr.bf16.mxu0 0
        %1740 = vmatpush1.bf16.xpose.msra.mxu0 %v1723
        %1741 = vmatprep.subr.bf16.mxu0 0
        %1742 = vmatpush2.bf16.xpose.msra.mxu0 0
        %1743 = vmatprep.subr.bf16.mxu0 0
        %1744 = vmatpush2.bf16.xpose.msra.mxu0 0
        %1745 = vmatprep.subr.bf16.mxu0 0
        %1746 = vmatpush2.bf16.xpose.msra.mxu0 0
        %1747 = vmatprep.subr.bf16.mxu0 0
        %1748 = vmatpush2.bf16.xpose.msra.mxu0 0
        %1749 = vmatprep.subr.bf16.mxu0 0
        %1750 = vmatpush2.bf16.xpose.msra.mxu0 0
        %1751 = vmatprep.subr.bf16.mxu0 0
        %1752 = vmatpush2.bf16.xpose.msra.mxu0 0
        %1753 = vmatprep.subr.bf16.mxu0 0
        %1754 = vmatpush2.bf16.xpose.msra.mxu0 0
        %1755 = vmatprep.subr.bf16.mxu0 0
        %1756 = vmatpush2.bf16.xpose.msra.mxu0 0
        %1757 = vmatprep.mubr.bf16.mxu0 0
        %1758 = vmatmul.mubr.bf16.gmra.mxu0 %v1720
        %v1759 = vpop.f32.mrf.mxu0
        %v1760 = vadd.f32 0.0, %v1759
        %v1761 = vpop.f32.mrf.mxu0
        %v1762 = vpop.f32.mrf.mxu0
        %v1763 = vadd.f32 0.0, %v1762
        %v1764 = vpop.f32.mrf.mxu0
        %1765 = vdwg.mxu0
        %v1766 = vmul.f32 %v1709, 0.17677669
        %v1767 = vmul.f32 %v1712, 0.17677669
        %v1768 = vmul.f32 %v1760, 0.17677669
        %v1769 = vmul.f32 %v1763, 0.17677669
        %v1770 = vsel %vm1025, %v1766, -inf
        %1771 = vmax.xlane.f32.xlu0 %v1770
        %v1772 = vpop.xlane.xlu0 %1771
        %v1773 = vsel %vm1025, %v1767, -inf
        %1774 = vmax.xlane.f32.xlu0 %v1773
        %v1775 = vpop.xlane.xlu0 %1774
        %v1776 = vsel %vm1025, %v1768, -inf
        %1777 = vmax.xlane.f32.xlu0 %v1776
        %v1778 = vpop.xlane.xlu0 %1777
        %v1779 = vsel %vm1025, %v1769, -inf
        %1780 = vmax.xlane.f32.xlu0 %v1779
        %v1781 = vpop.xlane.xlu0 %1780
        %v1782 = vsub.f32 %v1766, %v1772
        %v1783 = vsub.f32 %v1767, %v1775
        %v1784 = vsub.f32 %v1768, %v1778
        %v1785 = vsub.f32 %v1769, %v1781
        %v1786 = vmul.f32 %v1782, 1.442695
        %v1787 = vpow.pop %v1786
        %v1788 = vmul.f32 %v1783, 1.442695
        %v1789 = vpow.pop %v1788
        %v1790 = vmul.f32 %v1784, 1.442695
        %v1791 = vpow.pop %v1790
        %v1792 = vmul.f32 %v1785, 1.442695
        %v1793 = vpow.pop %v1792
        %v1794 = vsel %vm1025, %v1787, 0.0
        %1795 = vadd.xlane.f32.xlu0 %v1794
        %v1796 = vpop.xlane.xlu0 %1795
        %v1797 = vsel %vm1025, %v1789, 0.0
        %1798 = vadd.xlane.f32.xlu0 %v1797
        %v1799 = vpop.xlane.xlu0 %1798
        %v1800 = vsel %vm1025, %v1791, 0.0
        %1801 = vadd.xlane.f32.xlu0 %v1800
        %v1802 = vpop.xlane.xlu0 %1801
        %v1803 = vsel %vm1025, %v1793, 0.0
        %1804 = vadd.xlane.f32.xlu0 %v1803
        %v1805 = vpop.xlane.xlu0 %1804
        %v1806 = vrcp.pop %v1796
        %v1807 = vrcp.pop %v1799
        %v1808 = vrcp.pop %v1802
        %v1809 = vrcp.pop %v1805
        %v1810 = vpack.c.bf16 %v1789, %v1787
        %v1811 = vpack.c.bf16 %v1793, %v1791
        %1812 = vrot.lane.b32.xlu0 %v922, 32
        %v1813 = vpop.permute.xlu0 %1812
        %v1816 = vsel %vm1025, %v1810, 0
        %1818 = vmatprep.subr.bf16.mxu0 0
        %1819 = vmatpush1.bf16.msra.mxu0 0
        %1820 = vmatprep.subr.bf16.mxu0 0
        %1821 = vmatpush1.bf16.msra.mxu0 0
        %1822 = vmatprep.subr.bf16.mxu0 0
        %1823 = vmatpush1.bf16.msra.mxu0 0
        %1824 = vmatprep.subr.bf16.mxu0 0
        %1825 = vmatpush1.bf16.msra.mxu0 0
        %1826 = vmatprep.subr.bf16.mxu0 0
        %1827 = vmatpush1.bf16.msra.mxu0 0
        %1828 = vmatprep.subr.bf16.mxu0 0
        %1829 = vmatpush1.bf16.msra.mxu0 0
        %1830 = vmatprep.subr.bf16.mxu0 0
        %1831 = vmatpush1.bf16.msra.mxu0 0
        %1832 = vmatprep.subr.bf16.mxu0 0
        %1833 = vmatpush1.bf16.msra.mxu0 %v1813
        %1834 = vmatprep.subr.bf16.mxu0 0
        %1835 = vmatpush2.bf16.msra.mxu0 0
        %1836 = vmatprep.subr.bf16.mxu0 0
        %1837 = vmatpush2.bf16.msra.mxu0 0
        %1838 = vmatprep.subr.bf16.mxu0 0
        %1839 = vmatpush2.bf16.msra.mxu0 0
        %1840 = vmatprep.subr.bf16.mxu0 0
        %1841 = vmatpush2.bf16.msra.mxu0 0
        %1842 = vmatprep.subr.bf16.mxu0 0
        %1843 = vmatpush2.bf16.msra.mxu0 0
        %1844 = vmatprep.subr.bf16.mxu0 0
        %1845 = vmatpush2.bf16.msra.mxu0 0
        %1846 = vmatprep.subr.bf16.mxu0 0
        %1847 = vmatpush2.bf16.msra.mxu0 0
        %1848 = vmatprep.subr.bf16.mxu0 0
        %1849 = vmatpush2.bf16.msra.mxu0 0
        %1850 = vmatprep.mubr.bf16.mxu0 0
        %1851 = vmatmul.mubr.bf16.gmra.mxu0 %v1816
        %v1852 = vpop.f32.mrf.mxu0
        %v1853 = vadd.f32 0.0, %v1852
        %v1854 = vpop.f32.mrf.mxu0
        %v1855 = vpop.f32.mrf.mxu0
        %v1856 = vadd.f32 0.0, %v1855
        %v1857 = vpop.f32.mrf.mxu0
        %1858 = vdwg.mxu0
        %1859 = vrot.lane.b32.xlu0 %v925, 32
        %v1860 = vpop.permute.xlu0 %1859
        %v1863 = vsel %vm1025, %v1811, 0
        %1865 = vmatprep.subr.bf16.mxu0 0
        %1866 = vmatpush1.bf16.msra.mxu0 0
        %1867 = vmatprep.subr.bf16.mxu0 0
        %1868 = vmatpush1.bf16.msra.mxu0 0
        %1869 = vmatprep.subr.bf16.mxu0 0
        %1870 = vmatpush1.bf16.msra.mxu0 0
        %1871 = vmatprep.subr.bf16.mxu0 0
        %1872 = vmatpush1.bf16.msra.mxu0 0
        %1873 = vmatprep.subr.bf16.mxu0 0
        %1874 = vmatpush1.bf16.msra.mxu0 0
        %1875 = vmatprep.subr.bf16.mxu0 0
        %1876 = vmatpush1.bf16.msra.mxu0 0
        %1877 = vmatprep.subr.bf16.mxu0 0
        %1878 = vmatpush1.bf16.msra.mxu0 0
        %1879 = vmatprep.subr.bf16.mxu0 0
        %1880 = vmatpush1.bf16.msra.mxu0 %v1860
        %1881 = vmatprep.subr.bf16.mxu0 0
        %1882 = vmatpush2.bf16.msra.mxu0 0
        %1883 = vmatprep.subr.bf16.mxu0 0
        %1884 = vmatpush2.bf16.msra.mxu0 0
        %1885 = vmatprep.subr.bf16.mxu0 0
        %1886 = vmatpush2.bf16.msra.mxu0 0
        %1887 = vmatprep.subr.bf16.mxu0 0
        %1888 = vmatpush2.bf16.msra.mxu0 0
        %1889 = vmatprep.subr.bf16.mxu0 0
        %1890 = vmatpush2.bf16.msra.mxu0 0
        %1891 = vmatprep.subr.bf16.mxu0 0
        %1892 = vmatpush2.bf16.msra.mxu0 0
        %1893 = vmatprep.subr.bf16.mxu0 0
        %1894 = vmatpush2.bf16.msra.mxu0 0
        %1895 = vmatprep.subr.bf16.mxu0 0
        %1896 = vmatpush2.bf16.msra.mxu0 0
        %1897 = vmatprep.mubr.bf16.mxu0 0
        %1898 = vmatmul.mubr.bf16.gmra.mxu0 %v1863
        %v1899 = vpop.f32.mrf.mxu0
        %v1900 = vadd.f32 0.0, %v1899
        %v1901 = vpop.f32.mrf.mxu0
        %v1902 = vpop.f32.mrf.mxu0
        %v1903 = vadd.f32 0.0, %v1902
        %v1904 = vpop.f32.mrf.mxu0
        %1905 = vdwg.mxu0
        %v1906 = vmul.f32 %v1853, %v1806
        %v1907 = vmul.f32 %v1856, %v1807
        %v1908 = vmul.f32 %v1900, %v1808
        %v1909 = vmul.f32 %v1903, %v1809
        %v1910 = vpack.c.bf16 %v1907, %v1906
        %v1911 = vpack.c.bf16 %v1909, %v1908
        %1914 = vrot.lane.b32.xlu0 %v1414, 32
        %v1915 = vpop.permute.xlu0 %1914
        %1916 = vrot.lane.b32.xlu0 %v1415, 32
        %v1917 = vpop.permute.xlu0 %1916
        %1920 = vrot.lane.b32.xlu0 %v1662, 64
        %v1921 = vpop.permute.xlu0 %1920
        %1922 = vrot.lane.b32.xlu0 %v1663, 64
        %v1923 = vpop.permute.xlu0 %1922
        %1926 = vrot.lane.b32.xlu0 %v1910, 96
        %v1927 = vpop.permute.xlu0 %1926
        %1928 = vrot.lane.b32.xlu0 %v1911, 96
        %v1929 = vpop.permute.xlu0 %1928
        %v1932 = vsel %vm926, %v1160, %v1915
        %v1935 = vsel %vm926, %v1161, %v1917
        %vm1936 = vcmask 523264
        %v1938 = vsel %vm1936, %v1932, %v1921
        %v1940 = vsel %vm1936, %v1935, %v1923
        %vm1941 = vcmask 785408
        %v1943 = vsel %vm1941, %v1938, %v1927
        %v1946 = vsel %vm1941, %v1940, %v1929
        %v1948 = vld [vmem:[%s485] sm:$0xf]
        %v1949 = vld [vmem:[%s485 + $0x4] sm:$0xf]
        %v1950 = vld [vmem:[%s485 + $0x8] sm:$0xf]
        %v1951 = vld [vmem:[%s485 + $0xc] sm:$0xf]
        %v1952 = vld [vmem:[%s485 + $0x10] sm:$0xf]
        %v1953 = vld [vmem:[%s485 + $0x14] sm:$0xf]
        %v1954 = vld [vmem:[%s485 + $0x18] sm:$0xf]
        %v1955 = vld [vmem:[%s485 + $0x1c] sm:$0xf]
        %v1956 = vld [vmem:[%s485 + $0x20] sm:$0xf]
        %v1957 = vld [vmem:[%s485 + $0x24] sm:$0xf]
        %v1958 = vld [vmem:[%s485 + $0x28] sm:$0xf]
        %v1959 = vld [vmem:[%s485 + $0x2c] sm:$0xf]
        %v1960 = vld [vmem:[%s485 + $0x30] sm:$0xf]
        %v1961 = vld [vmem:[%s485 + $0x34] sm:$0xf]
        %v1962 = vld [vmem:[%s485 + $0x38] sm:$0xf]
        %v1963 = vld [vmem:[%s485 + $0x3c] sm:$0xf]
        %v1980 = vunpack.c.l.b16 %v1948
        %v1981 = vunpack.c.l.b16 %v1949
        %v1982 = vunpack.c.l.b16 %v1950
        %v1983 = vunpack.c.l.b16 %v1951
        %v1984 = vunpack.c.l.b16 %v1952
        %v1985 = vunpack.c.l.b16 %v1953
        %v1986 = vunpack.c.l.b16 %v1954
        %v1987 = vunpack.c.l.b16 %v1955
        %v1988 = vunpack.c.l.b16 %v1956
        %v1989 = vunpack.c.l.b16 %v1957
        %v1990 = vunpack.c.l.b16 %v1958
        %v1991 = vunpack.c.l.b16 %v1959
        %v1992 = vunpack.c.l.b16 %v1960
        %v1993 = vunpack.c.l.b16 %v1961
        %v1994 = vunpack.c.l.b16 %v1962
        %v1995 = vunpack.c.l.b16 %v1963
        %v1996 = vpack.c.b16 %v1981, %v1980
        %v1997 = vpack.c.b16 %v1983, %v1982
        %v1998 = vpack.c.b16 %v1985, %v1984
        %v1999 = vpack.c.b16 %v1987, %v1986
        %v2000 = vpack.c.b16 %v1989, %v1988
        %v2001 = vpack.c.b16 %v1991, %v1990
        %v2002 = vpack.c.b16 %v1993, %v1992
        %v2003 = vpack.c.b16 %v1995, %v1994
        %2012 = vmatprep.subr.bf16.mxu0 0
        %2013 = vmatpush1.bf16.msra.mxu0 %v2003
        %2014 = vmatprep.subr.bf16.mxu0 0
        %2015 = vmatpush1.bf16.msra.mxu0 %v2002
        %2016 = vmatprep.subr.bf16.mxu0 0
        %2017 = vmatpush1.bf16.msra.mxu0 %v2001
        %2018 = vmatprep.subr.bf16.mxu0 0
        %2019 = vmatpush1.bf16.msra.mxu0 %v2000
        %2020 = vmatprep.subr.bf16.mxu0 0
        %2021 = vmatpush1.bf16.msra.mxu0 %v1999
        %2022 = vmatprep.subr.bf16.mxu0 0
        %2023 = vmatpush1.bf16.msra.mxu0 %v1998
        %2024 = vmatprep.subr.bf16.mxu0 0
        %2025 = vmatpush1.bf16.msra.mxu0 %v1997
        %2026 = vmatprep.subr.bf16.mxu0 0
        %2027 = vmatpush1.bf16.msra.mxu0 %v1996
        %2028 = vmatprep.subr.bf16.mxu0 0
        %2029 = vmatpush2.bf16.msra.mxu0 0
        %2030 = vmatprep.subr.bf16.mxu0 0
        %2031 = vmatpush2.bf16.msra.mxu0 0
        %2032 = vmatprep.subr.bf16.mxu0 0
        %2033 = vmatpush2.bf16.msra.mxu0 0
        %2034 = vmatprep.subr.bf16.mxu0 0
        %2035 = vmatpush2.bf16.msra.mxu0 0
        %2036 = vmatprep.subr.bf16.mxu0 0
        %2037 = vmatpush2.bf16.msra.mxu0 0
        %2038 = vmatprep.subr.bf16.mxu0 0
        %2039 = vmatpush2.bf16.msra.mxu0 0
        %2040 = vmatprep.subr.bf16.mxu0 0
        %2041 = vmatpush2.bf16.msra.mxu0 0
        %2042 = vmatprep.subr.bf16.mxu0 0
        %2043 = vmatpush2.bf16.msra.mxu0 0
        %2044 = vmatprep.mubr.bf16.mxu0 0
        %2045 = vmatmul.mubr.bf16.gmra.mxu0 %v1943
        %v2046 = vpop.f32.mrf.mxu0
        %v2047 = vadd.f32 0.0, %v2046
        %v2048 = vpop.f32.mrf.mxu0
        %v2049 = vpop.f32.mrf.mxu0
        %v2050 = vadd.f32 0.0, %v2049
        %v2051 = vpop.f32.mrf.mxu0
        %2052 = vmatprep.mubr.bf16.mxu0 0
        %2053 = vmatmul.mubr.bf16.gmra.mxu0 %v1946
        %v2054 = vpop.f32.mrf.mxu0
        %v2055 = vadd.f32 0.0, %v2054
        %v2056 = vpop.f32.mrf.mxu0
        %v2057 = vpop.f32.mrf.mxu0
        %v2058 = vadd.f32 0.0, %v2057
        %v2059 = vpop.f32.mrf.mxu0
        %2060 = vdwg.mxu0
        %v2061 = vadd.f32 %v585, %v2047
        %v2062 = vadd.f32 %v586, %v2050
        %v2063 = vadd.f32 %v587, %v2055
        %v2064 = vadd.f32 %v588, %v2058
        %v2065 = vld [vmem:[%s567] sm:$0x1]
        %v2066 = vld [vmem:[%s570] sm:$0x1]
        %2067 = vadd.xlane.f32.xlu0 %v2061
        %v2068 = vpop.xlane.xlu0 %2067
        %2069 = vadd.xlane.f32.xlu0 %v2062
        %v2070 = vpop.xlane.xlu0 %2069
        %2071 = vadd.xlane.f32.xlu0 %v2063
        %v2072 = vpop.xlane.xlu0 %2071
        %2073 = vadd.xlane.f32.xlu0 %v2064
        %v2074 = vpop.xlane.xlu0 %2073
        %v2075 = vmul.f32 %v2068, %v599
        %v2076 = vmul.f32 %v2070, %v599
        %v2077 = vmul.f32 %v2072, %v599
        %v2078 = vmul.f32 %v2074, %v599
        %v2079 = vsub.f32 %v2061, %v2075
        %v2080 = vsub.f32 %v2062, %v2076
        %v2081 = vsub.f32 %v2063, %v2077
        %v2082 = vsub.f32 %v2064, %v2078
        %v2083 = vmul.f32 %v2079, %v2079
        %v2084 = vmul.f32 %v2080, %v2080
        %v2085 = vmul.f32 %v2081, %v2081
        %v2086 = vmul.f32 %v2082, %v2082
        %2087 = vadd.xlane.f32.xlu0 %v2083
        %v2088 = vpop.xlane.xlu0 %2087
        %2089 = vadd.xlane.f32.xlu0 %v2084
        %v2090 = vpop.xlane.xlu0 %2089
        %2091 = vadd.xlane.f32.xlu0 %v2085
        %v2092 = vpop.xlane.xlu0 %2091
        %2093 = vadd.xlane.f32.xlu0 %v2086
        %v2094 = vpop.xlane.xlu0 %2093
        %v2095 = vmul.f32 %v2088, %v599
        %v2096 = vmul.f32 %v2090, %v599
        %v2097 = vmul.f32 %v2092, %v599
        %v2098 = vmul.f32 %v2094, %v599
        %v2099 = vadd.f32 %v2095, 1e-06
        %v2100 = vadd.f32 %v2096, 1e-06
        %v2101 = vadd.f32 %v2097, 1e-06
        %v2102 = vadd.f32 %v2098, 1e-06
        %v2103 = vrsqrt.pop %v2099
        %v2104 = vrsqrt.pop %v2100
        %v2105 = vrsqrt.pop %v2101
        %v2106 = vrsqrt.pop %v2102
        %v2107 = vmul.f32 %v2079, %v2103
        %v2108 = vmul.f32 %v2080, %v2104
        %v2109 = vmul.f32 %v2081, %v2105
        %v2110 = vmul.f32 %v2082, %v2106
        %v2112 = vlaneseq
        %v2113 = vshrl.u32 %v2112, 7
        %v2114 = vsub.s32 0, %v2113
        %v2115 = vrot.slane %v2065, %v2114
        %v2117 = vmul.f32 %v2107, %v2115
        %v2118 = vmul.f32 %v2108, %v2115
        %v2119 = vmul.f32 %v2109, %v2115
        %v2120 = vmul.f32 %v2110, %v2115
        %v2122 = vlaneseq
        %v2123 = vshrl.u32 %v2122, 7
        %v2124 = vsub.s32 0, %v2123
        %v2125 = vrot.slane %v2066, %v2124
        %v2127 = vadd.f32 %v2117, %v2125
        %v2128 = vadd.f32 %v2118, %v2125
        %v2129 = vadd.f32 %v2119, %v2125
        %v2130 = vadd.f32 %v2120, %v2125
        %v2131 = vld [vmem:[%s494] sm:$0xff]
        %v2132 = vld [vmem:[%s494 + $0x8] sm:$0xff]
        %v2133 = vld [vmem:[%s494 + $0x10] sm:$0xff]
        %v2134 = vld [vmem:[%s494 + $0x18] sm:$0xff]
        %v2135 = vld [vmem:[%s494 + $0x20] sm:$0xff]
        %v2136 = vld [vmem:[%s494 + $0x28] sm:$0xff]
        %v2137 = vld [vmem:[%s494 + $0x30] sm:$0xff]
        %v2138 = vld [vmem:[%s494 + $0x38] sm:$0xff]
        %v2139 = vld [vmem:[%s494 + $0x40] sm:$0xff]
        %v2140 = vld [vmem:[%s494 + $0x48] sm:$0xff]
        %v2141 = vld [vmem:[%s494 + $0x50] sm:$0xff]
        %v2142 = vld [vmem:[%s494 + $0x58] sm:$0xff]
        %v2143 = vld [vmem:[%s494 + $0x60] sm:$0xff]
        %v2144 = vld [vmem:[%s494 + $0x68] sm:$0xff]
        %v2145 = vld [vmem:[%s494 + $0x70] sm:$0xff]
        %v2146 = vld [vmem:[%s494 + $0x78] sm:$0xff]
        %v2147 = vld [vmem:[%s494 + $0x80] sm:$0xff]
        %v2148 = vld [vmem:[%s494 + $0x88] sm:$0xff]
        %v2149 = vld [vmem:[%s494 + $0x90] sm:$0xff]
        %v2150 = vld [vmem:[%s494 + $0x98] sm:$0xff]
        %v2151 = vld [vmem:[%s494 + $0xa0] sm:$0xff]
        %v2152 = vld [vmem:[%s494 + $0xa8] sm:$0xff]
        %v2153 = vld [vmem:[%s494 + $0xb0] sm:$0xff]
        %v2154 = vld [vmem:[%s494 + $0xb8] sm:$0xff]
        %v2155 = vld [vmem:[%s494 + $0xc0] sm:$0xff]
        %v2156 = vld [vmem:[%s494 + $0xc8] sm:$0xff]
        %v2157 = vld [vmem:[%s494 + $0xd0] sm:$0xff]
        %v2158 = vld [vmem:[%s494 + $0xd8] sm:$0xff]
        %v2159 = vld [vmem:[%s494 + $0xe0] sm:$0xff]
        %v2160 = vld [vmem:[%s494 + $0xe8] sm:$0xff]
        %v2161 = vld [vmem:[%s494 + $0xf0] sm:$0xff]
        %v2162 = vld [vmem:[%s494 + $0xf8] sm:$0xff]
        %v2163 = vpack.c.bf16 %v2128, %v2127
        %v2164 = vpack.c.bf16 %v2130, %v2129
        %v2197 = vunpack.c.l.b16 %v2131
        %v2198 = vunpack.c.h.b16 %v2131
        %v2199 = vunpack.c.l.b16 %v2132
        %v2200 = vunpack.c.h.b16 %v2132
        %v2201 = vunpack.c.l.b16 %v2133
        %v2202 = vunpack.c.h.b16 %v2133
        %v2203 = vunpack.c.l.b16 %v2134
        %v2204 = vunpack.c.h.b16 %v2134
        %v2205 = vunpack.c.l.b16 %v2135
        %v2206 = vunpack.c.h.b16 %v2135
        %v2207 = vunpack.c.l.b16 %v2136
        %v2208 = vunpack.c.h.b16 %v2136
        %v2209 = vunpack.c.l.b16 %v2137
        %v2210 = vunpack.c.h.b16 %v2137
        %v2211 = vunpack.c.l.b16 %v2138
        %v2212 = vunpack.c.h.b16 %v2138
        %v2213 = vunpack.c.l.b16 %v2139
        %v2214 = vunpack.c.h.b16 %v2139
        %v2215 = vunpack.c.l.b16 %v2140
        %v2216 = vunpack.c.h.b16 %v2140
        %v2217 = vunpack.c.l.b16 %v2141
        %v2218 = vunpack.c.h.b16 %v2141
        %v2219 = vunpack.c.l.b16 %v2142
        %v2220 = vunpack.c.h.b16 %v2142
        %v2221 = vunpack.c.l.b16 %v2143
        %v2222 = vunpack.c.h.b16 %v2143
        %v2223 = vunpack.c.l.b16 %v2144
        %v2224 = vunpack.c.h.b16 %v2144
        %v2225 = vunpack.c.l.b16 %v2145
        %v2226 = vunpack.c.h.b16 %v2145
        %v2227 = vunpack.c.l.b16 %v2146
        %v2228 = vunpack.c.h.b16 %v2146
        %v2229 = vunpack.c.l.b16 %v2147
        %v2230 = vunpack.c.h.b16 %v2147
        %v2231 = vunpack.c.l.b16 %v2148
        %v2232 = vunpack.c.h.b16 %v2148
        %v2233 = vunpack.c.l.b16 %v2149
        %v2234 = vunpack.c.h.b16 %v2149
        %v2235 = vunpack.c.l.b16 %v2150
        %v2236 = vunpack.c.h.b16 %v2150
        %v2237 = vunpack.c.l.b16 %v2151
        %v2238 = vunpack.c.h.b16 %v2151
        %v2239 = vunpack.c.l.b16 %v2152
        %v2240 = vunpack.c.h.b16 %v2152
        %v2241 = vunpack.c.l.b16 %v2153
        %v2242 = vunpack.c.h.b16 %v2153
        %v2243 = vunpack.c.l.b16 %v2154
        %v2244 = vunpack.c.h.b16 %v2154
        %v2245 = vunpack.c.l.b16 %v2155
        %v2246 = vunpack.c.h.b16 %v2155
        %v2247 = vunpack.c.l.b16 %v2156
        %v2248 = vunpack.c.h.b16 %v2156
        %v2249 = vunpack.c.l.b16 %v2157
        %v2250 = vunpack.c.h.b16 %v2157
        %v2251 = vunpack.c.l.b16 %v2158
        %v2252 = vunpack.c.h.b16 %v2158
        %v2253 = vunpack.c.l.b16 %v2159
        %v2254 = vunpack.c.h.b16 %v2159
        %v2255 = vunpack.c.l.b16 %v2160
        %v2256 = vunpack.c.h.b16 %v2160
        %v2257 = vunpack.c.l.b16 %v2161
        %v2258 = vunpack.c.h.b16 %v2161
        %v2259 = vunpack.c.l.b16 %v2162
        %v2260 = vunpack.c.h.b16 %v2162
        %v2261 = vpack.c.b16 %v2201, %v2197
        %v2262 = vpack.c.b16 %v2202, %v2198
        %v2263 = vpack.c.b16 %v2203, %v2199
        %v2264 = vpack.c.b16 %v2204, %v2200
        %v2265 = vpack.c.b16 %v2209, %v2205
        %v2266 = vpack.c.b16 %v2210, %v2206
        %v2267 = vpack.c.b16 %v2211, %v2207
        %v2268 = vpack.c.b16 %v2212, %v2208
        %v2269 = vpack.c.b16 %v2217, %v2213
        %v2270 = vpack.c.b16 %v2218, %v2214
        %v2271 = vpack.c.b16 %v2219, %v2215
        %v2272 = vpack.c.b16 %v2220, %v2216
        %v2273 = vpack.c.b16 %v2225, %v2221
        %v2274 = vpack.c.b16 %v2226, %v2222
        %v2275 = vpack.c.b16 %v2227, %v2223
        %v2276 = vpack.c.b16 %v2228, %v2224
        %v2277 = vpack.c.b16 %v2233, %v2229
        %v2278 = vpack.c.b16 %v2234, %v2230
        %v2279 = vpack.c.b16 %v2235, %v2231
        %v2280 = vpack.c.b16 %v2236, %v2232
        %v2281 = vpack.c.b16 %v2241, %v2237
        %v2282 = vpack.c.b16 %v2242, %v2238
        %v2283 = vpack.c.b16 %v2243, %v2239
        %v2284 = vpack.c.b16 %v2244, %v2240
        %v2285 = vpack.c.b16 %v2249, %v2245
        %v2286 = vpack.c.b16 %v2250, %v2246
        %v2287 = vpack.c.b16 %v2251, %v2247
        %v2288 = vpack.c.b16 %v2252, %v2248
        %v2289 = vpack.c.b16 %v2257, %v2253
        %v2290 = vpack.c.b16 %v2258, %v2254
        %v2291 = vpack.c.b16 %v2259, %v2255
        %v2292 = vpack.c.b16 %v2260, %v2256
        %2325 = vmatprep.subr.bf16.mxu0 %v2290
        %2326 = vmatpush1.bf16.msra.mxu0 %v2289
        %2327 = vmatprep.subr.bf16.mxu0 %v2286
        %2328 = vmatpush1.bf16.msra.mxu0 %v2285
        %2329 = vmatprep.subr.bf16.mxu0 %v2282
        %2330 = vmatpush1.bf16.msra.mxu0 %v2281
        %2331 = vmatprep.subr.bf16.mxu0 %v2278
        %2332 = vmatpush1.bf16.msra.mxu0 %v2277
        %2333 = vmatprep.subr.bf16.mxu0 %v2274
        %2334 = vmatpush1.bf16.msra.mxu0 %v2273
        %2335 = vmatprep.subr.bf16.mxu0 %v2270
        %2336 = vmatpush1.bf16.msra.mxu0 %v2269
        %2337 = vmatprep.subr.bf16.mxu0 %v2266
        %2338 = vmatpush1.bf16.msra.mxu0 %v2265
        %2339 = vmatprep.subr.bf16.mxu0 %v2262
        %2340 = vmatpush1.bf16.msra.mxu0 %v2261
        %2341 = vmatprep.subr.bf16.mxu0 0
        %2342 = vmatpush2.bf16.msra.mxu0 0
        %2343 = vmatprep.subr.bf16.mxu0 0
        %2344 = vmatpush2.bf16.msra.mxu0 0
        %2345 = vmatprep.subr.bf16.mxu0 0
        %2346 = vmatpush2.bf16.msra.mxu0 0
        %2347 = vmatprep.subr.bf16.mxu0 0
        %2348 = vmatpush2.bf16.msra.mxu0 0
        %2349 = vmatprep.subr.bf16.mxu0 0
        %2350 = vmatpush2.bf16.msra.mxu0 0
        %2351 = vmatprep.subr.bf16.mxu0 0
        %2352 = vmatpush2.bf16.msra.mxu0 0
        %2353 = vmatprep.subr.bf16.mxu0 0
        %2354 = vmatpush2.bf16.msra.mxu0 0
        %2355 = vmatprep.subr.bf16.mxu0 0
        %2356 = vmatpush2.bf16.msra.mxu0 0
        %2357 = vmatprep.mubr.bf16.mxu0 0
        %2358 = vmatmul.mubr.bf16.gmra.mxu0 %v2163
        %v2359 = vpop.f32.mrf.mxu0
        %v2360 = vadd.f32 0.0, %v2359
        %v2361 = vpop.f32.mrf.mxu0
        %v2362 = vadd.f32 0.0, %v2361
        %v2363 = vpop.f32.mrf.mxu0
        %v2364 = vadd.f32 0.0, %v2363
        %v2365 = vpop.f32.mrf.mxu0
        %v2366 = vadd.f32 0.0, %v2365
        %2367 = vmatprep.mubr.bf16.mxu0 0
        %2368 = vmatmul.mubr.bf16.gmra.mxu0 %v2164
        %v2369 = vpop.f32.mrf.mxu0
        %v2370 = vadd.f32 0.0, %v2369
        %v2371 = vpop.f32.mrf.mxu0
        %v2372 = vadd.f32 0.0, %v2371
        %v2373 = vpop.f32.mrf.mxu0
        %v2374 = vadd.f32 0.0, %v2373
        %v2375 = vpop.f32.mrf.mxu0
        %v2376 = vadd.f32 0.0, %v2375
        %2377 = vdwg.mxu0
        %2378 = vmatprep.subr.bf16.mxu0 %v2292
        %2379 = vmatpush1.bf16.msra.mxu0 %v2291
        %2380 = vmatprep.subr.bf16.mxu0 %v2288
        %2381 = vmatpush1.bf16.msra.mxu0 %v2287
        %2382 = vmatprep.subr.bf16.mxu0 %v2284
        %2383 = vmatpush1.bf16.msra.mxu0 %v2283
        %2384 = vmatprep.subr.bf16.mxu0 %v2280
        %2385 = vmatpush1.bf16.msra.mxu0 %v2279
        %2386 = vmatprep.subr.bf16.mxu0 %v2276
        %2387 = vmatpush1.bf16.msra.mxu0 %v2275
        %2388 = vmatprep.subr.bf16.mxu0 %v2272
        %2389 = vmatpush1.bf16.msra.mxu0 %v2271
        %2390 = vmatprep.subr.bf16.mxu0 %v2268
        %2391 = vmatpush1.bf16.msra.mxu0 %v2267
        %2392 = vmatprep.subr.bf16.mxu0 %v2264
        %2393 = vmatpush1.bf16.msra.mxu0 %v2263
        %2394 = vmatprep.subr.bf16.mxu0 0
        %2395 = vmatpush2.bf16.msra.mxu0 0
        %2396 = vmatprep.subr.bf16.mxu0 0
        %2397 = vmatpush2.bf16.msra.mxu0 0
        %2398 = vmatprep.subr.bf16.mxu0 0
        %2399 = vmatpush2.bf16.msra.mxu0 0
        %2400 = vmatprep.subr.bf16.mxu0 0
        %2401 = vmatpush2.bf16.msra.mxu0 0
        %2402 = vmatprep.subr.bf16.mxu0 0
        %2403 = vmatpush2.bf16.msra.mxu0 0
        %2404 = vmatprep.subr.bf16.mxu0 0
        %2405 = vmatpush2.bf16.msra.mxu0 0
        %2406 = vmatprep.subr.bf16.mxu0 0
        %2407 = vmatpush2.bf16.msra.mxu0 0
        %2408 = vmatprep.subr.bf16.mxu0 0
        %2409 = vmatpush2.bf16.msra.mxu0 0
        %2410 = vmatprep.mubr.bf16.mxu0 0
        %2411 = vmatmul.mubr.bf16.gmra.mxu0 %v2163
        %v2412 = vpop.f32.mrf.mxu0
        %v2413 = vadd.f32 0.0, %v2412
        %v2414 = vpop.f32.mrf.mxu0
        %v2415 = vadd.f32 0.0, %v2414
        %v2416 = vpop.f32.mrf.mxu0
        %v2417 = vadd.f32 0.0, %v2416
        %v2418 = vpop.f32.mrf.mxu0
        %v2419 = vadd.f32 0.0, %v2418
        %2420 = vmatprep.mubr.bf16.mxu0 0
        %2421 = vmatmul.mubr.bf16.gmra.mxu0 %v2164
        %v2422 = vpop.f32.mrf.mxu0
        %v2423 = vadd.f32 0.0, %v2422
        %v2424 = vpop.f32.mrf.mxu0
        %v2425 = vadd.f32 0.0, %v2424
        %v2426 = vpop.f32.mrf.mxu0
        %v2427 = vadd.f32 0.0, %v2426
        %v2428 = vpop.f32.mrf.mxu0
        %v2429 = vadd.f32 0.0, %v2428
        %2430 = vdwg.mxu0
        %v2431 = vmul.f32 %v2360, 0.1
        %v2432 = vmul.f32 %v2362, 0.1
        %v2433 = vmul.f32 %v2413, 0.1
        %v2434 = vmul.f32 %v2415, 0.1
        %v2435 = vmul.f32 %v2364, 0.1
        %v2436 = vmul.f32 %v2366, 0.1
        %v2437 = vmul.f32 %v2417, 0.1
        %v2438 = vmul.f32 %v2419, 0.1
        %v2439 = vmul.f32 %v2370, 0.1
        %v2440 = vmul.f32 %v2372, 0.1
        %v2441 = vmul.f32 %v2423, 0.1
        %v2442 = vmul.f32 %v2425, 0.1
        %v2443 = vmul.f32 %v2374, 0.1
        %v2444 = vmul.f32 %v2376, 0.1
        %v2445 = vmul.f32 %v2427, 0.1
        %v2446 = vmul.f32 %v2429, 0.1
        %v2447 = vsub.f32 %v2431, 0.01
        %v2448 = vsub.f32 %v2432, 0.01
        %v2449 = vsub.f32 %v2433, 0.01
        %v2450 = vsub.f32 %v2434, 0.01
        %v2451 = vsub.f32 %v2435, 0.01
        %v2452 = vsub.f32 %v2436, 0.01
        %v2453 = vsub.f32 %v2437, 0.01
        %v2454 = vsub.f32 %v2438, 0.01
        %v2455 = vsub.f32 %v2439, 0.01
        %v2456 = vsub.f32 %v2440, 0.01
        %v2457 = vsub.f32 %v2441, 0.01
        %v2458 = vsub.f32 %v2442, 0.01
        %v2459 = vsub.f32 %v2443, 0.01
        %v2460 = vsub.f32 %v2444, 0.01
        %v2461 = vsub.f32 %v2445, 0.01
        %v2462 = vsub.f32 %v2446, 0.01
        %v2463 = vmax.f32 %v2447, 0.0
        %v2464 = vmax.f32 %v2448, 0.0
        %v2465 = vmax.f32 %v2449, 0.0
        %v2466 = vmax.f32 %v2450, 0.0
        %v2467 = vmax.f32 %v2451, 0.0
        %v2468 = vmax.f32 %v2452, 0.0
        %v2469 = vmax.f32 %v2453, 0.0
        %v2470 = vmax.f32 %v2454, 0.0
        %v2471 = vmax.f32 %v2455, 0.0
        %v2472 = vmax.f32 %v2456, 0.0
        %v2473 = vmax.f32 %v2457, 0.0
        %v2474 = vmax.f32 %v2458, 0.0
        %v2475 = vmax.f32 %v2459, 0.0
        %v2476 = vmax.f32 %v2460, 0.0
        %v2477 = vmax.f32 %v2461, 0.0
        %v2478 = vmax.f32 %v2462, 0.0
        %v2479 = vpack.c.bf16 %v2467, %v2463
        %v2480 = vpack.c.bf16 %v2468, %v2464
        %v2481 = vpack.c.bf16 %v2469, %v2465
        %v2482 = vpack.c.bf16 %v2470, %v2466
        %v2483 = vpack.c.bf16 %v2475, %v2471
        %v2484 = vpack.c.bf16 %v2476, %v2472
        %v2485 = vpack.c.bf16 %v2477, %v2473
        %v2486 = vpack.c.bf16 %v2478, %v2474
        %2487 = vmatprep.subr.bf16.mxu0 %v2290
        %2488 = vmatpush1.bf16.xpose.msra.mxu0 %v2289
        %2489 = vmatprep.subr.bf16.mxu0 %v2286
        %2490 = vmatpush1.bf16.xpose.msra.mxu0 %v2285
        %2491 = vmatprep.subr.bf16.mxu0 %v2282
        %2492 = vmatpush1.bf16.xpose.msra.mxu0 %v2281
        %2493 = vmatprep.subr.bf16.mxu0 %v2278
        %2494 = vmatpush1.bf16.xpose.msra.mxu0 %v2277
        %2495 = vmatprep.subr.bf16.mxu0 %v2274
        %2496 = vmatpush1.bf16.xpose.msra.mxu0 %v2273
        %2497 = vmatprep.subr.bf16.mxu0 %v2270
        %2498 = vmatpush1.bf16.xpose.msra.mxu0 %v2269
        %2499 = vmatprep.subr.bf16.mxu0 %v2266
        %2500 = vmatpush1.bf16.xpose.msra.mxu0 %v2265
        %2501 = vmatprep.subr.bf16.mxu0 %v2262
        %2502 = vmatpush1.bf16.xpose.msra.mxu0 %v2261
        %2503 = vmatprep.subr.bf16.mxu0 0
        %2504 = vmatpush2.bf16.xpose.msra.mxu0 0
        %2505 = vmatprep.subr.bf16.mxu0 0
        %2506 = vmatpush2.bf16.xpose.msra.mxu0 0
        %2507 = vmatprep.subr.bf16.mxu0 0
        %2508 = vmatpush2.bf16.xpose.msra.mxu0 0
        %2509 = vmatprep.subr.bf16.mxu0 0
        %2510 = vmatpush2.bf16.xpose.msra.mxu0 0
        %2511 = vmatprep.subr.bf16.mxu0 0
        %2512 = vmatpush2.bf16.xpose.msra.mxu0 0
        %2513 = vmatprep.subr.bf16.mxu0 0
        %2514 = vmatpush2.bf16.xpose.msra.mxu0 0
        %2515 = vmatprep.subr.bf16.mxu0 0
        %2516 = vmatpush2.bf16.xpose.msra.mxu0 0
        %2517 = vmatprep.subr.bf16.mxu0 0
        %2518 = vmatpush2.bf16.xpose.msra.mxu0 0
        %2519 = vmatprep.mubr.bf16.mxu0 %v2480
        %2520 = vmatmul.mubr.bf16.gmra.mxu0 %v2479
        %v2521 = vpop.f32.mrf.mxu0
        %v2522 = vadd.f32 0.0, %v2521
        %v2523 = vpop.f32.mrf.mxu0
        %v2524 = vpop.f32.mrf.mxu0
        %v2525 = vadd.f32 0.0, %v2524
        %v2526 = vpop.f32.mrf.mxu0
        %2527 = vmatprep.mubr.bf16.mxu0 %v2484
        %2528 = vmatmul.mubr.bf16.gmra.mxu0 %v2483
        %v2529 = vpop.f32.mrf.mxu0
        %v2530 = vadd.f32 0.0, %v2529
        %v2531 = vpop.f32.mrf.mxu0
        %v2532 = vpop.f32.mrf.mxu0
        %v2533 = vadd.f32 0.0, %v2532
        %v2534 = vpop.f32.mrf.mxu0
        %2535 = vdwg.mxu0
        %2536 = vmatprep.subr.bf16.mxu0 %v2292
        %2537 = vmatpush1.bf16.xpose.msra.mxu0 %v2291
        %2538 = vmatprep.subr.bf16.mxu0 %v2288
        %2539 = vmatpush1.bf16.xpose.msra.mxu0 %v2287
        %2540 = vmatprep.subr.bf16.mxu0 %v2284
        %2541 = vmatpush1.bf16.xpose.msra.mxu0 %v2283
        %2542 = vmatprep.subr.bf16.mxu0 %v2280
        %2543 = vmatpush1.bf16.xpose.msra.mxu0 %v2279
        %2544 = vmatprep.subr.bf16.mxu0 %v2276
        %2545 = vmatpush1.bf16.xpose.msra.mxu0 %v2275
        %2546 = vmatprep.subr.bf16.mxu0 %v2272
        %2547 = vmatpush1.bf16.xpose.msra.mxu0 %v2271
        %2548 = vmatprep.subr.bf16.mxu0 %v2268
        %2549 = vmatpush1.bf16.xpose.msra.mxu0 %v2267
        %2550 = vmatprep.subr.bf16.mxu0 %v2264
        %2551 = vmatpush1.bf16.xpose.msra.mxu0 %v2263
        %2552 = vmatprep.subr.bf16.mxu0 0
        %2553 = vmatpush2.bf16.xpose.msra.mxu0 0
        %2554 = vmatprep.subr.bf16.mxu0 0
        %2555 = vmatpush2.bf16.xpose.msra.mxu0 0
        %2556 = vmatprep.subr.bf16.mxu0 0
        %2557 = vmatpush2.bf16.xpose.msra.mxu0 0
        %2558 = vmatprep.subr.bf16.mxu0 0
        %2559 = vmatpush2.bf16.xpose.msra.mxu0 0
        %2560 = vmatprep.subr.bf16.mxu0 0
        %2561 = vmatpush2.bf16.xpose.msra.mxu0 0
        %2562 = vmatprep.subr.bf16.mxu0 0
        %2563 = vmatpush2.bf16.xpose.msra.mxu0 0
        %2564 = vmatprep.subr.bf16.mxu0 0
        %2565 = vmatpush2.bf16.xpose.msra.mxu0 0
        %2566 = vmatprep.subr.bf16.mxu0 0
        %2567 = vmatpush2.bf16.xpose.msra.mxu0 0
        %2568 = vmatprep.mubr.bf16.mxu0 %v2482
        %2569 = vmatmul.mubr.bf16.gmra.mxu0 %v2481
        %v2570 = vpop.f32.mrf.mxu0
        %v2571 = vadd.f32 %v2522, %v2570
        %v2572 = vpop.f32.mrf.mxu0
        %v2573 = vpop.f32.mrf.mxu0
        %v2574 = vadd.f32 %v2525, %v2573
        %v2575 = vpop.f32.mrf.mxu0
        %2576 = vmatprep.mubr.bf16.mxu0 %v2486
        %2577 = vmatmul.mubr.bf16.gmra.mxu0 %v2485
        %v2578 = vpop.f32.mrf.mxu0
        %v2579 = vadd.f32 %v2530, %v2578
        %v2580 = vpop.f32.mrf.mxu0
        %v2581 = vpop.f32.mrf.mxu0
        %v2582 = vadd.f32 %v2533, %v2581
        %v2583 = vpop.f32.mrf.mxu0
        %2584 = vdwg.mxu0
        %v2585 = vsub.f32 %v2571, %v2127
        %v2586 = vsub.f32 %v2574, %v2128
        %v2587 = vsub.f32 %v2579, %v2129
        %v2588 = vsub.f32 %v2582, %v2130
        %v2589 = vpack.c.bf16 %v2586, %v2585
        %v2590 = vpack.c.bf16 %v2588, %v2587
        %2591 = vmatprep.subr.bf16.mxu0 %v2290
        %2592 = vmatpush1.bf16.msra.mxu0 %v2289
        %2593 = vmatprep.subr.bf16.mxu0 %v2286
        %2594 = vmatpush1.bf16.msra.mxu0 %v2285
        %2595 = vmatprep.subr.bf16.mxu0 %v2282
        %2596 = vmatpush1.bf16.msra.mxu0 %v2281
        %2597 = vmatprep.subr.bf16.mxu0 %v2278
        %2598 = vmatpush1.bf16.msra.mxu0 %v2277
        %2599 = vmatprep.subr.bf16.mxu0 %v2274
        %2600 = vmatpush1.bf16.msra.mxu0 %v2273
        %2601 = vmatprep.subr.bf16.mxu0 %v2270
        %2602 = vmatpush1.bf16.msra.mxu0 %v2269
        %2603 = vmatprep.subr.bf16.mxu0 %v2266
        %2604 = vmatpush1.bf16.msra.mxu0 %v2265
        %2605 = vmatprep.subr.bf16.mxu0 %v2262
        %2606 = vmatpush1.bf16.msra.mxu0 %v2261
        %2607 = vmatprep.subr.bf16.mxu0 0
        %2608 = vmatpush2.bf16.msra.mxu0 0
        %2609 = vmatprep.subr.bf16.mxu0 0
        %2610 = vmatpush2.bf16.msra.mxu0 0
        %2611 = vmatprep.subr.bf16.mxu0 0
        %2612 = vmatpush2.bf16.msra.mxu0 0
        %2613 = vmatprep.subr.bf16.mxu0 0
        %2614 = vmatpush2.bf16.msra.mxu0 0
        %2615 = vmatprep.subr.bf16.mxu0 0
        %2616 = vmatpush2.bf16.msra.mxu0 0
        %2617 = vmatprep.subr.bf16.mxu0 0
        %2618 = vmatpush2.bf16.msra.mxu0 0
        %2619 = vmatprep.subr.bf16.mxu0 0
        %2620 = vmatpush2.bf16.msra.mxu0 0
        %2621 = vmatprep.subr.bf16.mxu0 0
        %2622 = vmatpush2.bf16.msra.mxu0 0
        %2623 = vmatprep.mubr.bf16.mxu0 0
        %2624 = vmatmul.mubr.bf16.gmra.mxu0 %v2589
        %v2625 = vpop.f32.mrf.mxu0
        %v2626 = vadd.f32 0.0, %v2625
        %v2627 = vpop.f32.mrf.mxu0
        %v2628 = vadd.f32 0.0, %v2627
        %v2629 = vpop.f32.mrf.mxu0
        %v2630 = vadd.f32 0.0, %v2629
        %v2631 = vpop.f32.mrf.mxu0
        %v2632 = vadd.f32 0.0, %v2631
        %2633 = vmatprep.mubr.bf16.mxu0 0
        %2634 = vmatmul.mubr.bf16.gmra.mxu0 %v2590
        %v2635 = vpop.f32.mrf.mxu0
        %v2636 = vadd.f32 0.0, %v2635
        %v2637 = vpop.f32.mrf.mxu0
        %v2638 = vadd.f32 0.0, %v2637
        %v2639 = vpop.f32.mrf.mxu0
        %v2640 = vadd.f32 0.0, %v2639
        %v2641 = vpop.f32.mrf.mxu0
        %v2642 = vadd.f32 0.0, %v2641
        %2643 = vdwg.mxu0
        %2644 = vmatprep.subr.bf16.mxu0 %v2292
        %2645 = vmatpush1.bf16.msra.mxu0 %v2291
        %2646 = vmatprep.subr.bf16.mxu0 %v2288
        %2647 = vmatpush1.bf16.msra.mxu0 %v2287
        %2648 = vmatprep.subr.bf16.mxu0 %v2284
        %2649 = vmatpush1.bf16.msra.mxu0 %v2283
        %2650 = vmatprep.subr.bf16.mxu0 %v2280
        %2651 = vmatpush1.bf16.msra.mxu0 %v2279
        %2652 = vmatprep.subr.bf16.mxu0 %v2276
        %2653 = vmatpush1.bf16.msra.mxu0 %v2275
        %2654 = vmatprep.subr.bf16.mxu0 %v2272
        %2655 = vmatpush1.bf16.msra.mxu0 %v2271
        %2656 = vmatprep.subr.bf16.mxu0 %v2268
        %2657 = vmatpush1.bf16.msra.mxu0 %v2267
        %2658 = vmatprep.subr.bf16.mxu0 %v2264
        %2659 = vmatpush1.bf16.msra.mxu0 %v2263
        %2660 = vmatprep.subr.bf16.mxu0 0
        %2661 = vmatpush2.bf16.msra.mxu0 0
        %2662 = vmatprep.subr.bf16.mxu0 0
        %2663 = vmatpush2.bf16.msra.mxu0 0
        %2664 = vmatprep.subr.bf16.mxu0 0
        %2665 = vmatpush2.bf16.msra.mxu0 0
        %2666 = vmatprep.subr.bf16.mxu0 0
        %2667 = vmatpush2.bf16.msra.mxu0 0
        %2668 = vmatprep.subr.bf16.mxu0 0
        %2669 = vmatpush2.bf16.msra.mxu0 0
        %2670 = vmatprep.subr.bf16.mxu0 0
        %2671 = vmatpush2.bf16.msra.mxu0 0
        %2672 = vmatprep.subr.bf16.mxu0 0
        %2673 = vmatpush2.bf16.msra.mxu0 0
        %2674 = vmatprep.subr.bf16.mxu0 0
        %2675 = vmatpush2.bf16.msra.mxu0 0
        %2676 = vmatprep.mubr.bf16.mxu0 0
        %2677 = vmatmul.mubr.bf16.gmra.mxu0 %v2589
        %v2678 = vpop.f32.mrf.mxu0
        %v2679 = vadd.f32 0.0, %v2678
        %v2680 = vpop.f32.mrf.mxu0
        %v2681 = vadd.f32 0.0, %v2680
        %v2682 = vpop.f32.mrf.mxu0
        %v2683 = vadd.f32 0.0, %v2682
        %v2684 = vpop.f32.mrf.mxu0
        %v2685 = vadd.f32 0.0, %v2684
        %2686 = vmatprep.mubr.bf16.mxu0 0
        %2687 = vmatmul.mubr.bf16.gmra.mxu0 %v2590
        %v2688 = vpop.f32.mrf.mxu0
        %v2689 = vadd.f32 0.0, %v2688
        %v2690 = vpop.f32.mrf.mxu0
        %v2691 = vadd.f32 0.0, %v2690
        %v2692 = vpop.f32.mrf.mxu0
        %v2693 = vadd.f32 0.0, %v2692
        %v2694 = vpop.f32.mrf.mxu0
        %v2695 = vadd.f32 0.0, %v2694
        %2696 = vdwg.mxu0
        %v2697 = vmul.f32 %v2626, 0.1
        %v2698 = vmul.f32 %v2628, 0.1
        %v2699 = vmul.f32 %v2679, 0.1
        %v2700 = vmul.f32 %v2681, 0.1
        %v2701 = vmul.f32 %v2630, 0.1
        %v2702 = vmul.f32 %v2632, 0.1
        %v2703 = vmul.f32 %v2683, 0.1
        %v2704 = vmul.f32 %v2685, 0.1
        %v2705 = vmul.f32 %v2636, 0.1
        %v2706 = vmul.f32 %v2638, 0.1
        %v2707 = vmul.f32 %v2689, 0.1
        %v2708 = vmul.f32 %v2691, 0.1
        %v2709 = vmul.f32 %v2640, 0.1
        %v2710 = vmul.f32 %v2642, 0.1
        %v2711 = vmul.f32 %v2693, 0.1
        %v2712 = vmul.f32 %v2695, 0.1
        %v2713 = vsub.f32 %v2463, %v2697
        %v2714 = vsub.f32 %v2464, %v2698
        %v2715 = vsub.f32 %v2465, %v2699
        %v2716 = vsub.f32 %v2466, %v2700
        %v2717 = vsub.f32 %v2467, %v2701
        %v2718 = vsub.f32 %v2468, %v2702
        %v2719 = vsub.f32 %v2469, %v2703
        %v2720 = vsub.f32 %v2470, %v2704
        %v2721 = vsub.f32 %v2471, %v2705
        %v2722 = vsub.f32 %v2472, %v2706
        %v2723 = vsub.f32 %v2473, %v2707
        %v2724 = vsub.f32 %v2474, %v2708
        %v2725 = vsub.f32 %v2475, %v2709
        %v2726 = vsub.f32 %v2476, %v2710
        %v2727 = vsub.f32 %v2477, %v2711
        %v2728 = vsub.f32 %v2478, %v2712
        %v2729 = vsub.f32 %v2713, 0.01
        %v2730 = vsub.f32 %v2714, 0.01
        %v2731 = vsub.f32 %v2715, 0.01
        %v2732 = vsub.f32 %v2716, 0.01
        %v2733 = vsub.f32 %v2717, 0.01
        %v2734 = vsub.f32 %v2718, 0.01
        %v2735 = vsub.f32 %v2719, 0.01
        %v2736 = vsub.f32 %v2720, 0.01
        %v2737 = vsub.f32 %v2721, 0.01
        %v2738 = vsub.f32 %v2722, 0.01
        %v2739 = vsub.f32 %v2723, 0.01
        %v2740 = vsub.f32 %v2724, 0.01
        %v2741 = vsub.f32 %v2725, 0.01
        %v2742 = vsub.f32 %v2726, 0.01
        %v2743 = vsub.f32 %v2727, 0.01
        %v2744 = vsub.f32 %v2728, 0.01
        %v2745 = vmax.f32 %v2729, 0.0
        %v2746 = vmax.f32 %v2730, 0.0
        %v2747 = vmax.f32 %v2731, 0.0
        %v2748 = vmax.f32 %v2732, 0.0
        %v2749 = vmax.f32 %v2733, 0.0
        %v2750 = vmax.f32 %v2734, 0.0
        %v2751 = vmax.f32 %v2735, 0.0
        %v2752 = vmax.f32 %v2736, 0.0
        %v2753 = vmax.f32 %v2737, 0.0
        %v2754 = vmax.f32 %v2738, 0.0
        %v2755 = vmax.f32 %v2739, 0.0
        %v2756 = vmax.f32 %v2740, 0.0
        %v2757 = vmax.f32 %v2741, 0.0
        %v2758 = vmax.f32 %v2742, 0.0
        %v2759 = vmax.f32 %v2743, 0.0
        %v2760 = vmax.f32 %v2744, 0.0
        %v2761 = vpack.c.bf16 %v2749, %v2745
        %v2762 = vpack.c.bf16 %v2750, %v2746
        %v2763 = vpack.c.bf16 %v2751, %v2747
        %v2764 = vpack.c.bf16 %v2752, %v2748
        %v2765 = vpack.c.bf16 %v2757, %v2753
        %v2766 = vpack.c.bf16 %v2758, %v2754
        %v2767 = vpack.c.bf16 %v2759, %v2755
        %v2768 = vpack.c.bf16 %v2760, %v2756
        %v2769 = vld [vmem:[%s503] sm:$0xf]
        %v2770 = vld [vmem:[%s503 + $0x4] sm:$0xf]
        %v2771 = vld [vmem:[%s503 + $0x8] sm:$0xf]
        %v2772 = vld [vmem:[%s503 + $0xc] sm:$0xf]
        %v2773 = vld [vmem:[%s503 + $0x10] sm:$0xf]
        %v2774 = vld [vmem:[%s503 + $0x14] sm:$0xf]
        %v2775 = vld [vmem:[%s503 + $0x18] sm:$0xf]
        %v2776 = vld [vmem:[%s503 + $0x1c] sm:$0xf]
        %v2777 = vld [vmem:[%s503 + $0x20] sm:$0xf]
        %v2778 = vld [vmem:[%s503 + $0x24] sm:$0xf]
        %v2779 = vld [vmem:[%s503 + $0x28] sm:$0xf]
        %v2780 = vld [vmem:[%s503 + $0x2c] sm:$0xf]
        %v2781 = vld [vmem:[%s503 + $0x30] sm:$0xf]
        %v2782 = vld [vmem:[%s503 + $0x34] sm:$0xf]
        %v2783 = vld [vmem:[%s503 + $0x38] sm:$0xf]
        %v2784 = vld [vmem:[%s503 + $0x3c] sm:$0xf]
        %v2785 = vld [vmem:[%s503 + $0x40] sm:$0xf]
        %v2786 = vld [vmem:[%s503 + $0x44] sm:$0xf]
        %v2787 = vld [vmem:[%s503 + $0x48] sm:$0xf]
        %v2788 = vld [vmem:[%s503 + $0x4c] sm:$0xf]
        %v2789 = vld [vmem:[%s503 + $0x50] sm:$0xf]
        %v2790 = vld [vmem:[%s503 + $0x54] sm:$0xf]
        %v2791 = vld [vmem:[%s503 + $0x58] sm:$0xf]
        %v2792 = vld [vmem:[%s503 + $0x5c] sm:$0xf]
        %v2793 = vld [vmem:[%s503 + $0x60] sm:$0xf]
        %v2794 = vld [vmem:[%s503 + $0x64] sm:$0xf]
        %v2795 = vld [vmem:[%s503 + $0x68] sm:$0xf]
        %v2796 = vld [vmem:[%s503 + $0x6c] sm:$0xf]
        %v2797 = vld [vmem:[%s503 + $0x70] sm:$0xf]
        %v2798 = vld [vmem:[%s503 + $0x74] sm:$0xf]
        %v2799 = vld [vmem:[%s503 + $0x78] sm:$0xf]
        %v2800 = vld [vmem:[%s503 + $0x7c] sm:$0xf]
        %v2801 = vld [vmem:[%s503 + $0x80] sm:$0xf]
        %v2802 = vld [vmem:[%s503 + $0x84] sm:$0xf]
        %v2803 = vld [vmem:[%s503 + $0x88] sm:$0xf]
        %v2804 = vld [vmem:[%s503 + $0x8c] sm:$0xf]
        %v2805 = vld [vmem:[%s503 + $0x90] sm:$0xf]
        %v2806 = vld [vmem:[%s503 + $0x94] sm:$0xf]
        %v2807 = vld [vmem:[%s503 + $0x98] sm:$0xf]
        %v2808 = vld [vmem:[%s503 + $0x9c] sm:$0xf]
        %v2809 = vld [vmem:[%s503 + $0xa0] sm:$0xf]
        %v2810 = vld [vmem:[%s503 + $0xa4] sm:$0xf]
        %v2811 = vld [vmem:[%s503 + $0xa8] sm:$0xf]
        %v2812 = vld [vmem:[%s503 + $0xac] sm:$0xf]
        %v2813 = vld [vmem:[%s503 + $0xb0] sm:$0xf]
        %v2814 = vld [vmem:[%s503 + $0xb4] sm:$0xf]
        %v2815 = vld [vmem:[%s503 + $0xb8] sm:$0xf]
        %v2816 = vld [vmem:[%s503 + $0xbc] sm:$0xf]
        %v2817 = vld [vmem:[%s503 + $0xc0] sm:$0xf]
        %v2818 = vld [vmem:[%s503 + $0xc4] sm:$0xf]
        %v2819 = vld [vmem:[%s503 + $0xc8] sm:$0xf]
        %v2820 = vld [vmem:[%s503 + $0xcc] sm:$0xf]
        %v2821 = vld [vmem:[%s503 + $0xd0] sm:$0xf]
        %v2822 = vld [vmem:[%s503 + $0xd4] sm:$0xf]
        %v2823 = vld [vmem:[%s503 + $0xd8] sm:$0xf]
        %v2824 = vld [vmem:[%s503 + $0xdc] sm:$0xf]
        %v2825 = vld [vmem:[%s503 + $0xe0] sm:$0xf]
        %v2826 = vld [vmem:[%s503 + $0xe4] sm:$0xf]
        %v2827 = vld [vmem:[%s503 + $0xe8] sm:$0xf]
        %v2828 = vld [vmem:[%s503 + $0xec] sm:$0xf]
        %v2829 = vld [vmem:[%s503 + $0xf0] sm:$0xf]
        %v2830 = vld [vmem:[%s503 + $0xf4] sm:$0xf]
        %v2831 = vld [vmem:[%s503 + $0xf8] sm:$0xf]
        %v2832 = vld [vmem:[%s503 + $0xfc] sm:$0xf]
        %v2897 = vunpack.c.l.b16 %v2769
        %v2898 = vunpack.c.l.b16 %v2770
        %v2899 = vunpack.c.l.b16 %v2771
        %v2900 = vunpack.c.l.b16 %v2772
        %v2901 = vunpack.c.l.b16 %v2773
        %v2902 = vunpack.c.l.b16 %v2774
        %v2903 = vunpack.c.l.b16 %v2775
        %v2904 = vunpack.c.l.b16 %v2776
        %v2905 = vunpack.c.l.b16 %v2777
        %v2906 = vunpack.c.l.b16 %v2778
        %v2907 = vunpack.c.l.b16 %v2779
        %v2908 = vunpack.c.l.b16 %v2780
        %v2909 = vunpack.c.l.b16 %v2781
        %v2910 = vunpack.c.l.b16 %v2782
        %v2911 = vunpack.c.l.b16 %v2783
        %v2912 = vunpack.c.l.b16 %v2784
        %v2913 = vunpack.c.l.b16 %v2785
        %v2914 = vunpack.c.l.b16 %v2786
        %v2915 = vunpack.c.l.b16 %v2787
        %v2916 = vunpack.c.l.b16 %v2788
        %v2917 = vunpack.c.l.b16 %v2789
        %v2918 = vunpack.c.l.b16 %v2790
        %v2919 = vunpack.c.l.b16 %v2791
        %v2920 = vunpack.c.l.b16 %v2792
        %v2921 = vunpack.c.l.b16 %v2793
        %v2922 = vunpack.c.l.b16 %v2794
        %v2923 = vunpack.c.l.b16 %v2795
        %v2924 = vunpack.c.l.b16 %v2796
        %v2925 = vunpack.c.l.b16 %v2797
        %v2926 = vunpack.c.l.b16 %v2798
        %v2927 = vunpack.c.l.b16 %v2799
        %v2928 = vunpack.c.l.b16 %v2800
        %v2929 = vunpack.c.l.b16 %v2801
        %v2930 = vunpack.c.l.b16 %v2802
        %v2931 = vunpack.c.l.b16 %v2803
        %v2932 = vunpack.c.l.b16 %v2804
        %v2933 = vunpack.c.l.b16 %v2805
        %v2934 = vunpack.c.l.b16 %v2806
        %v2935 = vunpack.c.l.b16 %v2807
        %v2936 = vunpack.c.l.b16 %v2808
        %v2937 = vunpack.c.l.b16 %v2809
        %v2938 = vunpack.c.l.b16 %v2810
        %v2939 = vunpack.c.l.b16 %v2811
        %v2940 = vunpack.c.l.b16 %v2812
        %v2941 = vunpack.c.l.b16 %v2813
        %v2942 = vunpack.c.l.b16 %v2814
        %v2943 = vunpack.c.l.b16 %v2815
        %v2944 = vunpack.c.l.b16 %v2816
        %v2945 = vunpack.c.l.b16 %v2817
        %v2946 = vunpack.c.l.b16 %v2818
        %v2947 = vunpack.c.l.b16 %v2819
        %v2948 = vunpack.c.l.b16 %v2820
        %v2949 = vunpack.c.l.b16 %v2821
        %v2950 = vunpack.c.l.b16 %v2822
        %v2951 = vunpack.c.l.b16 %v2823
        %v2952 = vunpack.c.l.b16 %v2824
        %v2953 = vunpack.c.l.b16 %v2825
        %v2954 = vunpack.c.l.b16 %v2826
        %v2955 = vunpack.c.l.b16 %v2827
        %v2956 = vunpack.c.l.b16 %v2828
        %v2957 = vunpack.c.l.b16 %v2829
        %v2958 = vunpack.c.l.b16 %v2830
        %v2959 = vunpack.c.l.b16 %v2831
        %v2960 = vunpack.c.l.b16 %v2832
        %v2961 = vpack.c.b16 %v2898, %v2897
        %v2962 = vpack.c.b16 %v2900, %v2899
        %v2963 = vpack.c.b16 %v2902, %v2901
        %v2964 = vpack.c.b16 %v2904, %v2903
        %v2965 = vpack.c.b16 %v2906, %v2905
        %v2966 = vpack.c.b16 %v2908, %v2907
        %v2967 = vpack.c.b16 %v2910, %v2909
        %v2968 = vpack.c.b16 %v2912, %v2911
        %v2969 = vpack.c.b16 %v2914, %v2913
        %v2970 = vpack.c.b16 %v2916, %v2915
        %v2971 = vpack.c.b16 %v2918, %v2917
        %v2972 = vpack.c.b16 %v2920, %v2919
        %v2973 = vpack.c.b16 %v2922, %v2921
        %v2974 = vpack.c.b16 %v2924, %v2923
        %v2975 = vpack.c.b16 %v2926, %v2925
        %v2976 = vpack.c.b16 %v2928, %v2927
        %v2977 = vpack.c.b16 %v2930, %v2929
        %v2978 = vpack.c.b16 %v2932, %v2931
        %v2979 = vpack.c.b16 %v2934, %v2933
        %v2980 = vpack.c.b16 %v2936, %v2935
        %v2981 = vpack.c.b16 %v2938, %v2937
        %v2982 = vpack.c.b16 %v2940, %v2939
        %v2983 = vpack.c.b16 %v2942, %v2941
        %v2984 = vpack.c.b16 %v2944, %v2943
        %v2985 = vpack.c.b16 %v2946, %v2945
        %v2986 = vpack.c.b16 %v2948, %v2947
        %v2987 = vpack.c.b16 %v2950, %v2949
        %v2988 = vpack.c.b16 %v2952, %v2951
        %v2989 = vpack.c.b16 %v2954, %v2953
        %v2990 = vpack.c.b16 %v2956, %v2955
        %v2991 = vpack.c.b16 %v2958, %v2957
        %v2992 = vpack.c.b16 %v2960, %v2959
        %3025 = vmatprep.subr.bf16.mxu0 0
        %3026 = vmatpush1.bf16.msra.mxu0 %v2968
        %3027 = vmatprep.subr.bf16.mxu0 0
        %3028 = vmatpush1.bf16.msra.mxu0 %v2967
        %3029 = vmatprep.subr.bf16.mxu0 0
        %3030 = vmatpush1.bf16.msra.mxu0 %v2966
        %3031 = vmatprep.subr.bf16.mxu0 0
        %3032 = vmatpush1.bf16.msra.mxu0 %v2965
        %3033 = vmatprep.subr.bf16.mxu0 0
        %3034 = vmatpush1.bf16.msra.mxu0 %v2964
        %3035 = vmatprep.subr.bf16.mxu0 0
        %3036 = vmatpush1.bf16.msra.mxu0 %v2963
        %3037 = vmatprep.subr.bf16.mxu0 0
        %3038 = vmatpush1.bf16.msra.mxu0 %v2962
        %3039 = vmatprep.subr.bf16.mxu0 0
        %3040 = vmatpush1.bf16.msra.mxu0 %v2961
        %3041 = vmatprep.subr.bf16.mxu0 0
        %3042 = vmatpush2.bf16.msra.mxu0 %v2976
        %3043 = vmatprep.subr.bf16.mxu0 0
        %3044 = vmatpush2.bf16.msra.mxu0 %v2975
        %3045 = vmatprep.subr.bf16.mxu0 0
        %3046 = vmatpush2.bf16.msra.mxu0 %v2974
        %3047 = vmatprep.subr.bf16.mxu0 0
        %3048 = vmatpush2.bf16.msra.mxu0 %v2973
        %3049 = vmatprep.subr.bf16.mxu0 0
        %3050 = vmatpush2.bf16.msra.mxu0 %v2972
        %3051 = vmatprep.subr.bf16.mxu0 0
        %3052 = vmatpush2.bf16.msra.mxu0 %v2971
        %3053 = vmatprep.subr.bf16.mxu0 0
        %3054 = vmatpush2.bf16.msra.mxu0 %v2970
        %3055 = vmatprep.subr.bf16.mxu0 0
        %3056 = vmatpush2.bf16.msra.mxu0 %v2969
        %3057 = vmatprep.mubr.bf16.mxu0 %v2762
        %3058 = vmatmul.mubr.bf16.gmra.mxu0 %v2761
        %v3059 = vpop.f32.mrf.mxu0
        %v3060 = vadd.f32 0.0, %v3059
        %v3061 = vpop.f32.mrf.mxu0
        %v3062 = vpop.f32.mrf.mxu0
        %v3063 = vadd.f32 0.0, %v3062
        %v3064 = vpop.f32.mrf.mxu0
        %3065 = vmatprep.mubr.bf16.mxu0 %v2766
        %3066 = vmatmul.mubr.bf16.gmra.mxu0 %v2765
        %v3067 = vpop.f32.mrf.mxu0
        %v3068 = vadd.f32 0.0, %v3067
        %v3069 = vpop.f32.mrf.mxu0
        %v3070 = vpop.f32.mrf.mxu0
        %v3071 = vadd.f32 0.0, %v3070
        %v3072 = vpop.f32.mrf.mxu0
        %3073 = vdwg.mxu0
        %3074 = vmatprep.subr.bf16.mxu0 0
        %3075 = vmatpush1.bf16.msra.mxu0 %v2984
        %3076 = vmatprep.subr.bf16.mxu0 0
        %3077 = vmatpush1.bf16.msra.mxu0 %v2983
        %3078 = vmatprep.subr.bf16.mxu0 0
        %3079 = vmatpush1.bf16.msra.mxu0 %v2982
        %3080 = vmatprep.subr.bf16.mxu0 0
        %3081 = vmatpush1.bf16.msra.mxu0 %v2981
        %3082 = vmatprep.subr.bf16.mxu0 0
        %3083 = vmatpush1.bf16.msra.mxu0 %v2980
        %3084 = vmatprep.subr.bf16.mxu0 0
        %3085 = vmatpush1.bf16.msra.mxu0 %v2979
        %3086 = vmatprep.subr.bf16.mxu0 0
        %3087 = vmatpush1.bf16.msra.mxu0 %v2978
        %3088 = vmatprep.subr.bf16.mxu0 0
        %3089 = vmatpush1.bf16.msra.mxu0 %v2977
        %3090 = vmatprep.subr.bf16.mxu0 0
        %3091 = vmatpush2.bf16.msra.mxu0 %v2992
        %3092 = vmatprep.subr.bf16.mxu0 0
        %3093 = vmatpush2.bf16.msra.mxu0 %v2991
        %3094 = vmatprep.subr.bf16.mxu0 0
        %3095 = vmatpush2.bf16.msra.mxu0 %v2990
        %3096 = vmatprep.subr.bf16.mxu0 0
        %3097 = vmatpush2.bf16.msra.mxu0 %v2989
        %3098 = vmatprep.subr.bf16.mxu0 0
        %3099 = vmatpush2.bf16.msra.mxu0 %v2988
        %3100 = vmatprep.subr.bf16.mxu0 0
        %3101 = vmatpush2.bf16.msra.mxu0 %v2987
        %3102 = vmatprep.subr.bf16.mxu0 0
        %3103 = vmatpush2.bf16.msra.mxu0 %v2986
        %3104 = vmatprep.subr.bf16.mxu0 0
        %3105 = vmatpush2.bf16.msra.mxu0 %v2985
        %3106 = vmatprep.mubr.bf16.mxu0 %v2764
        %3107 = vmatmul.mubr.bf16.gmra.mxu0 %v2763
        %v3108 = vpop.f32.mrf.mxu0
        %v3109 = vadd.f32 %v3060, %v3108
        %v3110 = vpop.f32.mrf.mxu0
        %v3111 = vpop.f32.mrf.mxu0
        %v3112 = vadd.f32 %v3063, %v3111
        %v3113 = vpop.f32.mrf.mxu0
        %3114 = vmatprep.mubr.bf16.mxu0 %v2768
        %3115 = vmatmul.mubr.bf16.gmra.mxu0 %v2767
        %v3116 = vpop.f32.mrf.mxu0
        %v3117 = vadd.f32 %v3068, %v3116
        %v3118 = vpop.f32.mrf.mxu0
        %v3119 = vpop.f32.mrf.mxu0
        %v3120 = vadd.f32 %v3071, %v3119
        %v3121 = vpop.f32.mrf.mxu0
        %3122 = vdwg.mxu0
        %v3123 = vadd.f32 %v2061, %v3109
        %v3124 = vadd.f32 %v2062, %v3112
        %v3125 = vadd.f32 %v2063, %v3117
        %v3126 = vadd.f32 %v2064, %v3120
        %3127 = vst [vmem:[#allocation2] sm:$0xff] %v3123
        %3128 = vst [vmem:[#allocation2 + $0x8] sm:$0xff] %v3124
        %3129 = vst [vmem:[#allocation2 + $0x10] sm:$0xff] %v3125
        %3130 = vst [vmem:[#allocation2 + $0x18] sm:$0xff] %v3126
        %p3131 = scmp.eq.s32.totalorder %s36, 1
        // Predicated region
        $region85: #{tpu_custom_call.1} parent=55 // pred_check
          %p3132 = pneg %p3131
        $region86: #{tpu_custom_call.1} parent=55 // pred_check_branch
          %3134 = sbr.rel (%p3132) target = $region88
        $region87: #{tpu_custom_call.1} parent=55 // pred_region
          %3135 = vst [vmem:[#allocation14] sm:$0xff] %v3123
          %3136 = vst [vmem:[#allocation14 + $0x8] sm:$0xff] %v3124
          %3137 = vst [vmem:[#allocation14 + $0x10] sm:$0xff] %v3125
          %3138 = vst [vmem:[#allocation14 + $0x18] sm:$0xff] %v3126
        $region88: #{tpu_custom_call.1} parent=55 // pred_fallthru
          _
        // Predicated region
        $region89: #{tpu_custom_call.1} parent=55 // pred_check
          %p3139 = pneg %p295
        $region90: #{tpu_custom_call.1} parent=55 // pred_check_branch
          %3141 = sbr.rel (%p3139) target = $region92
        $region91: #{tpu_custom_call.1} parent=55 // pred_region
          %s3142 = smul.u32 2, %s35
          %s3144 = ssub.s32 512, 512
          %3145 = vsyncadd [#allocation5], %s3144
          %s3146 = smul.addr %s3142, 2
          %s3147 = smul.addr %s3146, 128
          %s3148 = scalar_lea.hbm %s9, %s3147
          %s3149 = sshll.u32 [#allocation14], 4
          %s3150 = int_to_ptr.vmem [resolvable:$true] %s3149
          %3155 = dma.vmem_to_hbm [thread:$0]  %s3150, 512, %s3148, [#allocation5], 128, 128, 8
        $region92: #{tpu_custom_call.1} parent=55 // pred_fallthru
          _
        // Predicated region
        $region93: #{tpu_custom_call.1} parent=55 // pred_check
          %p3156 = pneg %p295
        $region94: #{tpu_custom_call.1} parent=55 // pred_check_branch
          %3158 = sbr.rel (%p3156) target = $region96
        $region95: #{tpu_custom_call.1} parent=55 // pred_region
          %3159 = dma.done [#allocation5], 512
        $region96: #{tpu_custom_call.1} parent=55 // pred_fallthru
          _
      $region56: #{tpu_custom_call.1} parent=5 // pred_fallthru
        _
      %p3160 = scmp.le.s32.totalorder 2, %s26
      // Predicated region
      $region97: #{tpu_custom_call.1} parent=5 // pred_check
        %p3161 = pneg %p3160
      $region98: #{tpu_custom_call.1} parent=5 // pred_check_branch
        %3163 = sbr.rel (%p3161) target = $region100
      $region99: #{tpu_custom_call.1} parent=5 // pred_region
        %s3164 = ssub.s32 %s26, 2
      $region100: #{tpu_custom_call.1} parent=5 // pred_fallthru
        _
    $region6: #{tpu_custom_call.1} parent=1 // loop_footer
      %s30 = sadd.s32 1, %s26
    $region7: #{tpu_custom_call.1} parent=1 // loop_footer_branch
      %25 = sbr.rel target = $region3
    $region8: #{tpu_custom_call.1} parent=1 // loop_exit
      _
    %3165 = vsyncpa [#allocation4], 1
    %s3166 = scalar_lea.sflag [#allocation4], 1
    %3167 = vsyncpa %s3166, 1
    %3168 = vsyncpa [#allocation7], 1
    %s3169 = scalar_lea.sflag [#allocation7], 1
    %3170 = vsyncpa %s3169, 1
    %3171 = vsyncpa [#allocation10], 1
    %s3172 = scalar_lea.sflag [#allocation10], 1
    %3173 = vsyncpa %s3172, 1
    %3174 = vsyncpa [#allocation13], 1
    %s3175 = scalar_lea.sflag [#allocation13], 1
    %3176 = vsyncpa %s3175, 1
    %3177 = vsyncpa [#allocation5], 1
    %s3178 = scalar_lea.sflag [#allocation5], 1
    %3179 = vsyncpa %s3178, 1

</llo_original>
